<compile_context>
chip_gen: v6e
topology: v6e:2x2x1
jax: 0.10.0
libtpu: 0.0.40
codegen_flags: <defaults>
</compile_context>

<pallas_src>
import jax
import jax.numpy as jnp
from jax.experimental import pallas as pl
from jax.experimental.pallas import tpu as pltpu

HIDDEN = 768          # BERT hidden size (pooler / fc1 input)
FC1_OUT = 512         # fc1 output
NUM_CLASSES = 2       # fc2 output (real classes)
PADDED_CLASSES = 128  # lane-dense padded class dim
NEG_BIG = -1e30       # padded-class bias -> exp() underflows to exactly 0
MAX_BLOCK_B = 128     # batch tile (rows per grid step)


def _round_up(x, m):
    return ((x + m - 1) // m) * m


def _fused_head_kernel(pooled_ref, wp_ref, bp_ref, w1_ref, b1_ref,
                       w2_ref, b2_ref, out_ref):
    # pooled_ref: [Bb, 768] f32      wp_ref: [768, 768] bf16   bp_ref: [1, 768] f32
    # w1_ref:     [768, 512] bf16    b1_ref: [1, 512]  f32
    # w2_ref:     [512, 128] bf16    b2_ref: [1, 128]  f32 (cols >=2 are -1e30)
    # out_ref:    [Bb, 128] f32
    x = pooled_ref[...]

    # --- pooler: tanh(x @ wp + bp) ------------------------------------------
    cls = jnp.tanh(
        jnp.dot(x.astype(jnp.bfloat16), wp_ref[...],
                preferred_element_type=jnp.float32) + bp_ref[...])

    # --- fc1 + ReLU -----------------------------------------------------------
    h = jnp.maximum(
        jnp.dot(cls.astype(jnp.bfloat16), w1_ref[...],
                preferred_element_type=jnp.float32) + b1_ref[...], 0.0)

    # nn.Dropout(0.1): identity at inference (eval mode) -> no-op.

    # --- fc2 (class dim padded to 128 lanes) ---------------------------------
    logits = (jnp.dot(h.astype(jnp.bfloat16), w2_ref[...],
                      preferred_element_type=jnp.float32) + b2_ref[...])

    # --- LogSoftmax(dim=1), numerically stable; padded lanes carry -1e30 bias
    # so exp(...) == 0 and they do not perturb the normalizer.
    m = jnp.max(logits, axis=-1, keepdims=True)
    s = logits - m
    lse = jnp.log(jnp.sum(jnp.exp(s), axis=-1, keepdims=True))
    out_ref[...] = s - lse


def classifier_head(pooled, params):
    """Fused pooler + fc1/ReLU/fc2/log_softmax Pallas kernel.

    pooled: [B, 768] f32 (masked-mean of backbone embeddings).
    Returns [B, NUM_CLASSES] f32 log-probabilities.
    """
    B = pooled.shape[0]
    bb = min(MAX_BLOCK_B, _round_up(B, 8))
    grid = (pl.cdiv(B, bb),)

    const = lambda i: (0, 0)  # weights/biases stay resident across batch tiles

    out = pl.pallas_call(
        _fused_head_kernel,
        out_shape=jax.ShapeDtypeStruct((B, PADDED_CLASSES), jnp.float32),
        grid=grid,
        in_specs=[
            pl.BlockSpec((bb, HIDDEN), lambda i: (i, 0)),           # pooled
            pl.BlockSpec((HIDDEN, HIDDEN), const),                  # wp (bf16)
            pl.BlockSpec((1, HIDDEN), const),                       # bp
            pl.BlockSpec((HIDDEN, FC1_OUT), const),                 # w1 (bf16)
            pl.BlockSpec((1, FC1_OUT), const),                      # b1
            pl.BlockSpec((FC1_OUT, PADDED_CLASSES), const),         # w2 padded (bf16)
            pl.BlockSpec((1, PADDED_CLASSES), const),               # b2 padded
        ],
        out_specs=pl.BlockSpec((bb, PADDED_CLASSES), lambda i: (i, 0)),
        compiler_params=pltpu.CompilerParams(
            dimension_semantics=("parallel",)),
    )(pooled, params["wp"], params["bp"], params["w1"], params["b1"],
      params["w2p"], params["b2p"])

    return out[:, :NUM_CLASSES]


def synthetic_bert_embed_pool(sent_id, mask, params):
    """Deterministic stand-in for the injected `bert` backbone up to pooling.

    Returns the masked-mean of token embeddings [B, 768]; the pooler matmul +
    tanh (wp/bp) is fused into the Pallas kernel.
    """
    emb = params["emb"][sent_id]                              # [B, S, 768]
    m = mask.astype(jnp.float32)[..., None]                   # [B, S, 1]
    pooled = (emb * m).sum(axis=1) / jnp.maximum(m.sum(axis=1), 1.0)
    return pooled


def bert_arch_forward(sent_id, mask, params):
    pooled = synthetic_bert_embed_pool(sent_id, mask, params)  # plain-JAX glue
    return classifier_head(pooled, params)                      # Pallas hot path


def init_params(key, vocab_size=128):
    """Params pre-stored in kernel-ready dtype/layout (no per-call casts)."""
    ks = jax.random.split(key, 6)
    wp = 0.02 * jax.random.normal(ks[1], (HIDDEN, HIDDEN), jnp.float32)
    w1 = 0.02 * jax.random.normal(ks[2], (HIDDEN, FC1_OUT), jnp.float32)
    b1 = 0.02 * jax.random.normal(ks[3], (FC1_OUT,), jnp.float32)
    w2 = 0.02 * jax.random.normal(ks[4], (FC1_OUT, NUM_CLASSES), jnp.float32)
    b2 = 0.02 * jax.random.normal(ks[5], (NUM_CLASSES,), jnp.float32)

    # Pad class dimension to 128 lanes: zero weight columns, -1e30 bias so the
    # padded logits vanish from the log-sum-exp.
    w2p = jnp.zeros((FC1_OUT, PADDED_CLASSES), jnp.float32).at[:, :NUM_CLASSES].set(w2)
    b2p = jnp.full((PADDED_CLASSES,), NEG_BIG, jnp.float32).at[:NUM_CLASSES].set(b2)

    return {
        "emb": 0.02 * jax.random.normal(ks[0], (vocab_size, HIDDEN), jnp.float32),
        "wp":  wp.astype(jnp.bfloat16),
        "bp":  jnp.zeros((1, HIDDEN), jnp.float32),
        "w1":  w1.astype(jnp.bfloat16),
        "b1":  b1.reshape(1, FC1_OUT),
        "w2p": w2p.astype(jnp.bfloat16),
        "b2p": b2p.reshape(1, PADDED_CLASSES),
    }


def _reference_forward(sent_id, mask, params):
    """Pure-JAX reference mimicking the kernel's bf16 MXU operands."""
    pooled = synthetic_bert_embed_pool(sent_id, mask, params)
    f32 = lambda a: a.astype(jnp.float32)
    xb = pooled.astype(jnp.bfloat16)
    cls = jnp.tanh(f32(xb) @ f32(params["wp"]) + params["bp"])
    h = jnp.maximum(f32(cls.astype(jnp.bfloat16)) @ f32(params["w1"]) + params["b1"], 0.0)
    logits = (f32(h.astype(jnp.bfloat16)) @ f32(params["w2p"]) + params["b2p"])[:, :NUM_CLASSES]
    return jax.nn.log_softmax(logits, axis=1)


if __name__ == "__main__":
    key = jax.random.PRNGKey(0)
    k_params, k_ids = jax.random.split(key)

    B, S = 2, 8
    params = init_params(k_params, vocab_size=128)

    sent_id = jax.random.randint(k_ids, (B, S), 0, 128, dtype=jnp.int32)
    mask = jnp.array([[1, 1, 1, 1, 1, 0, 0, 0],
                      [1, 1, 1, 1, 1, 1, 1, 1]], dtype=jnp.int32)

    out = bert_arch_forward(sent_id, mask, params)   # [B, 2] log-probs
    out = jax.block_until_ready(out)

    assert out.shape == (B, NUM_CLASSES)
    # log-softmax rows must (approximately) exponentiate-sum to 1
    assert bool(jnp.all(jnp.abs(jnp.sum(jnp.exp(out), axis=1) - 1.0) < 1e-4))
    # match pure-JAX reference (same bf16-rounded operands)
    ref = _reference_forward(sent_id, mask, params)
    assert bool(jnp.all(jnp.abs(out - ref) < 1e-2))
    print("KERNEL_OK")
</pallas_src>

<mosaic_0001>
module attributes {stable_mosaic.version = 11 : i64} {
  func.func @_fused_head_kernel(%arg0: i32, %arg1: memref<8x768xf32, #tpu.memory_space<vmem>>, %arg2: memref<768x768xbf16, #tpu.memory_space<vmem>>, %arg3: memref<1x768xf32, #tpu.memory_space<vmem>>, %arg4: memref<768x512xbf16, #tpu.memory_space<vmem>>, %arg5: memref<1x512xf32, #tpu.memory_space<vmem>>, %arg6: memref<512x128xbf16, #tpu.memory_space<vmem>>, %arg7: memref<1x128xf32, #tpu.memory_space<vmem>>, %arg8: memref<8x128xf32, #tpu.memory_space<vmem>>) attributes {dimension_semantics = [#tpu.dimension_semantics<parallel>], iteration_bounds = array<i64: 1>, scalar_prefetch = 0 : i64, scratch_operands = 0 : i64, tpu.core_type = #tpu.core_type<tc>, window_params = [{transform_indices = @transform_0, window_bounds = array<i64: 8, 768>}, {pipeline_mode = #tpu.pipeline_mode<synchronous>, transform_indices = @transform_1, window_bounds = array<i64: 768, 768>}, {pipeline_mode = #tpu.pipeline_mode<synchronous>, transform_indices = @transform_2, window_bounds = array<i64: 1, 768>}, {pipeline_mode = #tpu.pipeline_mode<synchronous>, transform_indices = @transform_3, window_bounds = array<i64: 768, 512>}, {pipeline_mode = #tpu.pipeline_mode<synchronous>, transform_indices = @transform_4, window_bounds = array<i64: 1, 512>}, {pipeline_mode = #tpu.pipeline_mode<synchronous>, transform_indices = @transform_5, window_bounds = array<i64: 512, 128>}, {pipeline_mode = #tpu.pipeline_mode<synchronous>, transform_indices = @transform_6, window_bounds = array<i64: 1, 128>}, {transform_indices = @transform_7, window_bounds = array<i64: 8, 128>}]} {
    %c0 = arith.constant 0 : index
    %c0_0 = arith.constant 0 : index
    %0 = vector.load %arg1[%c0, %c0_0] : memref<8x768xf32, #tpu.memory_space<vmem>>, vector<8x768xf32>
    %1 = arith.truncf %0 : vector<8x768xf32> to vector<8x768xbf16>
    %c0_1 = arith.constant 0 : index
    %c0_2 = arith.constant 0 : index
    %2 = vector.load %arg2[%c0_1, %c0_2] : memref<768x768xbf16, #tpu.memory_space<vmem>>, vector<768x768xbf16>
    %cst = arith.constant dense<0.000000e+00> : vector<8x768xf32>
    %3 = tpu.matmul %1, %2, %cst {dimension_numbers = #tpu.dot_dimension_numbers<[1], [0], [0], [1], [0, 0, 1, 1], [], []>} : vector<8x768xbf16>, vector<768x768xbf16>, vector<8x768xf32> -> vector<8x768xf32>
    %c0_3 = arith.constant 0 : index
    %c0_4 = arith.constant 0 : index
    %4 = vector.load %arg3[%c0_3, %c0_4] : memref<1x768xf32, #tpu.memory_space<vmem>>, vector<1x768xf32>
    %5 = vector.broadcast %4 : vector<1x768xf32> to vector<8x768xf32>
    %6 = arith.addf %3, %5 : vector<8x768xf32>
    %7 = math.tanh %6 : vector<8x768xf32>
    %8 = arith.truncf %7 : vector<8x768xf32> to vector<8x768xbf16>
    %c0_5 = arith.constant 0 : index
    %c0_6 = arith.constant 0 : index
    %9 = vector.load %arg4[%c0_5, %c0_6] : memref<768x512xbf16, #tpu.memory_space<vmem>>, vector<768x512xbf16>
    %cst_7 = arith.constant dense<0.000000e+00> : vector<8x512xf32>
    %10 = tpu.matmul %8, %9, %cst_7 {dimension_numbers = #tpu.dot_dimension_numbers<[1], [0], [0], [1], [0, 0, 1, 1], [], []>} : vector<8x768xbf16>, vector<768x512xbf16>, vector<8x512xf32> -> vector<8x512xf32>
    %c0_8 = arith.constant 0 : index
    %c0_9 = arith.constant 0 : index
    %11 = vector.load %arg5[%c0_8, %c0_9] : memref<1x512xf32, #tpu.memory_space<vmem>>, vector<1x512xf32>
    %12 = vector.broadcast %11 : vector<1x512xf32> to vector<8x512xf32>
    %13 = arith.addf %10, %12 : vector<8x512xf32>
    %cst_10 = arith.constant 0.000000e+00 : f32
    %14 = vector.broadcast %cst_10 : f32 to vector<8x512xf32>
    %15 = arith.maximumf %13, %14 : vector<8x512xf32>
    %16 = arith.truncf %15 : vector<8x512xf32> to vector<8x512xbf16>
    %c0_11 = arith.constant 0 : index
    %c0_12 = arith.constant 0 : index
    %17 = vector.load %arg6[%c0_11, %c0_12] : memref<512x128xbf16, #tpu.memory_space<vmem>>, vector<512x128xbf16>
    %cst_13 = arith.constant dense<0.000000e+00> : vector<8x128xf32>
    %18 = tpu.matmul %16, %17, %cst_13 {dimension_numbers = #tpu.dot_dimension_numbers<[1], [0], [0], [1], [0, 0, 1, 1], [], []>} : vector<8x512xbf16>, vector<512x128xbf16>, vector<8x128xf32> -> vector<8x128xf32>
    %c0_14 = arith.constant 0 : index
    %c0_15 = arith.constant 0 : index
    %19 = vector.load %arg7[%c0_14, %c0_15] : memref<1x128xf32, #tpu.memory_space<vmem>>, vector<1x128xf32>
    %20 = vector.broadcast %19 : vector<1x128xf32> to vector<8x128xf32>
    %21 = arith.addf %18, %20 : vector<8x128xf32>
    %cst_16 = arith.constant dense<0xFF800000> : vector<8xf32>
    %22 = vector.multi_reduction <maximumf>, %21, %cst_16 [1] : vector<8x128xf32> to vector<8xf32>
    %23 = vector.shape_cast %22 : vector<8xf32> to vector<8x1xf32>
    %24 = vector.broadcast %23 : vector<8x1xf32> to vector<8x128xf32>
    %25 = arith.subf %21, %24 : vector<8x128xf32>
    %26 = math.exp %25 : vector<8x128xf32>
    %cst_17 = arith.constant dense<0.000000e+00> : vector<8xf32>
    %27 = vector.multi_reduction <add>, %26, %cst_17 [1] : vector<8x128xf32> to vector<8xf32>
    %28 = vector.shape_cast %27 : vector<8xf32> to vector<8x1xf32>
    %29 = math.log %28 : vector<8x1xf32>
    %30 = vector.broadcast %29 : vector<8x1xf32> to vector<8x128xf32>
    %31 = arith.subf %25, %30 : vector<8x128xf32>
    %c0_18 = arith.constant 0 : index
    %c0_19 = arith.constant 0 : index
    %32 = vector.load %arg8[%c0_18, %c0_19] : memref<8x128xf32, #tpu.memory_space<vmem>>, vector<8x128xf32>
    tpu.vector_store %arg8[%c0_18, %c0_19], %31 {strides = array<i32>} : memref<8x128xf32, #tpu.memory_space<vmem>>, vector<8x128xf32>,
    return
  }
  func.func @transform_0(%arg0: i32) -> (i32, i32) {
    %c0_i32 = arith.constant 0 : i32
    %c0_i32_0 = arith.constant 0 : i32
    return %arg0, %c0_i32 : i32, i32
  }
  func.func @transform_1(%arg0: i32) -> (i32, i32) {
    %c0_i32 = arith.constant 0 : i32
    %c0_i32_0 = arith.constant 0 : i32
    %c0_i32_1 = arith.constant 0 : i32
    return %c0_i32, %c0_i32_0 : i32, i32
  }
  func.func @transform_2(%arg0: i32) -> (i32, i32) {
    %c0_i32 = arith.constant 0 : i32
    %c0_i32_0 = arith.constant 0 : i32
    %c0_i32_1 = arith.constant 0 : i32
    return %c0_i32, %c0_i32_0 : i32, i32
  }
  func.func @transform_3(%arg0: i32) -> (i32, i32) {
    %c0_i32 = arith.constant 0 : i32
    %c0_i32_0 = arith.constant 0 : i32
    %c0_i32_1 = arith.constant 0 : i32
    return %c0_i32, %c0_i32_0 : i32, i32
  }
  func.func @transform_4(%arg0: i32) -> (i32, i32) {
    %c0_i32 = arith.constant 0 : i32
    %c0_i32_0 = arith.constant 0 : i32
    %c0_i32_1 = arith.constant 0 : i32
    return %c0_i32, %c0_i32_0 : i32, i32
  }
  func.func @transform_5(%arg0: i32) -> (i32, i32) {
    %c0_i32 = arith.constant 0 : i32
    %c0_i32_0 = arith.constant 0 : i32
    %c0_i32_1 = arith.constant 0 : i32
    return %c0_i32, %c0_i32_0 : i32, i32
  }
  func.func @transform_6(%arg0: i32) -> (i32, i32) {
    %c0_i32 = arith.constant 0 : i32
    %c0_i32_0 = arith.constant 0 : i32
    %c0_i32_1 = arith.constant 0 : i32
    return %c0_i32, %c0_i32_0 : i32, i32
  }
  func.func @transform_7(%arg0: i32) -> (i32, i32) {
    %c0_i32 = arith.constant 0 : i32
    %c0_i32_0 = arith.constant 0 : i32
    return %arg0, %c0_i32 : i32, i32
  }
}

</mosaic_0001>

<llo_original>
// kernel: tpu_custom_call.1
$region0: #{tpu_custom_call.1}
  #allocation0 [shape = 'u32[]', space=smem, size = 0x4, offset = 0x4, fixed_abs, tag = 'smem constant byte address 0x4 - core index']
  #allocation1 [shape = 'u32[144,128]{1,0:T(1,128)}', space=vmem, size = 0x12000, scoped, tag = 'internal scratch']
  %s0 = inlined_call_operand.hbm [shape: f32[2,768], index: 0, kind: input, shape index: {}]
  %s1 = inlined_call_operand.hbm [shape: bf16[768,768], index: 1, kind: input, shape index: {}]
  %s2 = inlined_call_operand.hbm [shape: f32[1,768], index: 2, kind: input, shape index: {}]
  %s3 = inlined_call_operand.hbm [shape: bf16[768,512], index: 3, kind: input, shape index: {}]
  %s4 = inlined_call_operand.hbm [shape: f32[1,512], index: 4, kind: input, shape index: {}]
  %s5 = inlined_call_operand.hbm [shape: bf16[512,128], index: 5, kind: input, shape index: {}]
  %s6 = inlined_call_operand.hbm [shape: f32[1,128], index: 6, kind: input, shape index: {}]
  %s7 = inlined_call_operand.hbm [shape: f32[2,128], index: 7, kind: output, shape index: {}]
  %s8 = sld [smem:[#allocation0]]
  $region66: #{tpu_custom_call.1} parent=0
    _
  %s10 = ssub.s32 1, %s8
  %s11 = scalar_select 0, %s10, %s8
  $region1: #{tpu_custom_call.1} parent=0
    #allocation2 [shape = 'u8[24576]{0}', space=vmem, size = 0x6000, scoped, tag = 'input window, operand 0, single buffered']
    #allocation3 [shape = 's32[1]{0}', space=sflag, size = 0x4, scoped, tag = 'scoped memory for tpu_custom_call.1']
    #allocation4 [shape = 's32[1]{0}', space=sflag, size = 0x4, scoped, tag = 'scoped memory for tpu_custom_call.1']
    #allocation5 [shape = 'u8[1179648]{0}', space=vmem, size = 0x120000, scoped, tag = 'input window, operand 1, single buffered']
    #allocation6 [shape = 's32[1]{0}', space=sflag, size = 0x4, scoped, tag = 'scoped memory for tpu_custom_call.1']
    #allocation7 [shape = 'u8[3072]{0}', space=vmem, size = 0xc00, scoped, tag = 'input window, operand 2, single buffered']
    #allocation8 [shape = 'u8[786432]{0}', space=vmem, size = 0xc0000, scoped, tag = 'input window, operand 3, single buffered']
    #allocation9 [shape = 's32[1]{0}', space=sflag, size = 0x4, scoped, tag = 'scoped memory for tpu_custom_call.1']
    #allocation10 [shape = 'u8[2048]{0}', space=vmem, size = 0x800, scoped, tag = 'input window, operand 4, single buffered']
    #allocation11 [shape = 'u8[131072]{0}', space=vmem, size = 0x20000, scoped, tag = 'input window, operand 5, single buffered']
    #allocation12 [shape = 's32[1]{0}', space=sflag, size = 0x4, scoped, tag = 'scoped memory for tpu_custom_call.1']
    #allocation13 [shape = 'u8[512]{0}', space=vmem, size = 0x400, scoped, tag = 'input window, operand 6, single buffered']
    #allocation14 [shape = 'u8[4096]{0}', space=vmem, size = 0x1000, scoped, tag = 'output window, operand 0, single buffered']
    %12 = vsyncpa [#allocation3], 0
    %13 = vsyncpa [#allocation6], 0
    %14 = vsyncpa [#allocation9], 0
    %15 = vsyncpa [#allocation12], 0
    %16 = vsyncpa [#allocation4], 0
    // Predicated region
    $region2: #{tpu_custom_call.1} parent=1 // pred_check
      _
    $region3: #{tpu_custom_call.1} parent=1 // pred_check_branch
      %18 = sbr.rel (0) target = $region5
    $region4: #{tpu_custom_call.1} parent=1 // pred_region
      %s20 = ssub.s32 768, 192
      %21 = vsyncadd [#allocation3], %s20
      %s22 = sshll.u32 [#allocation2], 4
      %s23 = int_to_ptr.vmem [resolvable:$true] %s22
      %28 = dma.hbm_to_vmem [thread:$0]  %s0, 192, %s23, [#allocation3], 192, 192, 12
    $region5: #{tpu_custom_call.1} parent=1 // pred_fallthru
      _
    // Predicated region
    $region6: #{tpu_custom_call.1} parent=1 // pred_check
      _
    $region7: #{tpu_custom_call.1} parent=1 // pred_check_branch
      %30 = sbr.rel (0) target = $region9
    $region8: #{tpu_custom_call.1} parent=1 // pred_region
      %s32 = ssub.s32 36864, 36864
      %33 = vsyncadd [#allocation6], %s32
      %s34 = sshll.u32 [#allocation5], 4
      %s35 = int_to_ptr.vmem [resolvable:$true] %s34
      %40 = dma.hbm_to_vmem [thread:$0]  %s1, 36864, %s35, [#allocation6], 384, 384, 24
    $region9: #{tpu_custom_call.1} parent=1 // pred_fallthru
      _
    // Predicated region
    $region10: #{tpu_custom_call.1} parent=1 // pred_check
      _
    $region11: #{tpu_custom_call.1} parent=1 // pred_check_branch
      %42 = sbr.rel (0) target = $region13
    $region12: #{tpu_custom_call.1} parent=1 // pred_region
      %s44 = ssub.s32 96, 96
      %45 = vsyncadd [#allocation6], %s44
      %s47 = sshll.u32 [#allocation7], 4
      %s48 = int_to_ptr.vmem [resolvable:$true] %s47
      %50 = dma.hbm_to_vmem [thread:$0]  %s2, 96, %s48, [#allocation6]
    $region13: #{tpu_custom_call.1} parent=1 // pred_fallthru
      _
    // Predicated region
    $region14: #{tpu_custom_call.1} parent=1 // pred_check
      _
    $region15: #{tpu_custom_call.1} parent=1 // pred_check_branch
      %52 = sbr.rel (0) target = $region17
    $region16: #{tpu_custom_call.1} parent=1 // pred_region
      %s54 = ssub.s32 24576, 24576
      %55 = vsyncadd [#allocation9], %s54
      %s56 = sshll.u32 [#allocation8], 4
      %s57 = int_to_ptr.vmem [resolvable:$true] %s56
      %62 = dma.hbm_to_vmem [thread:$0]  %s3, 24576, %s57, [#allocation9], 256, 256, 16
    $region17: #{tpu_custom_call.1} parent=1 // pred_fallthru
      _
    // Predicated region
    $region18: #{tpu_custom_call.1} parent=1 // pred_check
      _
    $region19: #{tpu_custom_call.1} parent=1 // pred_check_branch
      %64 = sbr.rel (0) target = $region21
    $region20: #{tpu_custom_call.1} parent=1 // pred_region
      %s66 = ssub.s32 64, 64
      %67 = vsyncadd [#allocation9], %s66
      %s69 = sshll.u32 [#allocation10], 4
      %s70 = int_to_ptr.vmem [resolvable:$true] %s69
      %72 = dma.hbm_to_vmem [thread:$0]  %s4, 64, %s70, [#allocation9]
    $region21: #{tpu_custom_call.1} parent=1 // pred_fallthru
      _
    // Predicated region
    $region22: #{tpu_custom_call.1} parent=1 // pred_check
      _
    $region23: #{tpu_custom_call.1} parent=1 // pred_check_branch
      %74 = sbr.rel (0) target = $region25
    $region24: #{tpu_custom_call.1} parent=1 // pred_region
      %s76 = ssub.s32 4096, 4096
      %77 = vsyncadd [#allocation12], %s76
      %s78 = sshll.u32 [#allocation11], 4
      %s79 = int_to_ptr.vmem [resolvable:$true] %s78
      %84 = dma.hbm_to_vmem [thread:$0]  %s5, 4096, %s79, [#allocation12], 64, 64, 4
    $region25: #{tpu_custom_call.1} parent=1 // pred_fallthru
      _
    // Predicated region
    $region26: #{tpu_custom_call.1} parent=1 // pred_check
      _
    $region27: #{tpu_custom_call.1} parent=1 // pred_check_branch
      %86 = sbr.rel (0) target = $region29
    $region28: #{tpu_custom_call.1} parent=1 // pred_region
      %s88 = ssub.s32 16, 16
      %89 = vsyncadd [#allocation12], %s88
      %s91 = sshll.u32 [#allocation13], 4
      %s92 = int_to_ptr.vmem [resolvable:$true] %s91
      %94 = dma.hbm_to_vmem [thread:$0]  %s6, 16, %s92, [#allocation12]
    $region29: #{tpu_custom_call.1} parent=1 // pred_fallthru
      _
    // Predicated region
    $region30: #{tpu_custom_call.1} parent=1 // pred_check
      _
    $region31: #{tpu_custom_call.1} parent=1 // pred_check_branch
      %96 = sbr.rel (0) target = $region33
    $region32: #{tpu_custom_call.1} parent=1 // pred_region
      %97 = dma.done [#allocation3], 768
    $region33: #{tpu_custom_call.1} parent=1 // pred_fallthru
      _
    // Predicated region
    $region34: #{tpu_custom_call.1} parent=1 // pred_check
      _
    $region35: #{tpu_custom_call.1} parent=1 // pred_check_branch
      %99 = sbr.rel (0) target = $region37
    $region36: #{tpu_custom_call.1} parent=1 // pred_region
      %100 = dma.done [#allocation6], 36864
    $region37: #{tpu_custom_call.1} parent=1 // pred_fallthru
      _
    // Predicated region
    $region38: #{tpu_custom_call.1} parent=1 // pred_check
      _
    $region39: #{tpu_custom_call.1} parent=1 // pred_check_branch
      %102 = sbr.rel (0) target = $region41
    $region40: #{tpu_custom_call.1} parent=1 // pred_region
      %103 = dma.done [#allocation6], 96
    $region41: #{tpu_custom_call.1} parent=1 // pred_fallthru
      _
    // Predicated region
    $region42: #{tpu_custom_call.1} parent=1 // pred_check
      _
    $region43: #{tpu_custom_call.1} parent=1 // pred_check_branch
      %105 = sbr.rel (0) target = $region45
    $region44: #{tpu_custom_call.1} parent=1 // pred_region
      %106 = dma.done [#allocation9], 24576
    $region45: #{tpu_custom_call.1} parent=1 // pred_fallthru
      _
    // Predicated region
    $region46: #{tpu_custom_call.1} parent=1 // pred_check
      _
    $region47: #{tpu_custom_call.1} parent=1 // pred_check_branch
      %108 = sbr.rel (0) target = $region49
    $region48: #{tpu_custom_call.1} parent=1 // pred_region
      %109 = dma.done [#allocation9], 64
    $region49: #{tpu_custom_call.1} parent=1 // pred_fallthru
      _
    // Predicated region
    $region50: #{tpu_custom_call.1} parent=1 // pred_check
      _
    $region51: #{tpu_custom_call.1} parent=1 // pred_check_branch
      %111 = sbr.rel (0) target = $region53
    $region52: #{tpu_custom_call.1} parent=1 // pred_region
      %112 = dma.done [#allocation12], 4096
    $region53: #{tpu_custom_call.1} parent=1 // pred_fallthru
      _
    // Predicated region
    $region54: #{tpu_custom_call.1} parent=1 // pred_check
      _
    $region55: #{tpu_custom_call.1} parent=1 // pred_check_branch
      %114 = sbr.rel (0) target = $region57
    $region56: #{tpu_custom_call.1} parent=1 // pred_region
      %115 = dma.done [#allocation12], 16
    $region57: #{tpu_custom_call.1} parent=1 // pred_fallthru
      _
    %v117 = vld [vmem:[#allocation2] sm:$0xff]
    %v118 = vld [vmem:[#allocation2 + $0x8] sm:$0xf]
    %v119 = vld [vmem:[#allocation2 + $0xc] sm:$0xff]
    %v120 = vld [vmem:[#allocation2 + $0x14] sm:$0xf]
    %v121 = vld [vmem:[#allocation2 + $0x18] sm:$0xff]
    %v122 = vld [vmem:[#allocation2 + $0x20] sm:$0xf]
    %v123 = vld [vmem:[#allocation2 + $0x24] sm:$0xff]
    %v124 = vld [vmem:[#allocation2 + $0x2c] sm:$0xf]
    %v133 = vcombine.low %v117, %v119
    %v134 = vcombine.high %v117, %v119
    %v135 = vcombine.low %v121, %v123
    %v136 = vcombine.high %v121, %v123
    %v138 = vunpack.c.l.s4 1983009808
    %v139 = vunpack.c.0.s8 %v138
    %v140 = vlaneseq
    %v141 = vshrl.u32 %v140, 7
    %v142 = vsub.s32 %v139, %v141
    %v143 = vrot.slane %v133, %v142
    %v145 = vunpack.c.l.s4 1983009808
    %v146 = vunpack.c.0.s8 %v145
    %v147 = vlaneseq
    %v148 = vshrl.u32 %v147, 7
    %v149 = vsub.s32 %v146, %v148
    %v150 = vrot.slane %v134, %v149
    %v152 = vunpack.c.l.s4 1983009808
    %v153 = vunpack.c.0.s8 %v152
    %v154 = vlaneseq
    %v155 = vshrl.u32 %v154, 7
    %v156 = vsub.s32 %v153, %v155
    %v157 = vrot.slane %v135, %v156
    %v159 = vunpack.c.l.s4 1983009808
    %v160 = vunpack.c.0.s8 %v159
    %v161 = vlaneseq
    %v162 = vshrl.u32 %v161, 7
    %v163 = vsub.s32 %v160, %v162
    %v164 = vrot.slane %v136, %v163
    %v165 = vcombine.low %v143, %v157
    %v166 = vcombine.high %v143, %v157
    %v167 = vcombine.low %v150, %v164
    %v168 = vcombine.high %v150, %v164
    %v169 = vcombine.low %v118, %v120
    %v170 = vcombine.low %v122, %v124
    %v172 = vunpack.c.l.s4 1983009808
    %v173 = vunpack.c.0.s8 %v172
    %v174 = vlaneseq
    %v175 = vshrl.u32 %v174, 7
    %v176 = vsub.s32 %v173, %v175
    %v177 = vrot.slane %v169, %v176
    %v179 = vunpack.c.l.s4 1983009808
    %v180 = vunpack.c.0.s8 %v179
    %v181 = vlaneseq
    %v182 = vshrl.u32 %v181, 7
    %v183 = vsub.s32 %v180, %v182
    %v184 = vrot.slane %v170, %v183
    %v185 = vcombine.low %v177, %v184
    %v186 = vcombine.high %v177, %v184
    %v193 = vpack.c.bf16 %v165, %v165
    %v194 = vpack.c.bf16 %v166, %v166
    %v195 = vpack.c.bf16 %v167, %v167
    %v196 = vpack.c.bf16 %v168, %v168
    %v197 = vpack.c.bf16 %v185, %v185
    %v198 = vpack.c.bf16 %v186, %v186
    %v199 = vld [vmem:[#allocation5] sm:$0xff]
    %v200 = vld [vmem:[#allocation5 + $0x8] sm:$0xff]
    %v201 = vld [vmem:[#allocation5 + $0x10] sm:$0xff]
    %v202 = vld [vmem:[#allocation5 + $0x18] sm:$0xff]
    %v203 = vld [vmem:[#allocation5 + $0x20] sm:$0xff]
    %v204 = vld [vmem:[#allocation5 + $0x28] sm:$0xff]
    %v205 = vld [vmem:[#allocation5 + $0x30] sm:$0xff]
    %v206 = vld [vmem:[#allocation5 + $0x38] sm:$0xff]
    %v207 = vld [vmem:[#allocation5 + $0x40] sm:$0xff]
    %v208 = vld [vmem:[#allocation5 + $0x48] sm:$0xff]
    %v209 = vld [vmem:[#allocation5 + $0x50] sm:$0xff]
    %v210 = vld [vmem:[#allocation5 + $0x58] sm:$0xff]
    %v211 = vld [vmem:[#allocation5 + $0x60] sm:$0xff]
    %v212 = vld [vmem:[#allocation5 + $0x68] sm:$0xff]
    %v213 = vld [vmem:[#allocation5 + $0x70] sm:$0xff]
    %v214 = vld [vmem:[#allocation5 + $0x78] sm:$0xff]
    %v215 = vld [vmem:[#allocation5 + $0x80] sm:$0xff]
    %v216 = vld [vmem:[#allocation5 + $0x88] sm:$0xff]
    %v217 = vld [vmem:[#allocation5 + $0x90] sm:$0xff]
    %v218 = vld [vmem:[#allocation5 + $0x98] sm:$0xff]
    %v219 = vld [vmem:[#allocation5 + $0xa0] sm:$0xff]
    %v220 = vld [vmem:[#allocation5 + $0xa8] sm:$0xff]
    %v221 = vld [vmem:[#allocation5 + $0xb0] sm:$0xff]
    %v222 = vld [vmem:[#allocation5 + $0xb8] sm:$0xff]
    %v223 = vld [vmem:[#allocation5 + $0xc0] sm:$0xff]
    %v224 = vld [vmem:[#allocation5 + $0xc8] sm:$0xff]
    %v225 = vld [vmem:[#allocation5 + $0xd0] sm:$0xff]
    %v226 = vld [vmem:[#allocation5 + $0xd8] sm:$0xff]
    %v227 = vld [vmem:[#allocation5 + $0xe0] sm:$0xff]
    %v228 = vld [vmem:[#allocation5 + $0xe8] sm:$0xff]
    %v229 = vld [vmem:[#allocation5 + $0xf0] sm:$0xff]
    %v230 = vld [vmem:[#allocation5 + $0xf8] sm:$0xff]
    %v231 = vld [vmem:[#allocation5 + $0x100] sm:$0xff]
    %v232 = vld [vmem:[#allocation5 + $0x108] sm:$0xff]
    %v233 = vld [vmem:[#allocation5 + $0x110] sm:$0xff]
    %v234 = vld [vmem:[#allocation5 + $0x118] sm:$0xff]
    %v235 = vld [vmem:[#allocation5 + $0x120] sm:$0xff]
    %v236 = vld [vmem:[#allocation5 + $0x128] sm:$0xff]
    %v237 = vld [vmem:[#allocation5 + $0x130] sm:$0xff]
    %v238 = vld [vmem:[#allocation5 + $0x138] sm:$0xff]
    %v239 = vld [vmem:[#allocation5 + $0x140] sm:$0xff]
    %v240 = vld [vmem:[#allocation5 + $0x148] sm:$0xff]
    %v241 = vld [vmem:[#allocation5 + $0x150] sm:$0xff]
    %v242 = vld [vmem:[#allocation5 + $0x158] sm:$0xff]
    %v243 = vld [vmem:[#allocation5 + $0x160] sm:$0xff]
    %v244 = vld [vmem:[#allocation5 + $0x168] sm:$0xff]
    %v245 = vld [vmem:[#allocation5 + $0x170] sm:$0xff]
    %v246 = vld [vmem:[#allocation5 + $0x178] sm:$0xff]
    %v247 = vld [vmem:[#allocation5 + $0x180] sm:$0xff]
    %v248 = vld [vmem:[#allocation5 + $0x188] sm:$0xff]
    %v249 = vld [vmem:[#allocation5 + $0x190] sm:$0xff]
    %v250 = vld [vmem:[#allocation5 + $0x198] sm:$0xff]
    %v251 = vld [vmem:[#allocation5 + $0x1a0] sm:$0xff]
    %v252 = vld [vmem:[#allocation5 + $0x1a8] sm:$0xff]
    %v253 = vld [vmem:[#allocation5 + $0x1b0] sm:$0xff]
    %v254 = vld [vmem:[#allocation5 + $0x1b8] sm:$0xff]
    %v255 = vld [vmem:[#allocation5 + $0x1c0] sm:$0xff]
    %v256 = vld [vmem:[#allocation5 + $0x1c8] sm:$0xff]
    %v257 = vld [vmem:[#allocation5 + $0x1d0] sm:$0xff]
    %v258 = vld [vmem:[#allocation5 + $0x1d8] sm:$0xff]
    %v259 = vld [vmem:[#allocation5 + $0x1e0] sm:$0xff]
    %v260 = vld [vmem:[#allocation5 + $0x1e8] sm:$0xff]
    %v261 = vld [vmem:[#allocation5 + $0x1f0] sm:$0xff]
    %v262 = vld [vmem:[#allocation5 + $0x1f8] sm:$0xff]
    %v263 = vld [vmem:[#allocation5 + $0x200] sm:$0xff]
    %v264 = vld [vmem:[#allocation5 + $0x208] sm:$0xff]
    %v265 = vld [vmem:[#allocation5 + $0x210] sm:$0xff]
    %v266 = vld [vmem:[#allocation5 + $0x218] sm:$0xff]
    %v267 = vld [vmem:[#allocation5 + $0x220] sm:$0xff]
    %v268 = vld [vmem:[#allocation5 + $0x228] sm:$0xff]
    %v269 = vld [vmem:[#allocation5 + $0x230] sm:$0xff]
    %v270 = vld [vmem:[#allocation5 + $0x238] sm:$0xff]
    %v271 = vld [vmem:[#allocation5 + $0x240] sm:$0xff]
    %v272 = vld [vmem:[#allocation5 + $0x248] sm:$0xff]
    %v273 = vld [vmem:[#allocation5 + $0x250] sm:$0xff]
    %v274 = vld [vmem:[#allocation5 + $0x258] sm:$0xff]
    %v275 = vld [vmem:[#allocation5 + $0x260] sm:$0xff]
    %v276 = vld [vmem:[#allocation5 + $0x268] sm:$0xff]
    %v277 = vld [vmem:[#allocation5 + $0x270] sm:$0xff]
    %v278 = vld [vmem:[#allocation5 + $0x278] sm:$0xff]
    %v279 = vld [vmem:[#allocation5 + $0x280] sm:$0xff]
    %v280 = vld [vmem:[#allocation5 + $0x288] sm:$0xff]
    %v281 = vld [vmem:[#allocation5 + $0x290] sm:$0xff]
    %v282 = vld [vmem:[#allocation5 + $0x298] sm:$0xff]
    %v283 = vld [vmem:[#allocation5 + $0x2a0] sm:$0xff]
    %v284 = vld [vmem:[#allocation5 + $0x2a8] sm:$0xff]
    %v285 = vld [vmem:[#allocation5 + $0x2b0] sm:$0xff]
    %v286 = vld [vmem:[#allocation5 + $0x2b8] sm:$0xff]
    %v287 = vld [vmem:[#allocation5 + $0x2c0] sm:$0xff]
    %v288 = vld [vmem:[#allocation5 + $0x2c8] sm:$0xff]
    %v289 = vld [vmem:[#allocation5 + $0x2d0] sm:$0xff]
    %v290 = vld [vmem:[#allocation5 + $0x2d8] sm:$0xff]
    %v291 = vld [vmem:[#allocation5 + $0x2e0] sm:$0xff]
    %v292 = vld [vmem:[#allocation5 + $0x2e8] sm:$0xff]
    %v293 = vld [vmem:[#allocation5 + $0x2f0] sm:$0xff]
    %v294 = vld [vmem:[#allocation5 + $0x2f8] sm:$0xff]
    %v295 = vld [vmem:[#allocation5 + $0x300] sm:$0xff]
    %v296 = vld [vmem:[#allocation5 + $0x308] sm:$0xff]
    %v297 = vld [vmem:[#allocation5 + $0x310] sm:$0xff]
    %v298 = vld [vmem:[#allocation5 + $0x318] sm:$0xff]
    %v299 = vld [vmem:[#allocation5 + $0x320] sm:$0xff]
    %v300 = vld [vmem:[#allocation5 + $0x328] sm:$0xff]
    %v301 = vld [vmem:[#allocation5 + $0x330] sm:$0xff]
    %v302 = vld [vmem:[#allocation5 + $0x338] sm:$0xff]
    %v303 = vld [vmem:[#allocation5 + $0x340] sm:$0xff]
    %v304 = vld [vmem:[#allocation5 + $0x348] sm:$0xff]
    %v305 = vld [vmem:[#allocation5 + $0x350] sm:$0xff]
    %v306 = vld [vmem:[#allocation5 + $0x358] sm:$0xff]
    %v307 = vld [vmem:[#allocation5 + $0x360] sm:$0xff]
    %v308 = vld [vmem:[#allocation5 + $0x368] sm:$0xff]
    %v309 = vld [vmem:[#allocation5 + $0x370] sm:$0xff]
    %v310 = vld [vmem:[#allocation5 + $0x378] sm:$0xff]
    %v311 = vld [vmem:[#allocation5 + $0x380] sm:$0xff]
    %v312 = vld [vmem:[#allocation5 + $0x388] sm:$0xff]
    %v313 = vld [vmem:[#allocation5 + $0x390] sm:$0xff]
    %v314 = vld [vmem:[#allocation5 + $0x398] sm:$0xff]
    %v315 = vld [vmem:[#allocation5 + $0x3a0] sm:$0xff]
    %v316 = vld [vmem:[#allocation5 + $0x3a8] sm:$0xff]
    %v317 = vld [vmem:[#allocation5 + $0x3b0] sm:$0xff]
    %v318 = vld [vmem:[#allocation5 + $0x3b8] sm:$0xff]
    %v319 = vld [vmem:[#allocation5 + $0x3c0] sm:$0xff]
    %v320 = vld [vmem:[#allocation5 + $0x3c8] sm:$0xff]
    %v321 = vld [vmem:[#allocation5 + $0x3d0] sm:$0xff]
    %v322 = vld [vmem:[#allocation5 + $0x3d8] sm:$0xff]
    %v323 = vld [vmem:[#allocation5 + $0x3e0] sm:$0xff]
    %v324 = vld [vmem:[#allocation5 + $0x3e8] sm:$0xff]
    %v325 = vld [vmem:[#allocation5 + $0x3f0] sm:$0xff]
    %v326 = vld [vmem:[#allocation5 + $0x3f8] sm:$0xff]
    %v327 = vld [vmem:[#allocation5 + $0x400] sm:$0xff]
    %v328 = vld [vmem:[#allocation5 + $0x408] sm:$0xff]
    %v329 = vld [vmem:[#allocation5 + $0x410] sm:$0xff]
    %v330 = vld [vmem:[#allocation5 + $0x418] sm:$0xff]
    %v331 = vld [vmem:[#allocation5 + $0x420] sm:$0xff]
    %v332 = vld [vmem:[#allocation5 + $0x428] sm:$0xff]
    %v333 = vld [vmem:[#allocation5 + $0x430] sm:$0xff]
    %v334 = vld [vmem:[#allocation5 + $0x438] sm:$0xff]
    %v335 = vld [vmem:[#allocation5 + $0x440] sm:$0xff]
    %v336 = vld [vmem:[#allocation5 + $0x448] sm:$0xff]
    %v337 = vld [vmem:[#allocation5 + $0x450] sm:$0xff]
    %v338 = vld [vmem:[#allocation5 + $0x458] sm:$0xff]
    %v339 = vld [vmem:[#allocation5 + $0x460] sm:$0xff]
    %v340 = vld [vmem:[#allocation5 + $0x468] sm:$0xff]
    %v341 = vld [vmem:[#allocation5 + $0x470] sm:$0xff]
    %v342 = vld [vmem:[#allocation5 + $0x478] sm:$0xff]
    %v343 = vld [vmem:[#allocation5 + $0x480] sm:$0xff]
    %v344 = vld [vmem:[#allocation5 + $0x488] sm:$0xff]
    %v345 = vld [vmem:[#allocation5 + $0x490] sm:$0xff]
    %v346 = vld [vmem:[#allocation5 + $0x498] sm:$0xff]
    %v347 = vld [vmem:[#allocation5 + $0x4a0] sm:$0xff]
    %v348 = vld [vmem:[#allocation5 + $0x4a8] sm:$0xff]
    %v349 = vld [vmem:[#allocation5 + $0x4b0] sm:$0xff]
    %v350 = vld [vmem:[#allocation5 + $0x4b8] sm:$0xff]
    %v351 = vld [vmem:[#allocation5 + $0x4c0] sm:$0xff]
    %v352 = vld [vmem:[#allocation5 + $0x4c8] sm:$0xff]
    %v353 = vld [vmem:[#allocation5 + $0x4d0] sm:$0xff]
    %v354 = vld [vmem:[#allocation5 + $0x4d8] sm:$0xff]
    %v355 = vld [vmem:[#allocation5 + $0x4e0] sm:$0xff]
    %v356 = vld [vmem:[#allocation5 + $0x4e8] sm:$0xff]
    %v357 = vld [vmem:[#allocation5 + $0x4f0] sm:$0xff]
    %v358 = vld [vmem:[#allocation5 + $0x4f8] sm:$0xff]
    %v359 = vld [vmem:[#allocation5 + $0x500] sm:$0xff]
    %v360 = vld [vmem:[#allocation5 + $0x508] sm:$0xff]
    %v361 = vld [vmem:[#allocation5 + $0x510] sm:$0xff]
    %v362 = vld [vmem:[#allocation5 + $0x518] sm:$0xff]
    %v363 = vld [vmem:[#allocation5 + $0x520] sm:$0xff]
    %v364 = vld [vmem:[#allocation5 + $0x528] sm:$0xff]
    %v365 = vld [vmem:[#allocation5 + $0x530] sm:$0xff]
    %v366 = vld [vmem:[#allocation5 + $0x538] sm:$0xff]
    %v367 = vld [vmem:[#allocation5 + $0x540] sm:$0xff]
    %v368 = vld [vmem:[#allocation5 + $0x548] sm:$0xff]
    %v369 = vld [vmem:[#allocation5 + $0x550] sm:$0xff]
    %v370 = vld [vmem:[#allocation5 + $0x558] sm:$0xff]
    %v371 = vld [vmem:[#allocation5 + $0x560] sm:$0xff]
    %v372 = vld [vmem:[#allocation5 + $0x568] sm:$0xff]
    %v373 = vld [vmem:[#allocation5 + $0x570] sm:$0xff]
    %v374 = vld [vmem:[#allocation5 + $0x578] sm:$0xff]
    %v375 = vld [vmem:[#allocation5 + $0x580] sm:$0xff]
    %v376 = vld [vmem:[#allocation5 + $0x588] sm:$0xff]
    %v377 = vld [vmem:[#allocation5 + $0x590] sm:$0xff]
    %v378 = vld [vmem:[#allocation5 + $0x598] sm:$0xff]
    %v379 = vld [vmem:[#allocation5 + $0x5a0] sm:$0xff]
    %v380 = vld [vmem:[#allocation5 + $0x5a8] sm:$0xff]
    %v381 = vld [vmem:[#allocation5 + $0x5b0] sm:$0xff]
    %v382 = vld [vmem:[#allocation5 + $0x5b8] sm:$0xff]
    %v383 = vld [vmem:[#allocation5 + $0x5c0] sm:$0xff]
    %v384 = vld [vmem:[#allocation5 + $0x5c8] sm:$0xff]
    %v385 = vld [vmem:[#allocation5 + $0x5d0] sm:$0xff]
    %v386 = vld [vmem:[#allocation5 + $0x5d8] sm:$0xff]
    %v387 = vld [vmem:[#allocation5 + $0x5e0] sm:$0xff]
    %v388 = vld [vmem:[#allocation5 + $0x5e8] sm:$0xff]
    %v389 = vld [vmem:[#allocation5 + $0x5f0] sm:$0xff]
    %v390 = vld [vmem:[#allocation5 + $0x5f8] sm:$0xff]
    %v391 = vld [vmem:[#allocation5 + $0x600] sm:$0xff]
    %v392 = vld [vmem:[#allocation5 + $0x608] sm:$0xff]
    %v393 = vld [vmem:[#allocation5 + $0x610] sm:$0xff]
    %v394 = vld [vmem:[#allocation5 + $0x618] sm:$0xff]
    %v395 = vld [vmem:[#allocation5 + $0x620] sm:$0xff]
    %v396 = vld [vmem:[#allocation5 + $0x628] sm:$0xff]
    %v397 = vld [vmem:[#allocation5 + $0x630] sm:$0xff]
    %v398 = vld [vmem:[#allocation5 + $0x638] sm:$0xff]
    %v399 = vld [vmem:[#allocation5 + $0x640] sm:$0xff]
    %v400 = vld [vmem:[#allocation5 + $0x648] sm:$0xff]
    %v401 = vld [vmem:[#allocation5 + $0x650] sm:$0xff]
    %v402 = vld [vmem:[#allocation5 + $0x658] sm:$0xff]
    %v403 = vld [vmem:[#allocation5 + $0x660] sm:$0xff]
    %v404 = vld [vmem:[#allocation5 + $0x668] sm:$0xff]
    %v405 = vld [vmem:[#allocation5 + $0x670] sm:$0xff]
    %v406 = vld [vmem:[#allocation5 + $0x678] sm:$0xff]
    %v407 = vld [vmem:[#allocation5 + $0x680] sm:$0xff]
    %v408 = vld [vmem:[#allocation5 + $0x688] sm:$0xff]
    %v409 = vld [vmem:[#allocation5 + $0x690] sm:$0xff]
    %v410 = vld [vmem:[#allocation5 + $0x698] sm:$0xff]
    %v411 = vld [vmem:[#allocation5 + $0x6a0] sm:$0xff]
    %v412 = vld [vmem:[#allocation5 + $0x6a8] sm:$0xff]
    %v413 = vld [vmem:[#allocation5 + $0x6b0] sm:$0xff]
    %v414 = vld [vmem:[#allocation5 + $0x6b8] sm:$0xff]
    %v415 = vld [vmem:[#allocation5 + $0x6c0] sm:$0xff]
    %v416 = vld [vmem:[#allocation5 + $0x6c8] sm:$0xff]
    %v417 = vld [vmem:[#allocation5 + $0x6d0] sm:$0xff]
    %v418 = vld [vmem:[#allocation5 + $0x6d8] sm:$0xff]
    %v419 = vld [vmem:[#allocation5 + $0x6e0] sm:$0xff]
    %v420 = vld [vmem:[#allocation5 + $0x6e8] sm:$0xff]
    %v421 = vld [vmem:[#allocation5 + $0x6f0] sm:$0xff]
    %v422 = vld [vmem:[#allocation5 + $0x6f8] sm:$0xff]
    %v423 = vld [vmem:[#allocation5 + $0x700] sm:$0xff]
    %v424 = vld [vmem:[#allocation5 + $0x708] sm:$0xff]
    %v425 = vld [vmem:[#allocation5 + $0x710] sm:$0xff]
    %v426 = vld [vmem:[#allocation5 + $0x718] sm:$0xff]
    %v427 = vld [vmem:[#allocation5 + $0x720] sm:$0xff]
    %v428 = vld [vmem:[#allocation5 + $0x728] sm:$0xff]
    %v429 = vld [vmem:[#allocation5 + $0x730] sm:$0xff]
    %v430 = vld [vmem:[#allocation5 + $0x738] sm:$0xff]
    %v431 = vld [vmem:[#allocation5 + $0x740] sm:$0xff]
    %v432 = vld [vmem:[#allocation5 + $0x748] sm:$0xff]
    %v433 = vld [vmem:[#allocation5 + $0x750] sm:$0xff]
    %v434 = vld [vmem:[#allocation5 + $0x758] sm:$0xff]
    %v435 = vld [vmem:[#allocation5 + $0x760] sm:$0xff]
    %v436 = vld [vmem:[#allocation5 + $0x768] sm:$0xff]
    %v437 = vld [vmem:[#allocation5 + $0x770] sm:$0xff]
    %v438 = vld [vmem:[#allocation5 + $0x778] sm:$0xff]
    %v439 = vld [vmem:[#allocation5 + $0x780] sm:$0xff]
    %v440 = vld [vmem:[#allocation5 + $0x788] sm:$0xff]
    %v441 = vld [vmem:[#allocation5 + $0x790] sm:$0xff]
    %v442 = vld [vmem:[#allocation5 + $0x798] sm:$0xff]
    %v443 = vld [vmem:[#allocation5 + $0x7a0] sm:$0xff]
    %v444 = vld [vmem:[#allocation5 + $0x7a8] sm:$0xff]
    %v445 = vld [vmem:[#allocation5 + $0x7b0] sm:$0xff]
    %v446 = vld [vmem:[#allocation5 + $0x7b8] sm:$0xff]
    %v447 = vld [vmem:[#allocation5 + $0x7c0] sm:$0xff]
    %v448 = vld [vmem:[#allocation5 + $0x7c8] sm:$0xff]
    %v449 = vld [vmem:[#allocation5 + $0x7d0] sm:$0xff]
    %v450 = vld [vmem:[#allocation5 + $0x7d8] sm:$0xff]
    %v451 = vld [vmem:[#allocation5 + $0x7e0] sm:$0xff]
    %v452 = vld [vmem:[#allocation5 + $0x7e8] sm:$0xff]
    %v453 = vld [vmem:[#allocation5 + $0x7f0] sm:$0xff]
    %v454 = vld [vmem:[#allocation5 + $0x7f8] sm:$0xff]
    %v455 = vld [vmem:[#allocation5 + $0x800] sm:$0xff]
    %v456 = vld [vmem:[#allocation5 + $0x808] sm:$0xff]
    %v457 = vld [vmem:[#allocation5 + $0x810] sm:$0xff]
    %v458 = vld [vmem:[#allocation5 + $0x818] sm:$0xff]
    %v459 = vld [vmem:[#allocation5 + $0x820] sm:$0xff]
    %v460 = vld [vmem:[#allocation5 + $0x828] sm:$0xff]
    %v461 = vld [vmem:[#allocation5 + $0x830] sm:$0xff]
    %v462 = vld [vmem:[#allocation5 + $0x838] sm:$0xff]
    %v463 = vld [vmem:[#allocation5 + $0x840] sm:$0xff]
    %v464 = vld [vmem:[#allocation5 + $0x848] sm:$0xff]
    %v465 = vld [vmem:[#allocation5 + $0x850] sm:$0xff]
    %v466 = vld [vmem:[#allocation5 + $0x858] sm:$0xff]
    %v467 = vld [vmem:[#allocation5 + $0x860] sm:$0xff]
    %v468 = vld [vmem:[#allocation5 + $0x868] sm:$0xff]
    %v469 = vld [vmem:[#allocation5 + $0x870] sm:$0xff]
    %v470 = vld [vmem:[#allocation5 + $0x878] sm:$0xff]
    %v471 = vld [vmem:[#allocation5 + $0x880] sm:$0xff]
    %v472 = vld [vmem:[#allocation5 + $0x888] sm:$0xff]
    %v473 = vld [vmem:[#allocation5 + $0x890] sm:$0xff]
    %v474 = vld [vmem:[#allocation5 + $0x898] sm:$0xff]
    %v475 = vld [vmem:[#allocation5 + $0x8a0] sm:$0xff]
    %v476 = vld [vmem:[#allocation5 + $0x8a8] sm:$0xff]
    %v477 = vld [vmem:[#allocation5 + $0x8b0] sm:$0xff]
    %v478 = vld [vmem:[#allocation5 + $0x8b8] sm:$0xff]
    %v479 = vld [vmem:[#allocation5 + $0x8c0] sm:$0xff]
    %v480 = vld [vmem:[#allocation5 + $0x8c8] sm:$0xff]
    %v481 = vld [vmem:[#allocation5 + $0x8d0] sm:$0xff]
    %v482 = vld [vmem:[#allocation5 + $0x8d8] sm:$0xff]
    %v483 = vld [vmem:[#allocation5 + $0x8e0] sm:$0xff]
    %v484 = vld [vmem:[#allocation5 + $0x8e8] sm:$0xff]
    %v485 = vld [vmem:[#allocation5 + $0x8f0] sm:$0xff]
    %v486 = vld [vmem:[#allocation5 + $0x8f8] sm:$0xff]
    %v487 = vld [vmem:[#allocation7] sm:$0x3f]
    %v489 = vlaneseq
    %v490 = vshrl.u32 %v489, 7
    %v491 = vsub.s32 0, %v490
    %v492 = vrot.slane %v487, %v491
    %v493 = vlaneseq
    %v494 = vshrl.u32 %v493, 7
    %v495 = vsub.s32 1, %v494
    %v496 = vrot.slane %v487, %v495
    %v497 = vlaneseq
    %v498 = vshrl.u32 %v497, 7
    %v499 = vsub.s32 2, %v498
    %v500 = vrot.slane %v487, %v499
    %v501 = vlaneseq
    %v502 = vshrl.u32 %v501, 7
    %v503 = vsub.s32 3, %v502
    %v504 = vrot.slane %v487, %v503
    %v505 = vlaneseq
    %v506 = vshrl.u32 %v505, 7
    %v507 = vsub.s32 4, %v506
    %v508 = vrot.slane %v487, %v507
    %v509 = vlaneseq
    %v510 = vshrl.u32 %v509, 7
    %v511 = vsub.s32 5, %v510
    %v512 = vrot.slane %v487, %v511
    %v807 = vunpack.c.l.b16 %v199
    %v808 = vunpack.c.h.b16 %v199
    %v809 = vunpack.c.l.b16 %v200
    %v810 = vunpack.c.h.b16 %v200
    %v811 = vunpack.c.l.b16 %v201
    %v812 = vunpack.c.h.b16 %v201
    %v813 = vunpack.c.l.b16 %v202
    %v814 = vunpack.c.h.b16 %v202
    %v815 = vunpack.c.l.b16 %v203
    %v816 = vunpack.c.h.b16 %v203
    %v817 = vunpack.c.l.b16 %v204
    %v818 = vunpack.c.h.b16 %v204
    %v819 = vunpack.c.l.b16 %v205
    %v820 = vunpack.c.h.b16 %v205
    %v821 = vunpack.c.l.b16 %v206
    %v822 = vunpack.c.h.b16 %v206
    %v823 = vunpack.c.l.b16 %v207
    %v824 = vunpack.c.h.b16 %v207
    %v825 = vunpack.c.l.b16 %v208
    %v826 = vunpack.c.h.b16 %v208
    %v827 = vunpack.c.l.b16 %v209
    %v828 = vunpack.c.h.b16 %v209
    %v829 = vunpack.c.l.b16 %v210
    %v830 = vunpack.c.h.b16 %v210
    %v831 = vunpack.c.l.b16 %v211
    %v832 = vunpack.c.h.b16 %v211
    %v833 = vunpack.c.l.b16 %v212
    %v834 = vunpack.c.h.b16 %v212
    %v835 = vunpack.c.l.b16 %v213
    %v836 = vunpack.c.h.b16 %v213
    %v837 = vunpack.c.l.b16 %v214
    %v838 = vunpack.c.h.b16 %v214
    %v839 = vunpack.c.l.b16 %v215
    %v840 = vunpack.c.h.b16 %v215
    %v841 = vunpack.c.l.b16 %v216
    %v842 = vunpack.c.h.b16 %v216
    %v843 = vunpack.c.l.b16 %v217
    %v844 = vunpack.c.h.b16 %v217
    %v845 = vunpack.c.l.b16 %v218
    %v846 = vunpack.c.h.b16 %v218
    %v847 = vunpack.c.l.b16 %v219
    %v848 = vunpack.c.h.b16 %v219
    %v849 = vunpack.c.l.b16 %v220
    %v850 = vunpack.c.h.b16 %v220
    %v851 = vunpack.c.l.b16 %v221
    %v852 = vunpack.c.h.b16 %v221
    %v853 = vunpack.c.l.b16 %v222
    %v854 = vunpack.c.h.b16 %v222
    %v855 = vunpack.c.l.b16 %v223
    %v856 = vunpack.c.h.b16 %v223
    %v857 = vunpack.c.l.b16 %v224
    %v858 = vunpack.c.h.b16 %v224
    %v859 = vunpack.c.l.b16 %v225
    %v860 = vunpack.c.h.b16 %v225
    %v861 = vunpack.c.l.b16 %v226
    %v862 = vunpack.c.h.b16 %v226
    %v863 = vunpack.c.l.b16 %v227
    %v864 = vunpack.c.h.b16 %v227
    %v865 = vunpack.c.l.b16 %v228
    %v866 = vunpack.c.h.b16 %v228
    %v867 = vunpack.c.l.b16 %v229
    %v868 = vunpack.c.h.b16 %v229
    %v869 = vunpack.c.l.b16 %v230
    %v870 = vunpack.c.h.b16 %v230
    %v871 = vunpack.c.l.b16 %v231
    %v872 = vunpack.c.h.b16 %v231
    %v873 = vunpack.c.l.b16 %v232
    %v874 = vunpack.c.h.b16 %v232
    %v875 = vunpack.c.l.b16 %v233
    %v876 = vunpack.c.h.b16 %v233
    %v877 = vunpack.c.l.b16 %v234
    %v878 = vunpack.c.h.b16 %v234
    %v879 = vunpack.c.l.b16 %v235
    %v880 = vunpack.c.h.b16 %v235
    %v881 = vunpack.c.l.b16 %v236
    %v882 = vunpack.c.h.b16 %v236
    %v883 = vunpack.c.l.b16 %v237
    %v884 = vunpack.c.h.b16 %v237
    %v885 = vunpack.c.l.b16 %v238
    %v886 = vunpack.c.h.b16 %v238
    %v887 = vunpack.c.l.b16 %v239
    %v888 = vunpack.c.h.b16 %v239
    %v889 = vunpack.c.l.b16 %v240
    %v890 = vunpack.c.h.b16 %v240
    %v891 = vunpack.c.l.b16 %v241
    %v892 = vunpack.c.h.b16 %v241
    %v893 = vunpack.c.l.b16 %v242
    %v894 = vunpack.c.h.b16 %v242
    %v895 = vunpack.c.l.b16 %v243
    %v896 = vunpack.c.h.b16 %v243
    %v897 = vunpack.c.l.b16 %v244
    %v898 = vunpack.c.h.b16 %v244
    %v899 = vunpack.c.l.b16 %v245
    %v900 = vunpack.c.h.b16 %v245
    %v901 = vunpack.c.l.b16 %v246
    %v902 = vunpack.c.h.b16 %v246
    %v903 = vunpack.c.l.b16 %v247
    %v904 = vunpack.c.h.b16 %v247
    %v905 = vunpack.c.l.b16 %v248
    %v906 = vunpack.c.h.b16 %v248
    %v907 = vunpack.c.l.b16 %v249
    %v908 = vunpack.c.h.b16 %v249
    %v909 = vunpack.c.l.b16 %v250
    %v910 = vunpack.c.h.b16 %v250
    %v911 = vunpack.c.l.b16 %v251
    %v912 = vunpack.c.h.b16 %v251
    %v913 = vunpack.c.l.b16 %v252
    %v914 = vunpack.c.h.b16 %v252
    %v915 = vunpack.c.l.b16 %v253
    %v916 = vunpack.c.h.b16 %v253
    %v917 = vunpack.c.l.b16 %v254
    %v918 = vunpack.c.h.b16 %v254
    %v919 = vunpack.c.l.b16 %v255
    %v920 = vunpack.c.h.b16 %v255
    %v921 = vunpack.c.l.b16 %v256
    %v922 = vunpack.c.h.b16 %v256
    %v923 = vunpack.c.l.b16 %v257
    %v924 = vunpack.c.h.b16 %v257
    %v925 = vunpack.c.l.b16 %v258
    %v926 = vunpack.c.h.b16 %v258
    %v927 = vunpack.c.l.b16 %v259
    %v928 = vunpack.c.h.b16 %v259
    %v929 = vunpack.c.l.b16 %v260
    %v930 = vunpack.c.h.b16 %v260
    %v931 = vunpack.c.l.b16 %v261
    %v932 = vunpack.c.h.b16 %v261
    %v933 = vunpack.c.l.b16 %v262
    %v934 = vunpack.c.h.b16 %v262
    %v935 = vunpack.c.l.b16 %v263
    %v936 = vunpack.c.h.b16 %v263
    %v937 = vunpack.c.l.b16 %v264
    %v938 = vunpack.c.h.b16 %v264
    %v939 = vunpack.c.l.b16 %v265
    %v940 = vunpack.c.h.b16 %v265
    %v941 = vunpack.c.l.b16 %v266
    %v942 = vunpack.c.h.b16 %v266
    %v943 = vunpack.c.l.b16 %v267
    %v944 = vunpack.c.h.b16 %v267
    %v945 = vunpack.c.l.b16 %v268
    %v946 = vunpack.c.h.b16 %v268
    %v947 = vunpack.c.l.b16 %v269
    %v948 = vunpack.c.h.b16 %v269
    %v949 = vunpack.c.l.b16 %v270
    %v950 = vunpack.c.h.b16 %v270
    %v951 = vunpack.c.l.b16 %v271
    %v952 = vunpack.c.h.b16 %v271
    %v953 = vunpack.c.l.b16 %v272
    %v954 = vunpack.c.h.b16 %v272
    %v955 = vunpack.c.l.b16 %v273
    %v956 = vunpack.c.h.b16 %v273
    %v957 = vunpack.c.l.b16 %v274
    %v958 = vunpack.c.h.b16 %v274
    %v959 = vunpack.c.l.b16 %v275
    %v960 = vunpack.c.h.b16 %v275
    %v961 = vunpack.c.l.b16 %v276
    %v962 = vunpack.c.h.b16 %v276
    %v963 = vunpack.c.l.b16 %v277
    %v964 = vunpack.c.h.b16 %v277
    %v965 = vunpack.c.l.b16 %v278
    %v966 = vunpack.c.h.b16 %v278
    %v967 = vunpack.c.l.b16 %v279
    %v968 = vunpack.c.h.b16 %v279
    %v969 = vunpack.c.l.b16 %v280
    %v970 = vunpack.c.h.b16 %v280
    %v971 = vunpack.c.l.b16 %v281
    %v972 = vunpack.c.h.b16 %v281
    %v973 = vunpack.c.l.b16 %v282
    %v974 = vunpack.c.h.b16 %v282
    %v975 = vunpack.c.l.b16 %v283
    %v976 = vunpack.c.h.b16 %v283
    %v977 = vunpack.c.l.b16 %v284
    %v978 = vunpack.c.h.b16 %v284
    %v979 = vunpack.c.l.b16 %v285
    %v980 = vunpack.c.h.b16 %v285
    %v981 = vunpack.c.l.b16 %v286
    %v982 = vunpack.c.h.b16 %v286
    %v983 = vunpack.c.l.b16 %v287
    %v984 = vunpack.c.h.b16 %v287
    %v985 = vunpack.c.l.b16 %v288
    %v986 = vunpack.c.h.b16 %v288
    %v987 = vunpack.c.l.b16 %v289
    %v988 = vunpack.c.h.b16 %v289
    %v989 = vunpack.c.l.b16 %v290
    %v990 = vunpack.c.h.b16 %v290
    %v991 = vunpack.c.l.b16 %v291
    %v992 = vunpack.c.h.b16 %v291
    %v993 = vunpack.c.l.b16 %v292
    %v994 = vunpack.c.h.b16 %v292
    %v995 = vunpack.c.l.b16 %v293
    %v996 = vunpack.c.h.b16 %v293
    %v997 = vunpack.c.l.b16 %v294
    %v998 = vunpack.c.h.b16 %v294
    %v999 = vunpack.c.l.b16 %v295
    %v1000 = vunpack.c.h.b16 %v295
    %v1001 = vunpack.c.l.b16 %v296
    %v1002 = vunpack.c.h.b16 %v296
    %v1003 = vunpack.c.l.b16 %v297
    %v1004 = vunpack.c.h.b16 %v297
    %v1005 = vunpack.c.l.b16 %v298
    %v1006 = vunpack.c.h.b16 %v298
    %v1007 = vunpack.c.l.b16 %v299
    %v1008 = vunpack.c.h.b16 %v299
    %v1009 = vunpack.c.l.b16 %v300
    %v1010 = vunpack.c.h.b16 %v300
    %v1011 = vunpack.c.l.b16 %v301
    %v1012 = vunpack.c.h.b16 %v301
    %v1013 = vunpack.c.l.b16 %v302
    %v1014 = vunpack.c.h.b16 %v302
    %v1015 = vunpack.c.l.b16 %v303
    %v1016 = vunpack.c.h.b16 %v303
    %v1017 = vunpack.c.l.b16 %v304
    %v1018 = vunpack.c.h.b16 %v304
    %v1019 = vunpack.c.l.b16 %v305
    %v1020 = vunpack.c.h.b16 %v305
    %v1021 = vunpack.c.l.b16 %v306
    %v1022 = vunpack.c.h.b16 %v306
    %v1023 = vunpack.c.l.b16 %v307
    %v1024 = vunpack.c.h.b16 %v307
    %v1025 = vunpack.c.l.b16 %v308
    %v1026 = vunpack.c.h.b16 %v308
    %v1027 = vunpack.c.l.b16 %v309
    %v1028 = vunpack.c.h.b16 %v309
    %v1029 = vunpack.c.l.b16 %v310
    %v1030 = vunpack.c.h.b16 %v310
    %v1031 = vunpack.c.l.b16 %v311
    %v1032 = vunpack.c.h.b16 %v311
    %v1033 = vunpack.c.l.b16 %v312
    %v1034 = vunpack.c.h.b16 %v312
    %v1035 = vunpack.c.l.b16 %v313
    %v1036 = vunpack.c.h.b16 %v313
    %v1037 = vunpack.c.l.b16 %v314
    %v1038 = vunpack.c.h.b16 %v314
    %v1039 = vunpack.c.l.b16 %v315
    %v1040 = vunpack.c.h.b16 %v315
    %v1041 = vunpack.c.l.b16 %v316
    %v1042 = vunpack.c.h.b16 %v316
    %v1043 = vunpack.c.l.b16 %v317
    %v1044 = vunpack.c.h.b16 %v317
    %v1045 = vunpack.c.l.b16 %v318
    %v1046 = vunpack.c.h.b16 %v318
    %v1047 = vunpack.c.l.b16 %v319
    %v1048 = vunpack.c.h.b16 %v319
    %v1049 = vunpack.c.l.b16 %v320
    %v1050 = vunpack.c.h.b16 %v320
    %v1051 = vunpack.c.l.b16 %v321
    %v1052 = vunpack.c.h.b16 %v321
    %v1053 = vunpack.c.l.b16 %v322
    %v1054 = vunpack.c.h.b16 %v322
    %v1055 = vunpack.c.l.b16 %v323
    %v1056 = vunpack.c.h.b16 %v323
    %v1057 = vunpack.c.l.b16 %v324
    %v1058 = vunpack.c.h.b16 %v324
    %v1059 = vunpack.c.l.b16 %v325
    %v1060 = vunpack.c.h.b16 %v325
    %v1061 = vunpack.c.l.b16 %v326
    %v1062 = vunpack.c.h.b16 %v326
    %v1063 = vunpack.c.l.b16 %v327
    %v1064 = vunpack.c.h.b16 %v327
    %v1065 = vunpack.c.l.b16 %v328
    %v1066 = vunpack.c.h.b16 %v328
    %v1067 = vunpack.c.l.b16 %v329
    %v1068 = vunpack.c.h.b16 %v329
    %v1069 = vunpack.c.l.b16 %v330
    %v1070 = vunpack.c.h.b16 %v330
    %v1071 = vunpack.c.l.b16 %v331
    %v1072 = vunpack.c.h.b16 %v331
    %v1073 = vunpack.c.l.b16 %v332
    %v1074 = vunpack.c.h.b16 %v332
    %v1075 = vunpack.c.l.b16 %v333
    %v1076 = vunpack.c.h.b16 %v333
    %v1077 = vunpack.c.l.b16 %v334
    %v1078 = vunpack.c.h.b16 %v334
    %v1079 = vunpack.c.l.b16 %v335
    %v1080 = vunpack.c.h.b16 %v335
    %v1081 = vunpack.c.l.b16 %v336
    %v1082 = vunpack.c.h.b16 %v336
    %v1083 = vunpack.c.l.b16 %v337
    %v1084 = vunpack.c.h.b16 %v337
    %v1085 = vunpack.c.l.b16 %v338
    %v1086 = vunpack.c.h.b16 %v338
    %v1087 = vunpack.c.l.b16 %v339
    %v1088 = vunpack.c.h.b16 %v339
    %v1089 = vunpack.c.l.b16 %v340
    %v1090 = vunpack.c.h.b16 %v340
    %v1091 = vunpack.c.l.b16 %v341
    %v1092 = vunpack.c.h.b16 %v341
    %v1093 = vunpack.c.l.b16 %v342
    %v1094 = vunpack.c.h.b16 %v342
    %v1095 = vunpack.c.l.b16 %v343
    %v1096 = vunpack.c.h.b16 %v343
    %v1097 = vunpack.c.l.b16 %v344
    %v1098 = vunpack.c.h.b16 %v344
    %v1099 = vunpack.c.l.b16 %v345
    %v1100 = vunpack.c.h.b16 %v345
    %v1101 = vunpack.c.l.b16 %v346
    %v1102 = vunpack.c.h.b16 %v346
    %v1103 = vunpack.c.l.b16 %v347
    %v1104 = vunpack.c.h.b16 %v347
    %v1105 = vunpack.c.l.b16 %v348
    %v1106 = vunpack.c.h.b16 %v348
    %v1107 = vunpack.c.l.b16 %v349
    %v1108 = vunpack.c.h.b16 %v349
    %v1109 = vunpack.c.l.b16 %v350
    %v1110 = vunpack.c.h.b16 %v350
    %v1111 = vunpack.c.l.b16 %v351
    %v1112 = vunpack.c.h.b16 %v351
    %v1113 = vunpack.c.l.b16 %v352
    %v1114 = vunpack.c.h.b16 %v352
    %v1115 = vunpack.c.l.b16 %v353
    %v1116 = vunpack.c.h.b16 %v353
    %v1117 = vunpack.c.l.b16 %v354
    %v1118 = vunpack.c.h.b16 %v354
    %v1119 = vunpack.c.l.b16 %v355
    %v1120 = vunpack.c.h.b16 %v355
    %v1121 = vunpack.c.l.b16 %v356
    %v1122 = vunpack.c.h.b16 %v356
    %v1123 = vunpack.c.l.b16 %v357
    %v1124 = vunpack.c.h.b16 %v357
    %v1125 = vunpack.c.l.b16 %v358
    %v1126 = vunpack.c.h.b16 %v358
    %v1127 = vunpack.c.l.b16 %v359
    %v1128 = vunpack.c.h.b16 %v359
    %v1129 = vunpack.c.l.b16 %v360
    %v1130 = vunpack.c.h.b16 %v360
    %v1131 = vunpack.c.l.b16 %v361
    %v1132 = vunpack.c.h.b16 %v361
    %v1133 = vunpack.c.l.b16 %v362
    %v1134 = vunpack.c.h.b16 %v362
    %v1135 = vunpack.c.l.b16 %v363
    %v1136 = vunpack.c.h.b16 %v363
    %v1137 = vunpack.c.l.b16 %v364
    %v1138 = vunpack.c.h.b16 %v364
    %v1139 = vunpack.c.l.b16 %v365
    %v1140 = vunpack.c.h.b16 %v365
    %v1141 = vunpack.c.l.b16 %v366
    %v1142 = vunpack.c.h.b16 %v366
    %v1143 = vunpack.c.l.b16 %v367
    %v1144 = vunpack.c.h.b16 %v367
    %v1145 = vunpack.c.l.b16 %v368
    %v1146 = vunpack.c.h.b16 %v368
    %v1147 = vunpack.c.l.b16 %v369
    %v1148 = vunpack.c.h.b16 %v369
    %v1149 = vunpack.c.l.b16 %v370
    %v1150 = vunpack.c.h.b16 %v370
    %v1151 = vunpack.c.l.b16 %v371
    %v1152 = vunpack.c.h.b16 %v371
    %v1153 = vunpack.c.l.b16 %v372
    %v1154 = vunpack.c.h.b16 %v372
    %v1155 = vunpack.c.l.b16 %v373
    %v1156 = vunpack.c.h.b16 %v373
    %v1157 = vunpack.c.l.b16 %v374
    %v1158 = vunpack.c.h.b16 %v374
    %v1159 = vunpack.c.l.b16 %v375
    %v1160 = vunpack.c.h.b16 %v375
    %v1161 = vunpack.c.l.b16 %v376
    %v1162 = vunpack.c.h.b16 %v376
    %v1163 = vunpack.c.l.b16 %v377
    %v1164 = vunpack.c.h.b16 %v377
    %v1165 = vunpack.c.l.b16 %v378
    %v1166 = vunpack.c.h.b16 %v378
    %v1167 = vunpack.c.l.b16 %v379
    %v1168 = vunpack.c.h.b16 %v379
    %v1169 = vunpack.c.l.b16 %v380
    %v1170 = vunpack.c.h.b16 %v380
    %v1171 = vunpack.c.l.b16 %v381
    %v1172 = vunpack.c.h.b16 %v381
    %v1173 = vunpack.c.l.b16 %v382
    %v1174 = vunpack.c.h.b16 %v382
    %v1175 = vunpack.c.l.b16 %v383
    %v1176 = vunpack.c.h.b16 %v383
    %v1177 = vunpack.c.l.b16 %v384
    %v1178 = vunpack.c.h.b16 %v384
    %v1179 = vunpack.c.l.b16 %v385
    %v1180 = vunpack.c.h.b16 %v385
    %v1181 = vunpack.c.l.b16 %v386
    %v1182 = vunpack.c.h.b16 %v386
    %v1183 = vunpack.c.l.b16 %v387
    %v1184 = vunpack.c.h.b16 %v387
    %v1185 = vunpack.c.l.b16 %v388
    %v1186 = vunpack.c.h.b16 %v388
    %v1187 = vunpack.c.l.b16 %v389
    %v1188 = vunpack.c.h.b16 %v389
    %v1189 = vunpack.c.l.b16 %v390
    %v1190 = vunpack.c.h.b16 %v390
    %v1191 = vunpack.c.l.b16 %v391
    %v1192 = vunpack.c.h.b16 %v391
    %v1193 = vunpack.c.l.b16 %v392
    %v1194 = vunpack.c.h.b16 %v392
    %v1195 = vunpack.c.l.b16 %v393
    %v1196 = vunpack.c.h.b16 %v393
    %v1197 = vunpack.c.l.b16 %v394
    %v1198 = vunpack.c.h.b16 %v394
    %v1199 = vunpack.c.l.b16 %v395
    %v1200 = vunpack.c.h.b16 %v395
    %v1201 = vunpack.c.l.b16 %v396
    %v1202 = vunpack.c.h.b16 %v396
    %v1203 = vunpack.c.l.b16 %v397
    %v1204 = vunpack.c.h.b16 %v397
    %v1205 = vunpack.c.l.b16 %v398
    %v1206 = vunpack.c.h.b16 %v398
    %v1207 = vunpack.c.l.b16 %v399
    %v1208 = vunpack.c.h.b16 %v399
    %v1209 = vunpack.c.l.b16 %v400
    %v1210 = vunpack.c.h.b16 %v400
    %v1211 = vunpack.c.l.b16 %v401
    %v1212 = vunpack.c.h.b16 %v401
    %v1213 = vunpack.c.l.b16 %v402
    %v1214 = vunpack.c.h.b16 %v402
    %v1215 = vunpack.c.l.b16 %v403
    %v1216 = vunpack.c.h.b16 %v403
    %v1217 = vunpack.c.l.b16 %v404
    %v1218 = vunpack.c.h.b16 %v404
    %v1219 = vunpack.c.l.b16 %v405
    %v1220 = vunpack.c.h.b16 %v405
    %v1221 = vunpack.c.l.b16 %v406
    %v1222 = vunpack.c.h.b16 %v406
    %v1223 = vunpack.c.l.b16 %v407
    %v1224 = vunpack.c.h.b16 %v407
    %v1225 = vunpack.c.l.b16 %v408
    %v1226 = vunpack.c.h.b16 %v408
    %v1227 = vunpack.c.l.b16 %v409
    %v1228 = vunpack.c.h.b16 %v409
    %v1229 = vunpack.c.l.b16 %v410
    %v1230 = vunpack.c.h.b16 %v410
    %v1231 = vunpack.c.l.b16 %v411
    %v1232 = vunpack.c.h.b16 %v411
    %v1233 = vunpack.c.l.b16 %v412
    %v1234 = vunpack.c.h.b16 %v412
    %v1235 = vunpack.c.l.b16 %v413
    %v1236 = vunpack.c.h.b16 %v413
    %v1237 = vunpack.c.l.b16 %v414
    %v1238 = vunpack.c.h.b16 %v414
    %v1239 = vunpack.c.l.b16 %v415
    %v1240 = vunpack.c.h.b16 %v415
    %v1241 = vunpack.c.l.b16 %v416
    %v1242 = vunpack.c.h.b16 %v416
    %v1243 = vunpack.c.l.b16 %v417
    %v1244 = vunpack.c.h.b16 %v417
    %v1245 = vunpack.c.l.b16 %v418
    %v1246 = vunpack.c.h.b16 %v418
    %v1247 = vunpack.c.l.b16 %v419
    %v1248 = vunpack.c.h.b16 %v419
    %v1249 = vunpack.c.l.b16 %v420
    %v1250 = vunpack.c.h.b16 %v420
    %v1251 = vunpack.c.l.b16 %v421
    %v1252 = vunpack.c.h.b16 %v421
    %v1253 = vunpack.c.l.b16 %v422
    %v1254 = vunpack.c.h.b16 %v422
    %v1255 = vunpack.c.l.b16 %v423
    %v1256 = vunpack.c.h.b16 %v423
    %v1257 = vunpack.c.l.b16 %v424
    %v1258 = vunpack.c.h.b16 %v424
    %v1259 = vunpack.c.l.b16 %v425
    %v1260 = vunpack.c.h.b16 %v425
    %v1261 = vunpack.c.l.b16 %v426
    %v1262 = vunpack.c.h.b16 %v426
    %v1263 = vunpack.c.l.b16 %v427
    %v1264 = vunpack.c.h.b16 %v427
    %v1265 = vunpack.c.l.b16 %v428
    %v1266 = vunpack.c.h.b16 %v428
    %v1267 = vunpack.c.l.b16 %v429
    %v1268 = vunpack.c.h.b16 %v429
    %v1269 = vunpack.c.l.b16 %v430
    %v1270 = vunpack.c.h.b16 %v430
    %v1271 = vunpack.c.l.b16 %v431
    %v1272 = vunpack.c.h.b16 %v431
    %v1273 = vunpack.c.l.b16 %v432
    %v1274 = vunpack.c.h.b16 %v432
    %v1275 = vunpack.c.l.b16 %v433
    %v1276 = vunpack.c.h.b16 %v433
    %v1277 = vunpack.c.l.b16 %v434
    %v1278 = vunpack.c.h.b16 %v434
    %v1279 = vunpack.c.l.b16 %v435
    %v1280 = vunpack.c.h.b16 %v435
    %v1281 = vunpack.c.l.b16 %v436
    %v1282 = vunpack.c.h.b16 %v436
    %v1283 = vunpack.c.l.b16 %v437
    %v1284 = vunpack.c.h.b16 %v437
    %v1285 = vunpack.c.l.b16 %v438
    %v1286 = vunpack.c.h.b16 %v438
    %v1287 = vunpack.c.l.b16 %v439
    %v1288 = vunpack.c.h.b16 %v439
    %v1289 = vunpack.c.l.b16 %v440
    %v1290 = vunpack.c.h.b16 %v440
    %v1291 = vunpack.c.l.b16 %v441
    %v1292 = vunpack.c.h.b16 %v441
    %v1293 = vunpack.c.l.b16 %v442
    %v1294 = vunpack.c.h.b16 %v442
    %v1295 = vunpack.c.l.b16 %v443
    %v1296 = vunpack.c.h.b16 %v443
    %v1297 = vunpack.c.l.b16 %v444
    %v1298 = vunpack.c.h.b16 %v444
    %v1299 = vunpack.c.l.b16 %v445
    %v1300 = vunpack.c.h.b16 %v445
    %v1301 = vunpack.c.l.b16 %v446
    %v1302 = vunpack.c.h.b16 %v446
    %v1303 = vunpack.c.l.b16 %v447
    %v1304 = vunpack.c.h.b16 %v447
    %v1305 = vunpack.c.l.b16 %v448
    %v1306 = vunpack.c.h.b16 %v448
    %v1307 = vunpack.c.l.b16 %v449
    %v1308 = vunpack.c.h.b16 %v449
    %v1309 = vunpack.c.l.b16 %v450
    %v1310 = vunpack.c.h.b16 %v450
    %v1311 = vunpack.c.l.b16 %v451
    %v1312 = vunpack.c.h.b16 %v451
    %v1313 = vunpack.c.l.b16 %v452
    %v1314 = vunpack.c.h.b16 %v452
    %v1315 = vunpack.c.l.b16 %v453
    %v1316 = vunpack.c.h.b16 %v453
    %v1317 = vunpack.c.l.b16 %v454
    %v1318 = vunpack.c.h.b16 %v454
    %v1319 = vunpack.c.l.b16 %v455
    %v1320 = vunpack.c.h.b16 %v455
    %v1321 = vunpack.c.l.b16 %v456
    %v1322 = vunpack.c.h.b16 %v456
    %v1323 = vunpack.c.l.b16 %v457
    %v1324 = vunpack.c.h.b16 %v457
    %v1325 = vunpack.c.l.b16 %v458
    %v1326 = vunpack.c.h.b16 %v458
    %v1327 = vunpack.c.l.b16 %v459
    %v1328 = vunpack.c.h.b16 %v459
    %v1329 = vunpack.c.l.b16 %v460
    %v1330 = vunpack.c.h.b16 %v460
    %v1331 = vunpack.c.l.b16 %v461
    %v1332 = vunpack.c.h.b16 %v461
    %v1333 = vunpack.c.l.b16 %v462
    %v1334 = vunpack.c.h.b16 %v462
    %v1335 = vunpack.c.l.b16 %v463
    %v1336 = vunpack.c.h.b16 %v463
    %v1337 = vunpack.c.l.b16 %v464
    %v1338 = vunpack.c.h.b16 %v464
    %v1339 = vunpack.c.l.b16 %v465
    %v1340 = vunpack.c.h.b16 %v465
    %v1341 = vunpack.c.l.b16 %v466
    %v1342 = vunpack.c.h.b16 %v466
    %v1343 = vunpack.c.l.b16 %v467
    %v1344 = vunpack.c.h.b16 %v467
    %v1345 = vunpack.c.l.b16 %v468
    %v1346 = vunpack.c.h.b16 %v468
    %v1347 = vunpack.c.l.b16 %v469
    %v1348 = vunpack.c.h.b16 %v469
    %v1349 = vunpack.c.l.b16 %v470
    %v1350 = vunpack.c.h.b16 %v470
    %v1351 = vunpack.c.l.b16 %v471
    %v1352 = vunpack.c.h.b16 %v471
    %v1353 = vunpack.c.l.b16 %v472
    %v1354 = vunpack.c.h.b16 %v472
    %v1355 = vunpack.c.l.b16 %v473
    %v1356 = vunpack.c.h.b16 %v473
    %v1357 = vunpack.c.l.b16 %v474
    %v1358 = vunpack.c.h.b16 %v474
    %v1359 = vunpack.c.l.b16 %v475
    %v1360 = vunpack.c.h.b16 %v475
    %v1361 = vunpack.c.l.b16 %v476
    %v1362 = vunpack.c.h.b16 %v476
    %v1363 = vunpack.c.l.b16 %v477
    %v1364 = vunpack.c.h.b16 %v477
    %v1365 = vunpack.c.l.b16 %v478
    %v1366 = vunpack.c.h.b16 %v478
    %v1367 = vunpack.c.l.b16 %v479
    %v1368 = vunpack.c.h.b16 %v479
    %v1369 = vunpack.c.l.b16 %v480
    %v1370 = vunpack.c.h.b16 %v480
    %v1371 = vunpack.c.l.b16 %v481
    %v1372 = vunpack.c.h.b16 %v481
    %v1373 = vunpack.c.l.b16 %v482
    %v1374 = vunpack.c.h.b16 %v482
    %v1375 = vunpack.c.l.b16 %v483
    %v1376 = vunpack.c.h.b16 %v483
    %v1377 = vunpack.c.l.b16 %v484
    %v1378 = vunpack.c.h.b16 %v484
    %v1379 = vunpack.c.l.b16 %v485
    %v1380 = vunpack.c.h.b16 %v485
    %v1381 = vunpack.c.l.b16 %v486
    %v1382 = vunpack.c.h.b16 %v486
    %v1383 = vpack.c.b16 %v813, %v807
    %v1384 = vpack.c.b16 %v814, %v808
    %v1385 = vpack.c.b16 %v815, %v809
    %v1386 = vpack.c.b16 %v816, %v810
    %v1387 = vpack.c.b16 %v817, %v811
    %v1388 = vpack.c.b16 %v818, %v812
    %v1389 = vpack.c.b16 %v825, %v819
    %v1390 = vpack.c.b16 %v826, %v820
    %v1391 = vpack.c.b16 %v827, %v821
    %v1392 = vpack.c.b16 %v828, %v822
    %v1393 = vpack.c.b16 %v829, %v823
    %v1394 = vpack.c.b16 %v830, %v824
    %v1395 = vpack.c.b16 %v837, %v831
    %v1396 = vpack.c.b16 %v838, %v832
    %v1397 = vpack.c.b16 %v839, %v833
    %v1398 = vpack.c.b16 %v840, %v834
    %v1399 = vpack.c.b16 %v841, %v835
    %v1400 = vpack.c.b16 %v842, %v836
    %v1401 = vpack.c.b16 %v849, %v843
    %v1402 = vpack.c.b16 %v850, %v844
    %v1403 = vpack.c.b16 %v851, %v845
    %v1404 = vpack.c.b16 %v852, %v846
    %v1405 = vpack.c.b16 %v853, %v847
    %v1406 = vpack.c.b16 %v854, %v848
    %v1407 = vpack.c.b16 %v861, %v855
    %v1408 = vpack.c.b16 %v862, %v856
    %v1409 = vpack.c.b16 %v863, %v857
    %v1410 = vpack.c.b16 %v864, %v858
    %v1411 = vpack.c.b16 %v865, %v859
    %v1412 = vpack.c.b16 %v866, %v860
    %v1413 = vpack.c.b16 %v873, %v867
    %v1414 = vpack.c.b16 %v874, %v868
    %v1415 = vpack.c.b16 %v875, %v869
    %v1416 = vpack.c.b16 %v876, %v870
    %v1417 = vpack.c.b16 %v877, %v871
    %v1418 = vpack.c.b16 %v878, %v872
    %v1419 = vpack.c.b16 %v885, %v879
    %v1420 = vpack.c.b16 %v886, %v880
    %v1421 = vpack.c.b16 %v887, %v881
    %v1422 = vpack.c.b16 %v888, %v882
    %v1423 = vpack.c.b16 %v889, %v883
    %v1424 = vpack.c.b16 %v890, %v884
    %v1425 = vpack.c.b16 %v897, %v891
    %v1426 = vpack.c.b16 %v898, %v892
    %v1427 = vpack.c.b16 %v899, %v893
    %v1428 = vpack.c.b16 %v900, %v894
    %v1429 = vpack.c.b16 %v901, %v895
    %v1430 = vpack.c.b16 %v902, %v896
    %v1431 = vpack.c.b16 %v909, %v903
    %v1432 = vpack.c.b16 %v910, %v904
    %v1433 = vpack.c.b16 %v911, %v905
    %v1434 = vpack.c.b16 %v912, %v906
    %v1435 = vpack.c.b16 %v913, %v907
    %v1436 = vpack.c.b16 %v914, %v908
    %v1437 = vpack.c.b16 %v921, %v915
    %v1438 = vpack.c.b16 %v922, %v916
    %v1439 = vpack.c.b16 %v923, %v917
    %v1440 = vpack.c.b16 %v924, %v918
    %v1441 = vpack.c.b16 %v925, %v919
    %v1442 = vpack.c.b16 %v926, %v920
    %v1443 = vpack.c.b16 %v933, %v927
    %v1444 = vpack.c.b16 %v934, %v928
    %v1445 = vpack.c.b16 %v935, %v929
    %v1446 = vpack.c.b16 %v936, %v930
    %v1447 = vpack.c.b16 %v937, %v931
    %v1448 = vpack.c.b16 %v938, %v932
    %v1449 = vpack.c.b16 %v945, %v939
    %v1450 = vpack.c.b16 %v946, %v940
    %v1451 = vpack.c.b16 %v947, %v941
    %v1452 = vpack.c.b16 %v948, %v942
    %v1453 = vpack.c.b16 %v949, %v943
    %v1454 = vpack.c.b16 %v950, %v944
    %v1455 = vpack.c.b16 %v957, %v951
    %v1456 = vpack.c.b16 %v958, %v952
    %v1457 = vpack.c.b16 %v959, %v953
    %v1458 = vpack.c.b16 %v960, %v954
    %v1459 = vpack.c.b16 %v961, %v955
    %v1460 = vpack.c.b16 %v962, %v956
    %v1461 = vpack.c.b16 %v969, %v963
    %v1462 = vpack.c.b16 %v970, %v964
    %v1463 = vpack.c.b16 %v971, %v965
    %v1464 = vpack.c.b16 %v972, %v966
    %v1465 = vpack.c.b16 %v973, %v967
    %v1466 = vpack.c.b16 %v974, %v968
    %v1467 = vpack.c.b16 %v981, %v975
    %v1468 = vpack.c.b16 %v982, %v976
    %v1469 = vpack.c.b16 %v983, %v977
    %v1470 = vpack.c.b16 %v984, %v978
    %v1471 = vpack.c.b16 %v985, %v979
    %v1472 = vpack.c.b16 %v986, %v980
    %v1473 = vpack.c.b16 %v993, %v987
    %v1474 = vpack.c.b16 %v994, %v988
    %v1475 = vpack.c.b16 %v995, %v989
    %v1476 = vpack.c.b16 %v996, %v990
    %v1477 = vpack.c.b16 %v997, %v991
    %v1478 = vpack.c.b16 %v998, %v992
    %v1479 = vpack.c.b16 %v1005, %v999
    %v1480 = vpack.c.b16 %v1006, %v1000
    %v1481 = vpack.c.b16 %v1007, %v1001
    %v1482 = vpack.c.b16 %v1008, %v1002
    %v1483 = vpack.c.b16 %v1009, %v1003
    %v1484 = vpack.c.b16 %v1010, %v1004
    %v1485 = vpack.c.b16 %v1017, %v1011
    %v1486 = vpack.c.b16 %v1018, %v1012
    %v1487 = vpack.c.b16 %v1019, %v1013
    %v1488 = vpack.c.b16 %v1020, %v1014
    %v1489 = vpack.c.b16 %v1021, %v1015
    %v1490 = vpack.c.b16 %v1022, %v1016
    %v1491 = vpack.c.b16 %v1029, %v1023
    %v1492 = vpack.c.b16 %v1030, %v1024
    %v1493 = vpack.c.b16 %v1031, %v1025
    %v1494 = vpack.c.b16 %v1032, %v1026
    %v1495 = vpack.c.b16 %v1033, %v1027
    %v1496 = vpack.c.b16 %v1034, %v1028
    %v1497 = vpack.c.b16 %v1041, %v1035
    %v1498 = vpack.c.b16 %v1042, %v1036
    %v1499 = vpack.c.b16 %v1043, %v1037
    %v1500 = vpack.c.b16 %v1044, %v1038
    %v1501 = vpack.c.b16 %v1045, %v1039
    %v1502 = vpack.c.b16 %v1046, %v1040
    %v1503 = vpack.c.b16 %v1053, %v1047
    %v1504 = vpack.c.b16 %v1054, %v1048
    %v1505 = vpack.c.b16 %v1055, %v1049
    %v1506 = vpack.c.b16 %v1056, %v1050
    %v1507 = vpack.c.b16 %v1057, %v1051
    %v1508 = vpack.c.b16 %v1058, %v1052
    %v1509 = vpack.c.b16 %v1065, %v1059
    %v1510 = vpack.c.b16 %v1066, %v1060
    %v1511 = vpack.c.b16 %v1067, %v1061
    %v1512 = vpack.c.b16 %v1068, %v1062
    %v1513 = vpack.c.b16 %v1069, %v1063
    %v1514 = vpack.c.b16 %v1070, %v1064
    %v1515 = vpack.c.b16 %v1077, %v1071
    %v1516 = vpack.c.b16 %v1078, %v1072
    %v1517 = vpack.c.b16 %v1079, %v1073
    %v1518 = vpack.c.b16 %v1080, %v1074
    %v1519 = vpack.c.b16 %v1081, %v1075
    %v1520 = vpack.c.b16 %v1082, %v1076
    %v1521 = vpack.c.b16 %v1089, %v1083
    %v1522 = vpack.c.b16 %v1090, %v1084
    %v1523 = vpack.c.b16 %v1091, %v1085
    %v1524 = vpack.c.b16 %v1092, %v1086
    %v1525 = vpack.c.b16 %v1093, %v1087
    %v1526 = vpack.c.b16 %v1094, %v1088
    %v1527 = vpack.c.b16 %v1101, %v1095
    %v1528 = vpack.c.b16 %v1102, %v1096
    %v1529 = vpack.c.b16 %v1103, %v1097
    %v1530 = vpack.c.b16 %v1104, %v1098
    %v1531 = vpack.c.b16 %v1105, %v1099
    %v1532 = vpack.c.b16 %v1106, %v1100
    %v1533 = vpack.c.b16 %v1113, %v1107
    %v1534 = vpack.c.b16 %v1114, %v1108
    %v1535 = vpack.c.b16 %v1115, %v1109
    %v1536 = vpack.c.b16 %v1116, %v1110
    %v1537 = vpack.c.b16 %v1117, %v1111
    %v1538 = vpack.c.b16 %v1118, %v1112
    %v1539 = vpack.c.b16 %v1125, %v1119
    %v1540 = vpack.c.b16 %v1126, %v1120
    %v1541 = vpack.c.b16 %v1127, %v1121
    %v1542 = vpack.c.b16 %v1128, %v1122
    %v1543 = vpack.c.b16 %v1129, %v1123
    %v1544 = vpack.c.b16 %v1130, %v1124
    %v1545 = vpack.c.b16 %v1137, %v1131
    %v1546 = vpack.c.b16 %v1138, %v1132
    %v1547 = vpack.c.b16 %v1139, %v1133
    %v1548 = vpack.c.b16 %v1140, %v1134
    %v1549 = vpack.c.b16 %v1141, %v1135
    %v1550 = vpack.c.b16 %v1142, %v1136
    %v1551 = vpack.c.b16 %v1149, %v1143
    %v1552 = vpack.c.b16 %v1150, %v1144
    %v1553 = vpack.c.b16 %v1151, %v1145
    %v1554 = vpack.c.b16 %v1152, %v1146
    %v1555 = vpack.c.b16 %v1153, %v1147
    %v1556 = vpack.c.b16 %v1154, %v1148
    %v1557 = vpack.c.b16 %v1161, %v1155
    %v1558 = vpack.c.b16 %v1162, %v1156
    %v1559 = vpack.c.b16 %v1163, %v1157
    %v1560 = vpack.c.b16 %v1164, %v1158
    %v1561 = vpack.c.b16 %v1165, %v1159
    %v1562 = vpack.c.b16 %v1166, %v1160
    %v1563 = vpack.c.b16 %v1173, %v1167
    %v1564 = vpack.c.b16 %v1174, %v1168
    %v1565 = vpack.c.b16 %v1175, %v1169
    %v1566 = vpack.c.b16 %v1176, %v1170
    %v1567 = vpack.c.b16 %v1177, %v1171
    %v1568 = vpack.c.b16 %v1178, %v1172
    %v1569 = vpack.c.b16 %v1185, %v1179
    %v1570 = vpack.c.b16 %v1186, %v1180
    %v1571 = vpack.c.b16 %v1187, %v1181
    %v1572 = vpack.c.b16 %v1188, %v1182
    %v1573 = vpack.c.b16 %v1189, %v1183
    %v1574 = vpack.c.b16 %v1190, %v1184
    %v1575 = vpack.c.b16 %v1197, %v1191
    %v1576 = vpack.c.b16 %v1198, %v1192
    %v1577 = vpack.c.b16 %v1199, %v1193
    %v1578 = vpack.c.b16 %v1200, %v1194
    %v1579 = vpack.c.b16 %v1201, %v1195
    %v1580 = vpack.c.b16 %v1202, %v1196
    %v1581 = vpack.c.b16 %v1209, %v1203
    %v1582 = vpack.c.b16 %v1210, %v1204
    %v1583 = vpack.c.b16 %v1211, %v1205
    %v1584 = vpack.c.b16 %v1212, %v1206
    %v1585 = vpack.c.b16 %v1213, %v1207
    %v1586 = vpack.c.b16 %v1214, %v1208
    %v1587 = vpack.c.b16 %v1221, %v1215
    %v1588 = vpack.c.b16 %v1222, %v1216
    %v1589 = vpack.c.b16 %v1223, %v1217
    %v1590 = vpack.c.b16 %v1224, %v1218
    %v1591 = vpack.c.b16 %v1225, %v1219
    %v1592 = vpack.c.b16 %v1226, %v1220
    %v1593 = vpack.c.b16 %v1233, %v1227
    %v1594 = vpack.c.b16 %v1234, %v1228
    %v1595 = vpack.c.b16 %v1235, %v1229
    %v1596 = vpack.c.b16 %v1236, %v1230
    %v1597 = vpack.c.b16 %v1237, %v1231
    %v1598 = vpack.c.b16 %v1238, %v1232
    %v1599 = vpack.c.b16 %v1245, %v1239
    %v1600 = vpack.c.b16 %v1246, %v1240
    %v1601 = vpack.c.b16 %v1247, %v1241
    %v1602 = vpack.c.b16 %v1248, %v1242
    %v1603 = vpack.c.b16 %v1249, %v1243
    %v1604 = vpack.c.b16 %v1250, %v1244
    %v1605 = vpack.c.b16 %v1257, %v1251
    %v1606 = vpack.c.b16 %v1258, %v1252
    %v1607 = vpack.c.b16 %v1259, %v1253
    %v1608 = vpack.c.b16 %v1260, %v1254
    %v1609 = vpack.c.b16 %v1261, %v1255
    %v1610 = vpack.c.b16 %v1262, %v1256
    %v1611 = vpack.c.b16 %v1269, %v1263
    %v1612 = vpack.c.b16 %v1270, %v1264
    %v1613 = vpack.c.b16 %v1271, %v1265
    %v1614 = vpack.c.b16 %v1272, %v1266
    %v1615 = vpack.c.b16 %v1273, %v1267
    %v1616 = vpack.c.b16 %v1274, %v1268
    %v1617 = vpack.c.b16 %v1281, %v1275
    %v1618 = vpack.c.b16 %v1282, %v1276
    %v1619 = vpack.c.b16 %v1283, %v1277
    %v1620 = vpack.c.b16 %v1284, %v1278
    %v1621 = vpack.c.b16 %v1285, %v1279
    %v1622 = vpack.c.b16 %v1286, %v1280
    %v1623 = vpack.c.b16 %v1293, %v1287
    %v1624 = vpack.c.b16 %v1294, %v1288
    %v1625 = vpack.c.b16 %v1295, %v1289
    %v1626 = vpack.c.b16 %v1296, %v1290
    %v1627 = vpack.c.b16 %v1297, %v1291
    %v1628 = vpack.c.b16 %v1298, %v1292
    %v1629 = vpack.c.b16 %v1305, %v1299
    %v1630 = vpack.c.b16 %v1306, %v1300
    %v1631 = vpack.c.b16 %v1307, %v1301
    %v1632 = vpack.c.b16 %v1308, %v1302
    %v1633 = vpack.c.b16 %v1309, %v1303
    %v1634 = vpack.c.b16 %v1310, %v1304
    %v1635 = vpack.c.b16 %v1317, %v1311
    %v1636 = vpack.c.b16 %v1318, %v1312
    %v1637 = vpack.c.b16 %v1319, %v1313
    %v1638 = vpack.c.b16 %v1320, %v1314
    %v1639 = vpack.c.b16 %v1321, %v1315
    %v1640 = vpack.c.b16 %v1322, %v1316
    %v1641 = vpack.c.b16 %v1329, %v1323
    %v1642 = vpack.c.b16 %v1330, %v1324
    %v1643 = vpack.c.b16 %v1331, %v1325
    %v1644 = vpack.c.b16 %v1332, %v1326
    %v1645 = vpack.c.b16 %v1333, %v1327
    %v1646 = vpack.c.b16 %v1334, %v1328
    %v1647 = vpack.c.b16 %v1341, %v1335
    %v1648 = vpack.c.b16 %v1342, %v1336
    %v1649 = vpack.c.b16 %v1343, %v1337
    %v1650 = vpack.c.b16 %v1344, %v1338
    %v1651 = vpack.c.b16 %v1345, %v1339
    %v1652 = vpack.c.b16 %v1346, %v1340
    %v1653 = vpack.c.b16 %v1353, %v1347
    %v1654 = vpack.c.b16 %v1354, %v1348
    %v1655 = vpack.c.b16 %v1355, %v1349
    %v1656 = vpack.c.b16 %v1356, %v1350
    %v1657 = vpack.c.b16 %v1357, %v1351
    %v1658 = vpack.c.b16 %v1358, %v1352
    %v1659 = vpack.c.b16 %v1365, %v1359
    %v1660 = vpack.c.b16 %v1366, %v1360
    %v1661 = vpack.c.b16 %v1367, %v1361
    %v1662 = vpack.c.b16 %v1368, %v1362
    %v1663 = vpack.c.b16 %v1369, %v1363
    %v1664 = vpack.c.b16 %v1370, %v1364
    %v1665 = vpack.c.b16 %v1377, %v1371
    %v1666 = vpack.c.b16 %v1378, %v1372
    %v1667 = vpack.c.b16 %v1379, %v1373
    %v1668 = vpack.c.b16 %v1380, %v1374
    %v1669 = vpack.c.b16 %v1381, %v1375
    %v1670 = vpack.c.b16 %v1382, %v1376
    %1959 = vmatprep.subr.bf16.mxu0 %v1426
    %1960 = vmatpush1.bf16.msra.mxu0 %v1425
    %1961 = vmatprep.subr.bf16.mxu0 %v1420
    %1962 = vmatpush1.bf16.msra.mxu0 %v1419
    %1963 = vmatprep.subr.bf16.mxu0 %v1414
    %1964 = vmatpush1.bf16.msra.mxu0 %v1413
    %1965 = vmatprep.subr.bf16.mxu0 %v1408
    %1966 = vmatpush1.bf16.msra.mxu0 %v1407
    %1967 = vmatprep.subr.bf16.mxu0 %v1402
    %1968 = vmatpush1.bf16.msra.mxu0 %v1401
    %1969 = vmatprep.subr.bf16.mxu0 %v1396
    %1970 = vmatpush1.bf16.msra.mxu0 %v1395
    %1971 = vmatprep.subr.bf16.mxu0 %v1390
    %1972 = vmatpush1.bf16.msra.mxu0 %v1389
    %1973 = vmatprep.subr.bf16.mxu0 %v1384
    %1974 = vmatpush1.bf16.msra.mxu0 %v1383
    %1975 = vmatprep.subr.bf16.mxu0 %v1474
    %1976 = vmatpush2.bf16.msra.mxu0 %v1473
    %1977 = vmatprep.subr.bf16.mxu0 %v1468
    %1978 = vmatpush2.bf16.msra.mxu0 %v1467
    %1979 = vmatprep.subr.bf16.mxu0 %v1462
    %1980 = vmatpush2.bf16.msra.mxu0 %v1461
    %1981 = vmatprep.subr.bf16.mxu0 %v1456
    %1982 = vmatpush2.bf16.msra.mxu0 %v1455
    %1983 = vmatprep.subr.bf16.mxu0 %v1450
    %1984 = vmatpush2.bf16.msra.mxu0 %v1449
    %1985 = vmatprep.subr.bf16.mxu0 %v1444
    %1986 = vmatpush2.bf16.msra.mxu0 %v1443
    %1987 = vmatprep.subr.bf16.mxu0 %v1438
    %1988 = vmatpush2.bf16.msra.mxu0 %v1437
    %1989 = vmatprep.subr.bf16.mxu0 %v1432
    %1990 = vmatpush2.bf16.msra.mxu0 %v1431
    %1991 = vmatprep.mubr.bf16.mxu0 %v194
    %1992 = vmatmul.mubr.bf16.gmra.mxu0 %v193
    %v1993 = vpop.f32.mrf.mxu0
    %v1994 = vadd.f32 %v492, %v1993
    %v1995 = vpop.f32.mrf.mxu0
    %v1996 = vadd.f32 %v496, %v1995
    %v1997 = vpop.f32.mrf.mxu0
    %v1998 = vpop.f32.mrf.mxu0
    %1999 = vdwg.mxu0
    %2000 = vmatprep.subr.bf16.mxu0 %v1522
    %2001 = vmatpush1.bf16.msra.mxu0 %v1521
    %2002 = vmatprep.subr.bf16.mxu0 %v1516
    %2003 = vmatpush1.bf16.msra.mxu0 %v1515
    %2004 = vmatprep.subr.bf16.mxu0 %v1510
    %2005 = vmatpush1.bf16.msra.mxu0 %v1509
    %2006 = vmatprep.subr.bf16.mxu0 %v1504
    %2007 = vmatpush1.bf16.msra.mxu0 %v1503
    %2008 = vmatprep.subr.bf16.mxu0 %v1498
    %2009 = vmatpush1.bf16.msra.mxu0 %v1497
    %2010 = vmatprep.subr.bf16.mxu0 %v1492
    %2011 = vmatpush1.bf16.msra.mxu0 %v1491
    %2012 = vmatprep.subr.bf16.mxu0 %v1486
    %2013 = vmatpush1.bf16.msra.mxu0 %v1485
    %2014 = vmatprep.subr.bf16.mxu0 %v1480
    %2015 = vmatpush1.bf16.msra.mxu0 %v1479
    %2016 = vmatprep.subr.bf16.mxu0 %v1570
    %2017 = vmatpush2.bf16.msra.mxu0 %v1569
    %2018 = vmatprep.subr.bf16.mxu0 %v1564
    %2019 = vmatpush2.bf16.msra.mxu0 %v1563
    %2020 = vmatprep.subr.bf16.mxu0 %v1558
    %2021 = vmatpush2.bf16.msra.mxu0 %v1557
    %2022 = vmatprep.subr.bf16.mxu0 %v1552
    %2023 = vmatpush2.bf16.msra.mxu0 %v1551
    %2024 = vmatprep.subr.bf16.mxu0 %v1546
    %2025 = vmatpush2.bf16.msra.mxu0 %v1545
    %2026 = vmatprep.subr.bf16.mxu0 %v1540
    %2027 = vmatpush2.bf16.msra.mxu0 %v1539
    %2028 = vmatprep.subr.bf16.mxu0 %v1534
    %2029 = vmatpush2.bf16.msra.mxu0 %v1533
    %2030 = vmatprep.subr.bf16.mxu0 %v1528
    %2031 = vmatpush2.bf16.msra.mxu0 %v1527
    %2032 = vmatprep.mubr.bf16.mxu0 %v196
    %2033 = vmatmul.mubr.bf16.gmra.mxu0 %v195
    %v2034 = vpop.f32.mrf.mxu0
    %v2035 = vadd.f32 %v1994, %v2034
    %v2036 = vpop.f32.mrf.mxu0
    %v2037 = vadd.f32 %v1996, %v2036
    %v2038 = vpop.f32.mrf.mxu0
    %v2039 = vpop.f32.mrf.mxu0
    %2040 = vdwg.mxu0
    %2041 = vmatprep.subr.bf16.mxu0 %v1618
    %2042 = vmatpush1.bf16.msra.mxu0 %v1617
    %2043 = vmatprep.subr.bf16.mxu0 %v1612
    %2044 = vmatpush1.bf16.msra.mxu0 %v1611
    %2045 = vmatprep.subr.bf16.mxu0 %v1606
    %2046 = vmatpush1.bf16.msra.mxu0 %v1605
    %2047 = vmatprep.subr.bf16.mxu0 %v1600
    %2048 = vmatpush1.bf16.msra.mxu0 %v1599
    %2049 = vmatprep.subr.bf16.mxu0 %v1594
    %2050 = vmatpush1.bf16.msra.mxu0 %v1593
    %2051 = vmatprep.subr.bf16.mxu0 %v1588
    %2052 = vmatpush1.bf16.msra.mxu0 %v1587
    %2053 = vmatprep.subr.bf16.mxu0 %v1582
    %2054 = vmatpush1.bf16.msra.mxu0 %v1581
    %2055 = vmatprep.subr.bf16.mxu0 %v1576
    %2056 = vmatpush1.bf16.msra.mxu0 %v1575
    %2057 = vmatprep.subr.bf16.mxu0 %v1666
    %2058 = vmatpush2.bf16.msra.mxu0 %v1665
    %2059 = vmatprep.subr.bf16.mxu0 %v1660
    %2060 = vmatpush2.bf16.msra.mxu0 %v1659
    %2061 = vmatprep.subr.bf16.mxu0 %v1654
    %2062 = vmatpush2.bf16.msra.mxu0 %v1653
    %2063 = vmatprep.subr.bf16.mxu0 %v1648
    %2064 = vmatpush2.bf16.msra.mxu0 %v1647
    %2065 = vmatprep.subr.bf16.mxu0 %v1642
    %2066 = vmatpush2.bf16.msra.mxu0 %v1641
    %2067 = vmatprep.subr.bf16.mxu0 %v1636
    %2068 = vmatpush2.bf16.msra.mxu0 %v1635
    %2069 = vmatprep.subr.bf16.mxu0 %v1630
    %2070 = vmatpush2.bf16.msra.mxu0 %v1629
    %2071 = vmatprep.subr.bf16.mxu0 %v1624
    %2072 = vmatpush2.bf16.msra.mxu0 %v1623
    %2073 = vmatprep.mubr.bf16.mxu0 %v198
    %2074 = vmatmul.mubr.bf16.gmra.mxu0 %v197
    %v2075 = vpop.f32.mrf.mxu0
    %v2076 = vadd.f32 %v2035, %v2075
    %v2077 = vpop.f32.mrf.mxu0
    %v2078 = vadd.f32 %v2037, %v2077
    %v2079 = vpop.f32.mrf.mxu0
    %v2080 = vpop.f32.mrf.mxu0
    %2081 = vdwg.mxu0
    %2082 = vmatprep.subr.bf16.mxu0 %v1428
    %2083 = vmatpush1.bf16.msra.mxu0 %v1427
    %2084 = vmatprep.subr.bf16.mxu0 %v1422
    %2085 = vmatpush1.bf16.msra.mxu0 %v1421
    %2086 = vmatprep.subr.bf16.mxu0 %v1416
    %2087 = vmatpush1.bf16.msra.mxu0 %v1415
    %2088 = vmatprep.subr.bf16.mxu0 %v1410
    %2089 = vmatpush1.bf16.msra.mxu0 %v1409
    %2090 = vmatprep.subr.bf16.mxu0 %v1404
    %2091 = vmatpush1.bf16.msra.mxu0 %v1403
    %2092 = vmatprep.subr.bf16.mxu0 %v1398
    %2093 = vmatpush1.bf16.msra.mxu0 %v1397
    %2094 = vmatprep.subr.bf16.mxu0 %v1392
    %2095 = vmatpush1.bf16.msra.mxu0 %v1391
    %2096 = vmatprep.subr.bf16.mxu0 %v1386
    %2097 = vmatpush1.bf16.msra.mxu0 %v1385
    %2098 = vmatprep.subr.bf16.mxu0 %v1476
    %2099 = vmatpush2.bf16.msra.mxu0 %v1475
    %2100 = vmatprep.subr.bf16.mxu0 %v1470
    %2101 = vmatpush2.bf16.msra.mxu0 %v1469
    %2102 = vmatprep.subr.bf16.mxu0 %v1464
    %2103 = vmatpush2.bf16.msra.mxu0 %v1463
    %2104 = vmatprep.subr.bf16.mxu0 %v1458
    %2105 = vmatpush2.bf16.msra.mxu0 %v1457
    %2106 = vmatprep.subr.bf16.mxu0 %v1452
    %2107 = vmatpush2.bf16.msra.mxu0 %v1451
    %2108 = vmatprep.subr.bf16.mxu0 %v1446
    %2109 = vmatpush2.bf16.msra.mxu0 %v1445
    %2110 = vmatprep.subr.bf16.mxu0 %v1440
    %2111 = vmatpush2.bf16.msra.mxu0 %v1439
    %2112 = vmatprep.subr.bf16.mxu0 %v1434
    %2113 = vmatpush2.bf16.msra.mxu0 %v1433
    %2114 = vmatprep.mubr.bf16.mxu0 %v194
    %2115 = vmatmul.mubr.bf16.gmra.mxu0 %v193
    %v2116 = vpop.f32.mrf.mxu0
    %v2117 = vadd.f32 %v500, %v2116
    %v2118 = vpop.f32.mrf.mxu0
    %v2119 = vadd.f32 %v504, %v2118
    %v2120 = vpop.f32.mrf.mxu0
    %v2121 = vpop.f32.mrf.mxu0
    %2122 = vdwg.mxu0
    %2123 = vmatprep.subr.bf16.mxu0 %v1524
    %2124 = vmatpush1.bf16.msra.mxu0 %v1523
    %2125 = vmatprep.subr.bf16.mxu0 %v1518
    %2126 = vmatpush1.bf16.msra.mxu0 %v1517
    %2127 = vmatprep.subr.bf16.mxu0 %v1512
    %2128 = vmatpush1.bf16.msra.mxu0 %v1511
    %2129 = vmatprep.subr.bf16.mxu0 %v1506
    %2130 = vmatpush1.bf16.msra.mxu0 %v1505
    %2131 = vmatprep.subr.bf16.mxu0 %v1500
    %2132 = vmatpush1.bf16.msra.mxu0 %v1499
    %2133 = vmatprep.subr.bf16.mxu0 %v1494
    %2134 = vmatpush1.bf16.msra.mxu0 %v1493
    %2135 = vmatprep.subr.bf16.mxu0 %v1488
    %2136 = vmatpush1.bf16.msra.mxu0 %v1487
    %2137 = vmatprep.subr.bf16.mxu0 %v1482
    %2138 = vmatpush1.bf16.msra.mxu0 %v1481
    %2139 = vmatprep.subr.bf16.mxu0 %v1572
    %2140 = vmatpush2.bf16.msra.mxu0 %v1571
    %2141 = vmatprep.subr.bf16.mxu0 %v1566
    %2142 = vmatpush2.bf16.msra.mxu0 %v1565
    %2143 = vmatprep.subr.bf16.mxu0 %v1560
    %2144 = vmatpush2.bf16.msra.mxu0 %v1559
    %2145 = vmatprep.subr.bf16.mxu0 %v1554
    %2146 = vmatpush2.bf16.msra.mxu0 %v1553
    %2147 = vmatprep.subr.bf16.mxu0 %v1548
    %2148 = vmatpush2.bf16.msra.mxu0 %v1547
    %2149 = vmatprep.subr.bf16.mxu0 %v1542
    %2150 = vmatpush2.bf16.msra.mxu0 %v1541
    %2151 = vmatprep.subr.bf16.mxu0 %v1536
    %2152 = vmatpush2.bf16.msra.mxu0 %v1535
    %2153 = vmatprep.subr.bf16.mxu0 %v1530
    %2154 = vmatpush2.bf16.msra.mxu0 %v1529
    %2155 = vmatprep.mubr.bf16.mxu0 %v196
    %2156 = vmatmul.mubr.bf16.gmra.mxu0 %v195
    %v2157 = vpop.f32.mrf.mxu0
    %v2158 = vadd.f32 %v2117, %v2157
    %v2159 = vpop.f32.mrf.mxu0
    %v2160 = vadd.f32 %v2119, %v2159
    %v2161 = vpop.f32.mrf.mxu0
    %v2162 = vpop.f32.mrf.mxu0
    %2163 = vdwg.mxu0
    %2164 = vmatprep.subr.bf16.mxu0 %v1620
    %2165 = vmatpush1.bf16.msra.mxu0 %v1619
    %2166 = vmatprep.subr.bf16.mxu0 %v1614
    %2167 = vmatpush1.bf16.msra.mxu0 %v1613
    %2168 = vmatprep.subr.bf16.mxu0 %v1608
    %2169 = vmatpush1.bf16.msra.mxu0 %v1607
    %2170 = vmatprep.subr.bf16.mxu0 %v1602
    %2171 = vmatpush1.bf16.msra.mxu0 %v1601
    %2172 = vmatprep.subr.bf16.mxu0 %v1596
    %2173 = vmatpush1.bf16.msra.mxu0 %v1595
    %2174 = vmatprep.subr.bf16.mxu0 %v1590
    %2175 = vmatpush1.bf16.msra.mxu0 %v1589
    %2176 = vmatprep.subr.bf16.mxu0 %v1584
    %2177 = vmatpush1.bf16.msra.mxu0 %v1583
    %2178 = vmatprep.subr.bf16.mxu0 %v1578
    %2179 = vmatpush1.bf16.msra.mxu0 %v1577
    %2180 = vmatprep.subr.bf16.mxu0 %v1668
    %2181 = vmatpush2.bf16.msra.mxu0 %v1667
    %2182 = vmatprep.subr.bf16.mxu0 %v1662
    %2183 = vmatpush2.bf16.msra.mxu0 %v1661
    %2184 = vmatprep.subr.bf16.mxu0 %v1656
    %2185 = vmatpush2.bf16.msra.mxu0 %v1655
    %2186 = vmatprep.subr.bf16.mxu0 %v1650
    %2187 = vmatpush2.bf16.msra.mxu0 %v1649
    %2188 = vmatprep.subr.bf16.mxu0 %v1644
    %2189 = vmatpush2.bf16.msra.mxu0 %v1643
    %2190 = vmatprep.subr.bf16.mxu0 %v1638
    %2191 = vmatpush2.bf16.msra.mxu0 %v1637
    %2192 = vmatprep.subr.bf16.mxu0 %v1632
    %2193 = vmatpush2.bf16.msra.mxu0 %v1631
    %2194 = vmatprep.subr.bf16.mxu0 %v1626
    %2195 = vmatpush2.bf16.msra.mxu0 %v1625
    %2196 = vmatprep.mubr.bf16.mxu0 %v198
    %2197 = vmatmul.mubr.bf16.gmra.mxu0 %v197
    %v2198 = vpop.f32.mrf.mxu0
    %v2199 = vadd.f32 %v2158, %v2198
    %v2200 = vpop.f32.mrf.mxu0
    %v2201 = vadd.f32 %v2160, %v2200
    %v2202 = vpop.f32.mrf.mxu0
    %v2203 = vpop.f32.mrf.mxu0
    %2204 = vdwg.mxu0
    %2205 = vmatprep.subr.bf16.mxu0 %v1430
    %2206 = vmatpush1.bf16.msra.mxu0 %v1429
    %2207 = vmatprep.subr.bf16.mxu0 %v1424
    %2208 = vmatpush1.bf16.msra.mxu0 %v1423
    %2209 = vmatprep.subr.bf16.mxu0 %v1418
    %2210 = vmatpush1.bf16.msra.mxu0 %v1417
    %2211 = vmatprep.subr.bf16.mxu0 %v1412
    %2212 = vmatpush1.bf16.msra.mxu0 %v1411
    %2213 = vmatprep.subr.bf16.mxu0 %v1406
    %2214 = vmatpush1.bf16.msra.mxu0 %v1405
    %2215 = vmatprep.subr.bf16.mxu0 %v1400
    %2216 = vmatpush1.bf16.msra.mxu0 %v1399
    %2217 = vmatprep.subr.bf16.mxu0 %v1394
    %2218 = vmatpush1.bf16.msra.mxu0 %v1393
    %2219 = vmatprep.subr.bf16.mxu0 %v1388
    %2220 = vmatpush1.bf16.msra.mxu0 %v1387
    %2221 = vmatprep.subr.bf16.mxu0 %v1478
    %2222 = vmatpush2.bf16.msra.mxu0 %v1477
    %2223 = vmatprep.subr.bf16.mxu0 %v1472
    %2224 = vmatpush2.bf16.msra.mxu0 %v1471
    %2225 = vmatprep.subr.bf16.mxu0 %v1466
    %2226 = vmatpush2.bf16.msra.mxu0 %v1465
    %2227 = vmatprep.subr.bf16.mxu0 %v1460
    %2228 = vmatpush2.bf16.msra.mxu0 %v1459
    %2229 = vmatprep.subr.bf16.mxu0 %v1454
    %2230 = vmatpush2.bf16.msra.mxu0 %v1453
    %2231 = vmatprep.subr.bf16.mxu0 %v1448
    %2232 = vmatpush2.bf16.msra.mxu0 %v1447
    %2233 = vmatprep.subr.bf16.mxu0 %v1442
    %2234 = vmatpush2.bf16.msra.mxu0 %v1441
    %2235 = vmatprep.subr.bf16.mxu0 %v1436
    %2236 = vmatpush2.bf16.msra.mxu0 %v1435
    %2237 = vmatprep.mubr.bf16.mxu0 %v194
    %2238 = vmatmul.mubr.bf16.gmra.mxu0 %v193
    %v2239 = vpop.f32.mrf.mxu0
    %v2240 = vadd.f32 %v508, %v2239
    %v2241 = vpop.f32.mrf.mxu0
    %v2242 = vadd.f32 %v512, %v2241
    %v2243 = vpop.f32.mrf.mxu0
    %v2244 = vpop.f32.mrf.mxu0
    %2245 = vdwg.mxu0
    %2246 = vmatprep.subr.bf16.mxu0 %v1526
    %2247 = vmatpush1.bf16.msra.mxu0 %v1525
    %2248 = vmatprep.subr.bf16.mxu0 %v1520
    %2249 = vmatpush1.bf16.msra.mxu0 %v1519
    %2250 = vmatprep.subr.bf16.mxu0 %v1514
    %2251 = vmatpush1.bf16.msra.mxu0 %v1513
    %2252 = vmatprep.subr.bf16.mxu0 %v1508
    %2253 = vmatpush1.bf16.msra.mxu0 %v1507
    %2254 = vmatprep.subr.bf16.mxu0 %v1502
    %2255 = vmatpush1.bf16.msra.mxu0 %v1501
    %2256 = vmatprep.subr.bf16.mxu0 %v1496
    %2257 = vmatpush1.bf16.msra.mxu0 %v1495
    %2258 = vmatprep.subr.bf16.mxu0 %v1490
    %2259 = vmatpush1.bf16.msra.mxu0 %v1489
    %2260 = vmatprep.subr.bf16.mxu0 %v1484
    %2261 = vmatpush1.bf16.msra.mxu0 %v1483
    %2262 = vmatprep.subr.bf16.mxu0 %v1574
    %2263 = vmatpush2.bf16.msra.mxu0 %v1573
    %2264 = vmatprep.subr.bf16.mxu0 %v1568
    %2265 = vmatpush2.bf16.msra.mxu0 %v1567
    %2266 = vmatprep.subr.bf16.mxu0 %v1562
    %2267 = vmatpush2.bf16.msra.mxu0 %v1561
    %2268 = vmatprep.subr.bf16.mxu0 %v1556
    %2269 = vmatpush2.bf16.msra.mxu0 %v1555
    %2270 = vmatprep.subr.bf16.mxu0 %v1550
    %2271 = vmatpush2.bf16.msra.mxu0 %v1549
    %2272 = vmatprep.subr.bf16.mxu0 %v1544
    %2273 = vmatpush2.bf16.msra.mxu0 %v1543
    %2274 = vmatprep.subr.bf16.mxu0 %v1538
    %2275 = vmatpush2.bf16.msra.mxu0 %v1537
    %2276 = vmatprep.subr.bf16.mxu0 %v1532
    %2277 = vmatpush2.bf16.msra.mxu0 %v1531
    %2278 = vmatprep.mubr.bf16.mxu0 %v196
    %2279 = vmatmul.mubr.bf16.gmra.mxu0 %v195
    %v2280 = vpop.f32.mrf.mxu0
    %v2281 = vadd.f32 %v2240, %v2280
    %v2282 = vpop.f32.mrf.mxu0
    %v2283 = vadd.f32 %v2242, %v2282
    %v2284 = vpop.f32.mrf.mxu0
    %v2285 = vpop.f32.mrf.mxu0
    %2286 = vdwg.mxu0
    %2287 = vmatprep.subr.bf16.mxu0 %v1622
    %2288 = vmatpush1.bf16.msra.mxu0 %v1621
    %2289 = vmatprep.subr.bf16.mxu0 %v1616
    %2290 = vmatpush1.bf16.msra.mxu0 %v1615
    %2291 = vmatprep.subr.bf16.mxu0 %v1610
    %2292 = vmatpush1.bf16.msra.mxu0 %v1609
    %2293 = vmatprep.subr.bf16.mxu0 %v1604
    %2294 = vmatpush1.bf16.msra.mxu0 %v1603
    %2295 = vmatprep.subr.bf16.mxu0 %v1598
    %2296 = vmatpush1.bf16.msra.mxu0 %v1597
    %2297 = vmatprep.subr.bf16.mxu0 %v1592
    %2298 = vmatpush1.bf16.msra.mxu0 %v1591
    %2299 = vmatprep.subr.bf16.mxu0 %v1586
    %2300 = vmatpush1.bf16.msra.mxu0 %v1585
    %2301 = vmatprep.subr.bf16.mxu0 %v1580
    %2302 = vmatpush1.bf16.msra.mxu0 %v1579
    %2303 = vmatprep.subr.bf16.mxu0 %v1670
    %2304 = vmatpush2.bf16.msra.mxu0 %v1669
    %2305 = vmatprep.subr.bf16.mxu0 %v1664
    %2306 = vmatpush2.bf16.msra.mxu0 %v1663
    %2307 = vmatprep.subr.bf16.mxu0 %v1658
    %2308 = vmatpush2.bf16.msra.mxu0 %v1657
    %2309 = vmatprep.subr.bf16.mxu0 %v1652
    %2310 = vmatpush2.bf16.msra.mxu0 %v1651
    %2311 = vmatprep.subr.bf16.mxu0 %v1646
    %2312 = vmatpush2.bf16.msra.mxu0 %v1645
    %2313 = vmatprep.subr.bf16.mxu0 %v1640
    %2314 = vmatpush2.bf16.msra.mxu0 %v1639
    %2315 = vmatprep.subr.bf16.mxu0 %v1634
    %2316 = vmatpush2.bf16.msra.mxu0 %v1633
    %2317 = vmatprep.subr.bf16.mxu0 %v1628
    %2318 = vmatpush2.bf16.msra.mxu0 %v1627
    %2319 = vmatprep.mubr.bf16.mxu0 %v198
    %2320 = vmatmul.mubr.bf16.gmra.mxu0 %v197
    %v2321 = vpop.f32.mrf.mxu0
    %v2322 = vadd.f32 %v2281, %v2321
    %v2323 = vpop.f32.mrf.mxu0
    %v2324 = vadd.f32 %v2283, %v2323
    %v2325 = vpop.f32.mrf.mxu0
    %v2326 = vpop.f32.mrf.mxu0
    %2327 = vdwg.mxu0
    %v2328 = vtanh.pop %v2076
    %v2329 = vtanh.pop %v2078
    %v2330 = vtanh.pop %v2199
    %v2331 = vtanh.pop %v2201
    %v2332 = vtanh.pop %v2322
    %v2333 = vtanh.pop %v2324
    %v2334 = vpack.c.bf16 %v2328, %v2328
    %v2335 = vpack.c.bf16 %v2329, %v2329
    %v2336 = vpack.c.bf16 %v2330, %v2330
    %v2337 = vpack.c.bf16 %v2331, %v2331
    %v2338 = vpack.c.bf16 %v2332, %v2332
    %v2339 = vpack.c.bf16 %v2333, %v2333
    %v2340 = vld [vmem:[#allocation8] sm:$0xff]
    %v2341 = vld [vmem:[#allocation8 + $0x8] sm:$0xff]
    %v2342 = vld [vmem:[#allocation8 + $0x10] sm:$0xff]
    %v2343 = vld [vmem:[#allocation8 + $0x18] sm:$0xff]
    %v2344 = vld [vmem:[#allocation8 + $0x20] sm:$0xff]
    %v2345 = vld [vmem:[#allocation8 + $0x28] sm:$0xff]
    %v2346 = vld [vmem:[#allocation8 + $0x30] sm:$0xff]
    %v2347 = vld [vmem:[#allocation8 + $0x38] sm:$0xff]
    %v2348 = vld [vmem:[#allocation8 + $0x40] sm:$0xff]
    %v2349 = vld [vmem:[#allocation8 + $0x48] sm:$0xff]
    %v2350 = vld [vmem:[#allocation8 + $0x50] sm:$0xff]
    %v2351 = vld [vmem:[#allocation8 + $0x58] sm:$0xff]
    %v2352 = vld [vmem:[#allocation8 + $0x60] sm:$0xff]
    %v2353 = vld [vmem:[#allocation8 + $0x68] sm:$0xff]
    %v2354 = vld [vmem:[#allocation8 + $0x70] sm:$0xff]
    %v2355 = vld [vmem:[#allocation8 + $0x78] sm:$0xff]
    %v2356 = vld [vmem:[#allocation8 + $0x80] sm:$0xff]
    %v2357 = vld [vmem:[#allocation8 + $0x88] sm:$0xff]
    %v2358 = vld [vmem:[#allocation8 + $0x90] sm:$0xff]
    %v2359 = vld [vmem:[#allocation8 + $0x98] sm:$0xff]
    %v2360 = vld [vmem:[#allocation8 + $0xa0] sm:$0xff]
    %v2361 = vld [vmem:[#allocation8 + $0xa8] sm:$0xff]
    %v2362 = vld [vmem:[#allocation8 + $0xb0] sm:$0xff]
    %v2363 = vld [vmem:[#allocation8 + $0xb8] sm:$0xff]
    %v2364 = vld [vmem:[#allocation8 + $0xc0] sm:$0xff]
    %v2365 = vld [vmem:[#allocation8 + $0xc8] sm:$0xff]
    %v2366 = vld [vmem:[#allocation8 + $0xd0] sm:$0xff]
    %v2367 = vld [vmem:[#allocation8 + $0xd8] sm:$0xff]
    %v2368 = vld [vmem:[#allocation8 + $0xe0] sm:$0xff]
    %v2369 = vld [vmem:[#allocation8 + $0xe8] sm:$0xff]
    %v2370 = vld [vmem:[#allocation8 + $0xf0] sm:$0xff]
    %v2371 = vld [vmem:[#allocation8 + $0xf8] sm:$0xff]
    %v2372 = vld [vmem:[#allocation8 + $0x100] sm:$0xff]
    %v2373 = vld [vmem:[#allocation8 + $0x108] sm:$0xff]
    %v2374 = vld [vmem:[#allocation8 + $0x110] sm:$0xff]
    %v2375 = vld [vmem:[#allocation8 + $0x118] sm:$0xff]
    %v2376 = vld [vmem:[#allocation8 + $0x120] sm:$0xff]
    %v2377 = vld [vmem:[#allocation8 + $0x128] sm:$0xff]
    %v2378 = vld [vmem:[#allocation8 + $0x130] sm:$0xff]
    %v2379 = vld [vmem:[#allocation8 + $0x138] sm:$0xff]
    %v2380 = vld [vmem:[#allocation8 + $0x140] sm:$0xff]
    %v2381 = vld [vmem:[#allocation8 + $0x148] sm:$0xff]
    %v2382 = vld [vmem:[#allocation8 + $0x150] sm:$0xff]
    %v2383 = vld [vmem:[#allocation8 + $0x158] sm:$0xff]
    %v2384 = vld [vmem:[#allocation8 + $0x160] sm:$0xff]
    %v2385 = vld [vmem:[#allocation8 + $0x168] sm:$0xff]
    %v2386 = vld [vmem:[#allocation8 + $0x170] sm:$0xff]
    %v2387 = vld [vmem:[#allocation8 + $0x178] sm:$0xff]
    %v2388 = vld [vmem:[#allocation8 + $0x180] sm:$0xff]
    %v2389 = vld [vmem:[#allocation8 + $0x188] sm:$0xff]
    %v2390 = vld [vmem:[#allocation8 + $0x190] sm:$0xff]
    %v2391 = vld [vmem:[#allocation8 + $0x198] sm:$0xff]
    %v2392 = vld [vmem:[#allocation8 + $0x1a0] sm:$0xff]
    %v2393 = vld [vmem:[#allocation8 + $0x1a8] sm:$0xff]
    %v2394 = vld [vmem:[#allocation8 + $0x1b0] sm:$0xff]
    %v2395 = vld [vmem:[#allocation8 + $0x1b8] sm:$0xff]
    %v2396 = vld [vmem:[#allocation8 + $0x1c0] sm:$0xff]
    %v2397 = vld [vmem:[#allocation8 + $0x1c8] sm:$0xff]
    %v2398 = vld [vmem:[#allocation8 + $0x1d0] sm:$0xff]
    %v2399 = vld [vmem:[#allocation8 + $0x1d8] sm:$0xff]
    %v2400 = vld [vmem:[#allocation8 + $0x1e0] sm:$0xff]
    %v2401 = vld [vmem:[#allocation8 + $0x1e8] sm:$0xff]
    %v2402 = vld [vmem:[#allocation8 + $0x1f0] sm:$0xff]
    %v2403 = vld [vmem:[#allocation8 + $0x1f8] sm:$0xff]
    %v2404 = vld [vmem:[#allocation8 + $0x200] sm:$0xff]
    %v2405 = vld [vmem:[#allocation8 + $0x208] sm:$0xff]
    %v2406 = vld [vmem:[#allocation8 + $0x210] sm:$0xff]
    %v2407 = vld [vmem:[#allocation8 + $0x218] sm:$0xff]
    %v2408 = vld [vmem:[#allocation8 + $0x220] sm:$0xff]
    %v2409 = vld [vmem:[#allocation8 + $0x228] sm:$0xff]
    %v2410 = vld [vmem:[#allocation8 + $0x230] sm:$0xff]
    %v2411 = vld [vmem:[#allocation8 + $0x238] sm:$0xff]
    %v2412 = vld [vmem:[#allocation8 + $0x240] sm:$0xff]
    %v2413 = vld [vmem:[#allocation8 + $0x248] sm:$0xff]
    %v2414 = vld [vmem:[#allocation8 + $0x250] sm:$0xff]
    %v2415 = vld [vmem:[#allocation8 + $0x258] sm:$0xff]
    %v2416 = vld [vmem:[#allocation8 + $0x260] sm:$0xff]
    %v2417 = vld [vmem:[#allocation8 + $0x268] sm:$0xff]
    %v2418 = vld [vmem:[#allocation8 + $0x270] sm:$0xff]
    %v2419 = vld [vmem:[#allocation8 + $0x278] sm:$0xff]
    %v2420 = vld [vmem:[#allocation8 + $0x280] sm:$0xff]
    %v2421 = vld [vmem:[#allocation8 + $0x288] sm:$0xff]
    %v2422 = vld [vmem:[#allocation8 + $0x290] sm:$0xff]
    %v2423 = vld [vmem:[#allocation8 + $0x298] sm:$0xff]
    %v2424 = vld [vmem:[#allocation8 + $0x2a0] sm:$0xff]
    %v2425 = vld [vmem:[#allocation8 + $0x2a8] sm:$0xff]
    %v2426 = vld [vmem:[#allocation8 + $0x2b0] sm:$0xff]
    %v2427 = vld [vmem:[#allocation8 + $0x2b8] sm:$0xff]
    %v2428 = vld [vmem:[#allocation8 + $0x2c0] sm:$0xff]
    %v2429 = vld [vmem:[#allocation8 + $0x2c8] sm:$0xff]
    %v2430 = vld [vmem:[#allocation8 + $0x2d0] sm:$0xff]
    %v2431 = vld [vmem:[#allocation8 + $0x2d8] sm:$0xff]
    %v2432 = vld [vmem:[#allocation8 + $0x2e0] sm:$0xff]
    %v2433 = vld [vmem:[#allocation8 + $0x2e8] sm:$0xff]
    %v2434 = vld [vmem:[#allocation8 + $0x2f0] sm:$0xff]
    %v2435 = vld [vmem:[#allocation8 + $0x2f8] sm:$0xff]
    %v2436 = vld [vmem:[#allocation8 + $0x300] sm:$0xff]
    %v2437 = vld [vmem:[#allocation8 + $0x308] sm:$0xff]
    %v2438 = vld [vmem:[#allocation8 + $0x310] sm:$0xff]
    %v2439 = vld [vmem:[#allocation8 + $0x318] sm:$0xff]
    %v2440 = vld [vmem:[#allocation8 + $0x320] sm:$0xff]
    %v2441 = vld [vmem:[#allocation8 + $0x328] sm:$0xff]
    %v2442 = vld [vmem:[#allocation8 + $0x330] sm:$0xff]
    %v2443 = vld [vmem:[#allocation8 + $0x338] sm:$0xff]
    %v2444 = vld [vmem:[#allocation8 + $0x340] sm:$0xff]
    %v2445 = vld [vmem:[#allocation8 + $0x348] sm:$0xff]
    %v2446 = vld [vmem:[#allocation8 + $0x350] sm:$0xff]
    %v2447 = vld [vmem:[#allocation8 + $0x358] sm:$0xff]
    %v2448 = vld [vmem:[#allocation8 + $0x360] sm:$0xff]
    %v2449 = vld [vmem:[#allocation8 + $0x368] sm:$0xff]
    %v2450 = vld [vmem:[#allocation8 + $0x370] sm:$0xff]
    %v2451 = vld [vmem:[#allocation8 + $0x378] sm:$0xff]
    %v2452 = vld [vmem:[#allocation8 + $0x380] sm:$0xff]
    %v2453 = vld [vmem:[#allocation8 + $0x388] sm:$0xff]
    %v2454 = vld [vmem:[#allocation8 + $0x390] sm:$0xff]
    %v2455 = vld [vmem:[#allocation8 + $0x398] sm:$0xff]
    %v2456 = vld [vmem:[#allocation8 + $0x3a0] sm:$0xff]
    %v2457 = vld [vmem:[#allocation8 + $0x3a8] sm:$0xff]
    %v2458 = vld [vmem:[#allocation8 + $0x3b0] sm:$0xff]
    %v2459 = vld [vmem:[#allocation8 + $0x3b8] sm:$0xff]
    %v2460 = vld [vmem:[#allocation8 + $0x3c0] sm:$0xff]
    %v2461 = vld [vmem:[#allocation8 + $0x3c8] sm:$0xff]
    %v2462 = vld [vmem:[#allocation8 + $0x3d0] sm:$0xff]
    %v2463 = vld [vmem:[#allocation8 + $0x3d8] sm:$0xff]
    %v2464 = vld [vmem:[#allocation8 + $0x3e0] sm:$0xff]
    %v2465 = vld [vmem:[#allocation8 + $0x3e8] sm:$0xff]
    %v2466 = vld [vmem:[#allocation8 + $0x3f0] sm:$0xff]
    %v2467 = vld [vmem:[#allocation8 + $0x3f8] sm:$0xff]
    %v2468 = vld [vmem:[#allocation8 + $0x400] sm:$0xff]
    %v2469 = vld [vmem:[#allocation8 + $0x408] sm:$0xff]
    %v2470 = vld [vmem:[#allocation8 + $0x410] sm:$0xff]
    %v2471 = vld [vmem:[#allocation8 + $0x418] sm:$0xff]
    %v2472 = vld [vmem:[#allocation8 + $0x420] sm:$0xff]
    %v2473 = vld [vmem:[#allocation8 + $0x428] sm:$0xff]
    %v2474 = vld [vmem:[#allocation8 + $0x430] sm:$0xff]
    %v2475 = vld [vmem:[#allocation8 + $0x438] sm:$0xff]
    %v2476 = vld [vmem:[#allocation8 + $0x440] sm:$0xff]
    %v2477 = vld [vmem:[#allocation8 + $0x448] sm:$0xff]
    %v2478 = vld [vmem:[#allocation8 + $0x450] sm:$0xff]
    %v2479 = vld [vmem:[#allocation8 + $0x458] sm:$0xff]
    %v2480 = vld [vmem:[#allocation8 + $0x460] sm:$0xff]
    %v2481 = vld [vmem:[#allocation8 + $0x468] sm:$0xff]
    %v2482 = vld [vmem:[#allocation8 + $0x470] sm:$0xff]
    %v2483 = vld [vmem:[#allocation8 + $0x478] sm:$0xff]
    %v2484 = vld [vmem:[#allocation8 + $0x480] sm:$0xff]
    %v2485 = vld [vmem:[#allocation8 + $0x488] sm:$0xff]
    %v2486 = vld [vmem:[#allocation8 + $0x490] sm:$0xff]
    %v2487 = vld [vmem:[#allocation8 + $0x498] sm:$0xff]
    %v2488 = vld [vmem:[#allocation8 + $0x4a0] sm:$0xff]
    %v2489 = vld [vmem:[#allocation8 + $0x4a8] sm:$0xff]
    %v2490 = vld [vmem:[#allocation8 + $0x4b0] sm:$0xff]
    %v2491 = vld [vmem:[#allocation8 + $0x4b8] sm:$0xff]
    %v2492 = vld [vmem:[#allocation8 + $0x4c0] sm:$0xff]
    %v2493 = vld [vmem:[#allocation8 + $0x4c8] sm:$0xff]
    %v2494 = vld [vmem:[#allocation8 + $0x4d0] sm:$0xff]
    %v2495 = vld [vmem:[#allocation8 + $0x4d8] sm:$0xff]
    %v2496 = vld [vmem:[#allocation8 + $0x4e0] sm:$0xff]
    %v2497 = vld [vmem:[#allocation8 + $0x4e8] sm:$0xff]
    %v2498 = vld [vmem:[#allocation8 + $0x4f0] sm:$0xff]
    %v2499 = vld [vmem:[#allocation8 + $0x4f8] sm:$0xff]
    %v2500 = vld [vmem:[#allocation8 + $0x500] sm:$0xff]
    %v2501 = vld [vmem:[#allocation8 + $0x508] sm:$0xff]
    %v2502 = vld [vmem:[#allocation8 + $0x510] sm:$0xff]
    %v2503 = vld [vmem:[#allocation8 + $0x518] sm:$0xff]
    %v2504 = vld [vmem:[#allocation8 + $0x520] sm:$0xff]
    %v2505 = vld [vmem:[#allocation8 + $0x528] sm:$0xff]
    %v2506 = vld [vmem:[#allocation8 + $0x530] sm:$0xff]
    %v2507 = vld [vmem:[#allocation8 + $0x538] sm:$0xff]
    %v2508 = vld [vmem:[#allocation8 + $0x540] sm:$0xff]
    %v2509 = vld [vmem:[#allocation8 + $0x548] sm:$0xff]
    %v2510 = vld [vmem:[#allocation8 + $0x550] sm:$0xff]
    %v2511 = vld [vmem:[#allocation8 + $0x558] sm:$0xff]
    %v2512 = vld [vmem:[#allocation8 + $0x560] sm:$0xff]
    %v2513 = vld [vmem:[#allocation8 + $0x568] sm:$0xff]
    %v2514 = vld [vmem:[#allocation8 + $0x570] sm:$0xff]
    %v2515 = vld [vmem:[#allocation8 + $0x578] sm:$0xff]
    %v2516 = vld [vmem:[#allocation8 + $0x580] sm:$0xff]
    %v2517 = vld [vmem:[#allocation8 + $0x588] sm:$0xff]
    %v2518 = vld [vmem:[#allocation8 + $0x590] sm:$0xff]
    %v2519 = vld [vmem:[#allocation8 + $0x598] sm:$0xff]
    %v2520 = vld [vmem:[#allocation8 + $0x5a0] sm:$0xff]
    %v2521 = vld [vmem:[#allocation8 + $0x5a8] sm:$0xff]
    %v2522 = vld [vmem:[#allocation8 + $0x5b0] sm:$0xff]
    %v2523 = vld [vmem:[#allocation8 + $0x5b8] sm:$0xff]
    %v2524 = vld [vmem:[#allocation8 + $0x5c0] sm:$0xff]
    %v2525 = vld [vmem:[#allocation8 + $0x5c8] sm:$0xff]
    %v2526 = vld [vmem:[#allocation8 + $0x5d0] sm:$0xff]
    %v2527 = vld [vmem:[#allocation8 + $0x5d8] sm:$0xff]
    %v2528 = vld [vmem:[#allocation8 + $0x5e0] sm:$0xff]
    %v2529 = vld [vmem:[#allocation8 + $0x5e8] sm:$0xff]
    %v2530 = vld [vmem:[#allocation8 + $0x5f0] sm:$0xff]
    %v2531 = vld [vmem:[#allocation8 + $0x5f8] sm:$0xff]
    %v2532 = vld [vmem:[#allocation10] sm:$0xf]
    %v2534 = vlaneseq
    %v2535 = vshrl.u32 %v2534, 7
    %v2536 = vsub.s32 0, %v2535
    %v2537 = vrot.slane %v2532, %v2536
    %v2538 = vlaneseq
    %v2539 = vshrl.u32 %v2538, 7
    %v2540 = vsub.s32 1, %v2539
    %v2541 = vrot.slane %v2532, %v2540
    %v2542 = vlaneseq
    %v2543 = vshrl.u32 %v2542, 7
    %v2544 = vsub.s32 2, %v2543
    %v2545 = vrot.slane %v2532, %v2544
    %v2546 = vlaneseq
    %v2547 = vshrl.u32 %v2546, 7
    %v2548 = vsub.s32 3, %v2547
    %v2549 = vrot.slane %v2532, %v2548
    %v2746 = vunpack.c.l.b16 %v2340
    %v2747 = vunpack.c.h.b16 %v2340
    %v2748 = vunpack.c.l.b16 %v2341
    %v2749 = vunpack.c.h.b16 %v2341
    %v2750 = vunpack.c.l.b16 %v2342
    %v2751 = vunpack.c.h.b16 %v2342
    %v2752 = vunpack.c.l.b16 %v2343
    %v2753 = vunpack.c.h.b16 %v2343
    %v2754 = vunpack.c.l.b16 %v2344
    %v2755 = vunpack.c.h.b16 %v2344
    %v2756 = vunpack.c.l.b16 %v2345
    %v2757 = vunpack.c.h.b16 %v2345
    %v2758 = vunpack.c.l.b16 %v2346
    %v2759 = vunpack.c.h.b16 %v2346
    %v2760 = vunpack.c.l.b16 %v2347
    %v2761 = vunpack.c.h.b16 %v2347
    %v2762 = vunpack.c.l.b16 %v2348
    %v2763 = vunpack.c.h.b16 %v2348
    %v2764 = vunpack.c.l.b16 %v2349
    %v2765 = vunpack.c.h.b16 %v2349
    %v2766 = vunpack.c.l.b16 %v2350
    %v2767 = vunpack.c.h.b16 %v2350
    %v2768 = vunpack.c.l.b16 %v2351
    %v2769 = vunpack.c.h.b16 %v2351
    %v2770 = vunpack.c.l.b16 %v2352
    %v2771 = vunpack.c.h.b16 %v2352
    %v2772 = vunpack.c.l.b16 %v2353
    %v2773 = vunpack.c.h.b16 %v2353
    %v2774 = vunpack.c.l.b16 %v2354
    %v2775 = vunpack.c.h.b16 %v2354
    %v2776 = vunpack.c.l.b16 %v2355
    %v2777 = vunpack.c.h.b16 %v2355
    %v2778 = vunpack.c.l.b16 %v2356
    %v2779 = vunpack.c.h.b16 %v2356
    %v2780 = vunpack.c.l.b16 %v2357
    %v2781 = vunpack.c.h.b16 %v2357
    %v2782 = vunpack.c.l.b16 %v2358
    %v2783 = vunpack.c.h.b16 %v2358
    %v2784 = vunpack.c.l.b16 %v2359
    %v2785 = vunpack.c.h.b16 %v2359
    %v2786 = vunpack.c.l.b16 %v2360
    %v2787 = vunpack.c.h.b16 %v2360
    %v2788 = vunpack.c.l.b16 %v2361
    %v2789 = vunpack.c.h.b16 %v2361
    %v2790 = vunpack.c.l.b16 %v2362
    %v2791 = vunpack.c.h.b16 %v2362
    %v2792 = vunpack.c.l.b16 %v2363
    %v2793 = vunpack.c.h.b16 %v2363
    %v2794 = vunpack.c.l.b16 %v2364
    %v2795 = vunpack.c.h.b16 %v2364
    %v2796 = vunpack.c.l.b16 %v2365
    %v2797 = vunpack.c.h.b16 %v2365
    %v2798 = vunpack.c.l.b16 %v2366
    %v2799 = vunpack.c.h.b16 %v2366
    %v2800 = vunpack.c.l.b16 %v2367
    %v2801 = vunpack.c.h.b16 %v2367
    %v2802 = vunpack.c.l.b16 %v2368
    %v2803 = vunpack.c.h.b16 %v2368
    %v2804 = vunpack.c.l.b16 %v2369
    %v2805 = vunpack.c.h.b16 %v2369
    %v2806 = vunpack.c.l.b16 %v2370
    %v2807 = vunpack.c.h.b16 %v2370
    %v2808 = vunpack.c.l.b16 %v2371
    %v2809 = vunpack.c.h.b16 %v2371
    %v2810 = vunpack.c.l.b16 %v2372
    %v2811 = vunpack.c.h.b16 %v2372
    %v2812 = vunpack.c.l.b16 %v2373
    %v2813 = vunpack.c.h.b16 %v2373
    %v2814 = vunpack.c.l.b16 %v2374
    %v2815 = vunpack.c.h.b16 %v2374
    %v2816 = vunpack.c.l.b16 %v2375
    %v2817 = vunpack.c.h.b16 %v2375
    %v2818 = vunpack.c.l.b16 %v2376
    %v2819 = vunpack.c.h.b16 %v2376
    %v2820 = vunpack.c.l.b16 %v2377
    %v2821 = vunpack.c.h.b16 %v2377
    %v2822 = vunpack.c.l.b16 %v2378
    %v2823 = vunpack.c.h.b16 %v2378
    %v2824 = vunpack.c.l.b16 %v2379
    %v2825 = vunpack.c.h.b16 %v2379
    %v2826 = vunpack.c.l.b16 %v2380
    %v2827 = vunpack.c.h.b16 %v2380
    %v2828 = vunpack.c.l.b16 %v2381
    %v2829 = vunpack.c.h.b16 %v2381
    %v2830 = vunpack.c.l.b16 %v2382
    %v2831 = vunpack.c.h.b16 %v2382
    %v2832 = vunpack.c.l.b16 %v2383
    %v2833 = vunpack.c.h.b16 %v2383
    %v2834 = vunpack.c.l.b16 %v2384
    %v2835 = vunpack.c.h.b16 %v2384
    %v2836 = vunpack.c.l.b16 %v2385
    %v2837 = vunpack.c.h.b16 %v2385
    %v2838 = vunpack.c.l.b16 %v2386
    %v2839 = vunpack.c.h.b16 %v2386
    %v2840 = vunpack.c.l.b16 %v2387
    %v2841 = vunpack.c.h.b16 %v2387
    %v2842 = vunpack.c.l.b16 %v2388
    %v2843 = vunpack.c.h.b16 %v2388
    %v2844 = vunpack.c.l.b16 %v2389
    %v2845 = vunpack.c.h.b16 %v2389
    %v2846 = vunpack.c.l.b16 %v2390
    %v2847 = vunpack.c.h.b16 %v2390
    %v2848 = vunpack.c.l.b16 %v2391
    %v2849 = vunpack.c.h.b16 %v2391
    %v2850 = vunpack.c.l.b16 %v2392
    %v2851 = vunpack.c.h.b16 %v2392
    %v2852 = vunpack.c.l.b16 %v2393
    %v2853 = vunpack.c.h.b16 %v2393
    %v2854 = vunpack.c.l.b16 %v2394
    %v2855 = vunpack.c.h.b16 %v2394
    %v2856 = vunpack.c.l.b16 %v2395
    %v2857 = vunpack.c.h.b16 %v2395
    %v2858 = vunpack.c.l.b16 %v2396
    %v2859 = vunpack.c.h.b16 %v2396
    %v2860 = vunpack.c.l.b16 %v2397
    %v2861 = vunpack.c.h.b16 %v2397
    %v2862 = vunpack.c.l.b16 %v2398
    %v2863 = vunpack.c.h.b16 %v2398
    %v2864 = vunpack.c.l.b16 %v2399
    %v2865 = vunpack.c.h.b16 %v2399
    %v2866 = vunpack.c.l.b16 %v2400
    %v2867 = vunpack.c.h.b16 %v2400
    %v2868 = vunpack.c.l.b16 %v2401
    %v2869 = vunpack.c.h.b16 %v2401
    %v2870 = vunpack.c.l.b16 %v2402
    %v2871 = vunpack.c.h.b16 %v2402
    %v2872 = vunpack.c.l.b16 %v2403
    %v2873 = vunpack.c.h.b16 %v2403
    %v2874 = vunpack.c.l.b16 %v2404
    %v2875 = vunpack.c.h.b16 %v2404
    %v2876 = vunpack.c.l.b16 %v2405
    %v2877 = vunpack.c.h.b16 %v2405
    %v2878 = vunpack.c.l.b16 %v2406
    %v2879 = vunpack.c.h.b16 %v2406
    %v2880 = vunpack.c.l.b16 %v2407
    %v2881 = vunpack.c.h.b16 %v2407
    %v2882 = vunpack.c.l.b16 %v2408
    %v2883 = vunpack.c.h.b16 %v2408
    %v2884 = vunpack.c.l.b16 %v2409
    %v2885 = vunpack.c.h.b16 %v2409
    %v2886 = vunpack.c.l.b16 %v2410
    %v2887 = vunpack.c.h.b16 %v2410
    %v2888 = vunpack.c.l.b16 %v2411
    %v2889 = vunpack.c.h.b16 %v2411
    %v2890 = vunpack.c.l.b16 %v2412
    %v2891 = vunpack.c.h.b16 %v2412
    %v2892 = vunpack.c.l.b16 %v2413
    %v2893 = vunpack.c.h.b16 %v2413
    %v2894 = vunpack.c.l.b16 %v2414
    %v2895 = vunpack.c.h.b16 %v2414
    %v2896 = vunpack.c.l.b16 %v2415
    %v2897 = vunpack.c.h.b16 %v2415
    %v2898 = vunpack.c.l.b16 %v2416
    %v2899 = vunpack.c.h.b16 %v2416
    %v2900 = vunpack.c.l.b16 %v2417
    %v2901 = vunpack.c.h.b16 %v2417
    %v2902 = vunpack.c.l.b16 %v2418
    %v2903 = vunpack.c.h.b16 %v2418
    %v2904 = vunpack.c.l.b16 %v2419
    %v2905 = vunpack.c.h.b16 %v2419
    %v2906 = vunpack.c.l.b16 %v2420
    %v2907 = vunpack.c.h.b16 %v2420
    %v2908 = vunpack.c.l.b16 %v2421
    %v2909 = vunpack.c.h.b16 %v2421
    %v2910 = vunpack.c.l.b16 %v2422
    %v2911 = vunpack.c.h.b16 %v2422
    %v2912 = vunpack.c.l.b16 %v2423
    %v2913 = vunpack.c.h.b16 %v2423
    %v2914 = vunpack.c.l.b16 %v2424
    %v2915 = vunpack.c.h.b16 %v2424
    %v2916 = vunpack.c.l.b16 %v2425
    %v2917 = vunpack.c.h.b16 %v2425
    %v2918 = vunpack.c.l.b16 %v2426
    %v2919 = vunpack.c.h.b16 %v2426
    %v2920 = vunpack.c.l.b16 %v2427
    %v2921 = vunpack.c.h.b16 %v2427
    %v2922 = vunpack.c.l.b16 %v2428
    %v2923 = vunpack.c.h.b16 %v2428
    %v2924 = vunpack.c.l.b16 %v2429
    %v2925 = vunpack.c.h.b16 %v2429
    %v2926 = vunpack.c.l.b16 %v2430
    %v2927 = vunpack.c.h.b16 %v2430
    %v2928 = vunpack.c.l.b16 %v2431
    %v2929 = vunpack.c.h.b16 %v2431
    %v2930 = vunpack.c.l.b16 %v2432
    %v2931 = vunpack.c.h.b16 %v2432
    %v2932 = vunpack.c.l.b16 %v2433
    %v2933 = vunpack.c.h.b16 %v2433
    %v2934 = vunpack.c.l.b16 %v2434
    %v2935 = vunpack.c.h.b16 %v2434
    %v2936 = vunpack.c.l.b16 %v2435
    %v2937 = vunpack.c.h.b16 %v2435
    %v2938 = vunpack.c.l.b16 %v2436
    %v2939 = vunpack.c.h.b16 %v2436
    %v2940 = vunpack.c.l.b16 %v2437
    %v2941 = vunpack.c.h.b16 %v2437
    %v2942 = vunpack.c.l.b16 %v2438
    %v2943 = vunpack.c.h.b16 %v2438
    %v2944 = vunpack.c.l.b16 %v2439
    %v2945 = vunpack.c.h.b16 %v2439
    %v2946 = vunpack.c.l.b16 %v2440
    %v2947 = vunpack.c.h.b16 %v2440
    %v2948 = vunpack.c.l.b16 %v2441
    %v2949 = vunpack.c.h.b16 %v2441
    %v2950 = vunpack.c.l.b16 %v2442
    %v2951 = vunpack.c.h.b16 %v2442
    %v2952 = vunpack.c.l.b16 %v2443
    %v2953 = vunpack.c.h.b16 %v2443
    %v2954 = vunpack.c.l.b16 %v2444
    %v2955 = vunpack.c.h.b16 %v2444
    %v2956 = vunpack.c.l.b16 %v2445
    %v2957 = vunpack.c.h.b16 %v2445
    %v2958 = vunpack.c.l.b16 %v2446
    %v2959 = vunpack.c.h.b16 %v2446
    %v2960 = vunpack.c.l.b16 %v2447
    %v2961 = vunpack.c.h.b16 %v2447
    %v2962 = vunpack.c.l.b16 %v2448
    %v2963 = vunpack.c.h.b16 %v2448
    %v2964 = vunpack.c.l.b16 %v2449
    %v2965 = vunpack.c.h.b16 %v2449
    %v2966 = vunpack.c.l.b16 %v2450
    %v2967 = vunpack.c.h.b16 %v2450
    %v2968 = vunpack.c.l.b16 %v2451
    %v2969 = vunpack.c.h.b16 %v2451
    %v2970 = vunpack.c.l.b16 %v2452
    %v2971 = vunpack.c.h.b16 %v2452
    %v2972 = vunpack.c.l.b16 %v2453
    %v2973 = vunpack.c.h.b16 %v2453
    %v2974 = vunpack.c.l.b16 %v2454
    %v2975 = vunpack.c.h.b16 %v2454
    %v2976 = vunpack.c.l.b16 %v2455
    %v2977 = vunpack.c.h.b16 %v2455
    %v2978 = vunpack.c.l.b16 %v2456
    %v2979 = vunpack.c.h.b16 %v2456
    %v2980 = vunpack.c.l.b16 %v2457
    %v2981 = vunpack.c.h.b16 %v2457
    %v2982 = vunpack.c.l.b16 %v2458
    %v2983 = vunpack.c.h.b16 %v2458
    %v2984 = vunpack.c.l.b16 %v2459
    %v2985 = vunpack.c.h.b16 %v2459
    %v2986 = vunpack.c.l.b16 %v2460
    %v2987 = vunpack.c.h.b16 %v2460
    %v2988 = vunpack.c.l.b16 %v2461
    %v2989 = vunpack.c.h.b16 %v2461
    %v2990 = vunpack.c.l.b16 %v2462
    %v2991 = vunpack.c.h.b16 %v2462
    %v2992 = vunpack.c.l.b16 %v2463
    %v2993 = vunpack.c.h.b16 %v2463
    %v2994 = vunpack.c.l.b16 %v2464
    %v2995 = vunpack.c.h.b16 %v2464
    %v2996 = vunpack.c.l.b16 %v2465
    %v2997 = vunpack.c.h.b16 %v2465
    %v2998 = vunpack.c.l.b16 %v2466
    %v2999 = vunpack.c.h.b16 %v2466
    %v3000 = vunpack.c.l.b16 %v2467
    %v3001 = vunpack.c.h.b16 %v2467
    %v3002 = vunpack.c.l.b16 %v2468
    %v3003 = vunpack.c.h.b16 %v2468
    %v3004 = vunpack.c.l.b16 %v2469
    %v3005 = vunpack.c.h.b16 %v2469
    %v3006 = vunpack.c.l.b16 %v2470
    %v3007 = vunpack.c.h.b16 %v2470
    %v3008 = vunpack.c.l.b16 %v2471
    %v3009 = vunpack.c.h.b16 %v2471
    %v3010 = vunpack.c.l.b16 %v2472
    %v3011 = vunpack.c.h.b16 %v2472
    %v3012 = vunpack.c.l.b16 %v2473
    %v3013 = vunpack.c.h.b16 %v2473
    %v3014 = vunpack.c.l.b16 %v2474
    %v3015 = vunpack.c.h.b16 %v2474
    %v3016 = vunpack.c.l.b16 %v2475
    %v3017 = vunpack.c.h.b16 %v2475
    %v3018 = vunpack.c.l.b16 %v2476
    %v3019 = vunpack.c.h.b16 %v2476
    %v3020 = vunpack.c.l.b16 %v2477
    %v3021 = vunpack.c.h.b16 %v2477
    %v3022 = vunpack.c.l.b16 %v2478
    %v3023 = vunpack.c.h.b16 %v2478
    %v3024 = vunpack.c.l.b16 %v2479
    %v3025 = vunpack.c.h.b16 %v2479
    %v3026 = vunpack.c.l.b16 %v2480
    %v3027 = vunpack.c.h.b16 %v2480
    %v3028 = vunpack.c.l.b16 %v2481
    %v3029 = vunpack.c.h.b16 %v2481
    %v3030 = vunpack.c.l.b16 %v2482
    %v3031 = vunpack.c.h.b16 %v2482
    %v3032 = vunpack.c.l.b16 %v2483
    %v3033 = vunpack.c.h.b16 %v2483
    %v3034 = vunpack.c.l.b16 %v2484
    %v3035 = vunpack.c.h.b16 %v2484
    %v3036 = vunpack.c.l.b16 %v2485
    %v3037 = vunpack.c.h.b16 %v2485
    %v3038 = vunpack.c.l.b16 %v2486
    %v3039 = vunpack.c.h.b16 %v2486
    %v3040 = vunpack.c.l.b16 %v2487
    %v3041 = vunpack.c.h.b16 %v2487
    %v3042 = vunpack.c.l.b16 %v2488
    %v3043 = vunpack.c.h.b16 %v2488
    %v3044 = vunpack.c.l.b16 %v2489
    %v3045 = vunpack.c.h.b16 %v2489
    %v3046 = vunpack.c.l.b16 %v2490
    %v3047 = vunpack.c.h.b16 %v2490
    %v3048 = vunpack.c.l.b16 %v2491
    %v3049 = vunpack.c.h.b16 %v2491
    %v3050 = vunpack.c.l.b16 %v2492
    %v3051 = vunpack.c.h.b16 %v2492
    %v3052 = vunpack.c.l.b16 %v2493
    %v3053 = vunpack.c.h.b16 %v2493
    %v3054 = vunpack.c.l.b16 %v2494
    %v3055 = vunpack.c.h.b16 %v2494
    %v3056 = vunpack.c.l.b16 %v2495
    %v3057 = vunpack.c.h.b16 %v2495
    %v3058 = vunpack.c.l.b16 %v2496
    %v3059 = vunpack.c.h.b16 %v2496
    %v3060 = vunpack.c.l.b16 %v2497
    %v3061 = vunpack.c.h.b16 %v2497
    %v3062 = vunpack.c.l.b16 %v2498
    %v3063 = vunpack.c.h.b16 %v2498
    %v3064 = vunpack.c.l.b16 %v2499
    %v3065 = vunpack.c.h.b16 %v2499
    %v3066 = vunpack.c.l.b16 %v2500
    %v3067 = vunpack.c.h.b16 %v2500
    %v3068 = vunpack.c.l.b16 %v2501
    %v3069 = vunpack.c.h.b16 %v2501
    %v3070 = vunpack.c.l.b16 %v2502
    %v3071 = vunpack.c.h.b16 %v2502
    %v3072 = vunpack.c.l.b16 %v2503
    %v3073 = vunpack.c.h.b16 %v2503
    %v3074 = vunpack.c.l.b16 %v2504
    %v3075 = vunpack.c.h.b16 %v2504
    %v3076 = vunpack.c.l.b16 %v2505
    %v3077 = vunpack.c.h.b16 %v2505
    %v3078 = vunpack.c.l.b16 %v2506
    %v3079 = vunpack.c.h.b16 %v2506
    %v3080 = vunpack.c.l.b16 %v2507
    %v3081 = vunpack.c.h.b16 %v2507
    %v3082 = vunpack.c.l.b16 %v2508
    %v3083 = vunpack.c.h.b16 %v2508
    %v3084 = vunpack.c.l.b16 %v2509
    %v3085 = vunpack.c.h.b16 %v2509
    %v3086 = vunpack.c.l.b16 %v2510
    %v3087 = vunpack.c.h.b16 %v2510
    %v3088 = vunpack.c.l.b16 %v2511
    %v3089 = vunpack.c.h.b16 %v2511
    %v3090 = vunpack.c.l.b16 %v2512
    %v3091 = vunpack.c.h.b16 %v2512
    %v3092 = vunpack.c.l.b16 %v2513
    %v3093 = vunpack.c.h.b16 %v2513
    %v3094 = vunpack.c.l.b16 %v2514
    %v3095 = vunpack.c.h.b16 %v2514
    %v3096 = vunpack.c.l.b16 %v2515
    %v3097 = vunpack.c.h.b16 %v2515
    %v3098 = vunpack.c.l.b16 %v2516
    %v3099 = vunpack.c.h.b16 %v2516
    %v3100 = vunpack.c.l.b16 %v2517
    %v3101 = vunpack.c.h.b16 %v2517
    %v3102 = vunpack.c.l.b16 %v2518
    %v3103 = vunpack.c.h.b16 %v2518
    %v3104 = vunpack.c.l.b16 %v2519
    %v3105 = vunpack.c.h.b16 %v2519
    %v3106 = vunpack.c.l.b16 %v2520
    %v3107 = vunpack.c.h.b16 %v2520
    %v3108 = vunpack.c.l.b16 %v2521
    %v3109 = vunpack.c.h.b16 %v2521
    %v3110 = vunpack.c.l.b16 %v2522
    %v3111 = vunpack.c.h.b16 %v2522
    %v3112 = vunpack.c.l.b16 %v2523
    %v3113 = vunpack.c.h.b16 %v2523
    %v3114 = vunpack.c.l.b16 %v2524
    %v3115 = vunpack.c.h.b16 %v2524
    %v3116 = vunpack.c.l.b16 %v2525
    %v3117 = vunpack.c.h.b16 %v2525
    %v3118 = vunpack.c.l.b16 %v2526
    %v3119 = vunpack.c.h.b16 %v2526
    %v3120 = vunpack.c.l.b16 %v2527
    %v3121 = vunpack.c.h.b16 %v2527
    %v3122 = vunpack.c.l.b16 %v2528
    %v3123 = vunpack.c.h.b16 %v2528
    %v3124 = vunpack.c.l.b16 %v2529
    %v3125 = vunpack.c.h.b16 %v2529
    %v3126 = vunpack.c.l.b16 %v2530
    %v3127 = vunpack.c.h.b16 %v2530
    %v3128 = vunpack.c.l.b16 %v2531
    %v3129 = vunpack.c.h.b16 %v2531
    %v3130 = vpack.c.b16 %v2750, %v2746
    %v3131 = vpack.c.b16 %v2751, %v2747
    %v3132 = vpack.c.b16 %v2752, %v2748
    %v3133 = vpack.c.b16 %v2753, %v2749
    %v3134 = vpack.c.b16 %v2758, %v2754
    %v3135 = vpack.c.b16 %v2759, %v2755
    %v3136 = vpack.c.b16 %v2760, %v2756
    %v3137 = vpack.c.b16 %v2761, %v2757
    %v3138 = vpack.c.b16 %v2766, %v2762
    %v3139 = vpack.c.b16 %v2767, %v2763
    %v3140 = vpack.c.b16 %v2768, %v2764
    %v3141 = vpack.c.b16 %v2769, %v2765
    %v3142 = vpack.c.b16 %v2774, %v2770
    %v3143 = vpack.c.b16 %v2775, %v2771
    %v3144 = vpack.c.b16 %v2776, %v2772
    %v3145 = vpack.c.b16 %v2777, %v2773
    %v3146 = vpack.c.b16 %v2782, %v2778
    %v3147 = vpack.c.b16 %v2783, %v2779
    %v3148 = vpack.c.b16 %v2784, %v2780
    %v3149 = vpack.c.b16 %v2785, %v2781
    %v3150 = vpack.c.b16 %v2790, %v2786
    %v3151 = vpack.c.b16 %v2791, %v2787
    %v3152 = vpack.c.b16 %v2792, %v2788
    %v3153 = vpack.c.b16 %v2793, %v2789
    %v3154 = vpack.c.b16 %v2798, %v2794
    %v3155 = vpack.c.b16 %v2799, %v2795
    %v3156 = vpack.c.b16 %v2800, %v2796
    %v3157 = vpack.c.b16 %v2801, %v2797
    %v3158 = vpack.c.b16 %v2806, %v2802
    %v3159 = vpack.c.b16 %v2807, %v2803
    %v3160 = vpack.c.b16 %v2808, %v2804
    %v3161 = vpack.c.b16 %v2809, %v2805
    %v3162 = vpack.c.b16 %v2814, %v2810
    %v3163 = vpack.c.b16 %v2815, %v2811
    %v3164 = vpack.c.b16 %v2816, %v2812
    %v3165 = vpack.c.b16 %v2817, %v2813
    %v3166 = vpack.c.b16 %v2822, %v2818
    %v3167 = vpack.c.b16 %v2823, %v2819
    %v3168 = vpack.c.b16 %v2824, %v2820
    %v3169 = vpack.c.b16 %v2825, %v2821
    %v3170 = vpack.c.b16 %v2830, %v2826
    %v3171 = vpack.c.b16 %v2831, %v2827
    %v3172 = vpack.c.b16 %v2832, %v2828
    %v3173 = vpack.c.b16 %v2833, %v2829
    %v3174 = vpack.c.b16 %v2838, %v2834
    %v3175 = vpack.c.b16 %v2839, %v2835
    %v3176 = vpack.c.b16 %v2840, %v2836
    %v3177 = vpack.c.b16 %v2841, %v2837
    %v3178 = vpack.c.b16 %v2846, %v2842
    %v3179 = vpack.c.b16 %v2847, %v2843
    %v3180 = vpack.c.b16 %v2848, %v2844
    %v3181 = vpack.c.b16 %v2849, %v2845
    %v3182 = vpack.c.b16 %v2854, %v2850
    %v3183 = vpack.c.b16 %v2855, %v2851
    %v3184 = vpack.c.b16 %v2856, %v2852
    %v3185 = vpack.c.b16 %v2857, %v2853
    %v3186 = vpack.c.b16 %v2862, %v2858
    %v3187 = vpack.c.b16 %v2863, %v2859
    %v3188 = vpack.c.b16 %v2864, %v2860
    %v3189 = vpack.c.b16 %v2865, %v2861
    %v3190 = vpack.c.b16 %v2870, %v2866
    %v3191 = vpack.c.b16 %v2871, %v2867
    %v3192 = vpack.c.b16 %v2872, %v2868
    %v3193 = vpack.c.b16 %v2873, %v2869
    %v3194 = vpack.c.b16 %v2878, %v2874
    %v3195 = vpack.c.b16 %v2879, %v2875
    %v3196 = vpack.c.b16 %v2880, %v2876
    %v3197 = vpack.c.b16 %v2881, %v2877
    %v3198 = vpack.c.b16 %v2886, %v2882
    %v3199 = vpack.c.b16 %v2887, %v2883
    %v3200 = vpack.c.b16 %v2888, %v2884
    %v3201 = vpack.c.b16 %v2889, %v2885
    %v3202 = vpack.c.b16 %v2894, %v2890
    %v3203 = vpack.c.b16 %v2895, %v2891
    %v3204 = vpack.c.b16 %v2896, %v2892
    %v3205 = vpack.c.b16 %v2897, %v2893
    %v3206 = vpack.c.b16 %v2902, %v2898
    %v3207 = vpack.c.b16 %v2903, %v2899
    %v3208 = vpack.c.b16 %v2904, %v2900
    %v3209 = vpack.c.b16 %v2905, %v2901
    %v3210 = vpack.c.b16 %v2910, %v2906
    %v3211 = vpack.c.b16 %v2911, %v2907
    %v3212 = vpack.c.b16 %v2912, %v2908
    %v3213 = vpack.c.b16 %v2913, %v2909
    %v3214 = vpack.c.b16 %v2918, %v2914
    %v3215 = vpack.c.b16 %v2919, %v2915
    %v3216 = vpack.c.b16 %v2920, %v2916
    %v3217 = vpack.c.b16 %v2921, %v2917
    %v3218 = vpack.c.b16 %v2926, %v2922
    %v3219 = vpack.c.b16 %v2927, %v2923
    %v3220 = vpack.c.b16 %v2928, %v2924
    %v3221 = vpack.c.b16 %v2929, %v2925
    %v3222 = vpack.c.b16 %v2934, %v2930
    %v3223 = vpack.c.b16 %v2935, %v2931
    %v3224 = vpack.c.b16 %v2936, %v2932
    %v3225 = vpack.c.b16 %v2937, %v2933
    %v3226 = vpack.c.b16 %v2942, %v2938
    %v3227 = vpack.c.b16 %v2943, %v2939
    %v3228 = vpack.c.b16 %v2944, %v2940
    %v3229 = vpack.c.b16 %v2945, %v2941
    %v3230 = vpack.c.b16 %v2950, %v2946
    %v3231 = vpack.c.b16 %v2951, %v2947
    %v3232 = vpack.c.b16 %v2952, %v2948
    %v3233 = vpack.c.b16 %v2953, %v2949
    %v3234 = vpack.c.b16 %v2958, %v2954
    %v3235 = vpack.c.b16 %v2959, %v2955
    %v3236 = vpack.c.b16 %v2960, %v2956
    %v3237 = vpack.c.b16 %v2961, %v2957
    %v3238 = vpack.c.b16 %v2966, %v2962
    %v3239 = vpack.c.b16 %v2967, %v2963
    %v3240 = vpack.c.b16 %v2968, %v2964
    %v3241 = vpack.c.b16 %v2969, %v2965
    %v3242 = vpack.c.b16 %v2974, %v2970
    %v3243 = vpack.c.b16 %v2975, %v2971
    %v3244 = vpack.c.b16 %v2976, %v2972
    %v3245 = vpack.c.b16 %v2977, %v2973
    %v3246 = vpack.c.b16 %v2982, %v2978
    %v3247 = vpack.c.b16 %v2983, %v2979
    %v3248 = vpack.c.b16 %v2984, %v2980
    %v3249 = vpack.c.b16 %v2985, %v2981
    %v3250 = vpack.c.b16 %v2990, %v2986
    %v3251 = vpack.c.b16 %v2991, %v2987
    %v3252 = vpack.c.b16 %v2992, %v2988
    %v3253 = vpack.c.b16 %v2993, %v2989
    %v3254 = vpack.c.b16 %v2998, %v2994
    %v3255 = vpack.c.b16 %v2999, %v2995
    %v3256 = vpack.c.b16 %v3000, %v2996
    %v3257 = vpack.c.b16 %v3001, %v2997
    %v3258 = vpack.c.b16 %v3006, %v3002
    %v3259 = vpack.c.b16 %v3007, %v3003
    %v3260 = vpack.c.b16 %v3008, %v3004
    %v3261 = vpack.c.b16 %v3009, %v3005
    %v3262 = vpack.c.b16 %v3014, %v3010
    %v3263 = vpack.c.b16 %v3015, %v3011
    %v3264 = vpack.c.b16 %v3016, %v3012
    %v3265 = vpack.c.b16 %v3017, %v3013
    %v3266 = vpack.c.b16 %v3022, %v3018
    %v3267 = vpack.c.b16 %v3023, %v3019
    %v3268 = vpack.c.b16 %v3024, %v3020
    %v3269 = vpack.c.b16 %v3025, %v3021
    %v3270 = vpack.c.b16 %v3030, %v3026
    %v3271 = vpack.c.b16 %v3031, %v3027
    %v3272 = vpack.c.b16 %v3032, %v3028
    %v3273 = vpack.c.b16 %v3033, %v3029
    %v3274 = vpack.c.b16 %v3038, %v3034
    %v3275 = vpack.c.b16 %v3039, %v3035
    %v3276 = vpack.c.b16 %v3040, %v3036
    %v3277 = vpack.c.b16 %v3041, %v3037
    %v3278 = vpack.c.b16 %v3046, %v3042
    %v3279 = vpack.c.b16 %v3047, %v3043
    %v3280 = vpack.c.b16 %v3048, %v3044
    %v3281 = vpack.c.b16 %v3049, %v3045
    %v3282 = vpack.c.b16 %v3054, %v3050
    %v3283 = vpack.c.b16 %v3055, %v3051
    %v3284 = vpack.c.b16 %v3056, %v3052
    %v3285 = vpack.c.b16 %v3057, %v3053
    %v3286 = vpack.c.b16 %v3062, %v3058
    %v3287 = vpack.c.b16 %v3063, %v3059
    %v3288 = vpack.c.b16 %v3064, %v3060
    %v3289 = vpack.c.b16 %v3065, %v3061
    %v3290 = vpack.c.b16 %v3070, %v3066
    %v3291 = vpack.c.b16 %v3071, %v3067
    %v3292 = vpack.c.b16 %v3072, %v3068
    %v3293 = vpack.c.b16 %v3073, %v3069
    %v3294 = vpack.c.b16 %v3078, %v3074
    %v3295 = vpack.c.b16 %v3079, %v3075
    %v3296 = vpack.c.b16 %v3080, %v3076
    %v3297 = vpack.c.b16 %v3081, %v3077
    %v3298 = vpack.c.b16 %v3086, %v3082
    %v3299 = vpack.c.b16 %v3087, %v3083
    %v3300 = vpack.c.b16 %v3088, %v3084
    %v3301 = vpack.c.b16 %v3089, %v3085
    %v3302 = vpack.c.b16 %v3094, %v3090
    %v3303 = vpack.c.b16 %v3095, %v3091
    %v3304 = vpack.c.b16 %v3096, %v3092
    %v3305 = vpack.c.b16 %v3097, %v3093
    %v3306 = vpack.c.b16 %v3102, %v3098
    %v3307 = vpack.c.b16 %v3103, %v3099
    %v3308 = vpack.c.b16 %v3104, %v3100
    %v3309 = vpack.c.b16 %v3105, %v3101
    %v3310 = vpack.c.b16 %v3110, %v3106
    %v3311 = vpack.c.b16 %v3111, %v3107
    %v3312 = vpack.c.b16 %v3112, %v3108
    %v3313 = vpack.c.b16 %v3113, %v3109
    %v3314 = vpack.c.b16 %v3118, %v3114
    %v3315 = vpack.c.b16 %v3119, %v3115
    %v3316 = vpack.c.b16 %v3120, %v3116
    %v3317 = vpack.c.b16 %v3121, %v3117
    %v3318 = vpack.c.b16 %v3126, %v3122
    %v3319 = vpack.c.b16 %v3127, %v3123
    %v3320 = vpack.c.b16 %v3128, %v3124
    %v3321 = vpack.c.b16 %v3129, %v3125
    %3514 = vmatprep.subr.bf16.mxu0 %v3159
    %3515 = vmatpush1.bf16.msra.mxu0 %v3158
    %3516 = vmatprep.subr.bf16.mxu0 %v3155
    %3517 = vmatpush1.bf16.msra.mxu0 %v3154
    %3518 = vmatprep.subr.bf16.mxu0 %v3151
    %3519 = vmatpush1.bf16.msra.mxu0 %v3150
    %3520 = vmatprep.subr.bf16.mxu0 %v3147
    %3521 = vmatpush1.bf16.msra.mxu0 %v3146
    %3522 = vmatprep.subr.bf16.mxu0 %v3143
    %3523 = vmatpush1.bf16.msra.mxu0 %v3142
    %3524 = vmatprep.subr.bf16.mxu0 %v3139
    %3525 = vmatpush1.bf16.msra.mxu0 %v3138
    %3526 = vmatprep.subr.bf16.mxu0 %v3135
    %3527 = vmatpush1.bf16.msra.mxu0 %v3134
    %3528 = vmatprep.subr.bf16.mxu0 %v3131
    %3529 = vmatpush1.bf16.msra.mxu0 %v3130
    %3530 = vmatprep.subr.bf16.mxu0 %v3191
    %3531 = vmatpush2.bf16.msra.mxu0 %v3190
    %3532 = vmatprep.subr.bf16.mxu0 %v3187
    %3533 = vmatpush2.bf16.msra.mxu0 %v3186
    %3534 = vmatprep.subr.bf16.mxu0 %v3183
    %3535 = vmatpush2.bf16.msra.mxu0 %v3182
    %3536 = vmatprep.subr.bf16.mxu0 %v3179
    %3537 = vmatpush2.bf16.msra.mxu0 %v3178
    %3538 = vmatprep.subr.bf16.mxu0 %v3175
    %3539 = vmatpush2.bf16.msra.mxu0 %v3174
    %3540 = vmatprep.subr.bf16.mxu0 %v3171
    %3541 = vmatpush2.bf16.msra.mxu0 %v3170
    %3542 = vmatprep.subr.bf16.mxu0 %v3167
    %3543 = vmatpush2.bf16.msra.mxu0 %v3166
    %3544 = vmatprep.subr.bf16.mxu0 %v3163
    %3545 = vmatpush2.bf16.msra.mxu0 %v3162
    %3546 = vmatprep.mubr.bf16.mxu0 %v2335
    %3547 = vmatmul.mubr.bf16.gmra.mxu0 %v2334
    %v3548 = vpop.f32.mrf.mxu0
    %v3549 = vadd.f32 %v2537, %v3548
    %v3550 = vpop.f32.mrf.mxu0
    %v3551 = vadd.f32 %v2541, %v3550
    %v3552 = vpop.f32.mrf.mxu0
    %v3553 = vpop.f32.mrf.mxu0
    %3554 = vdwg.mxu0
    %3555 = vmatprep.subr.bf16.mxu0 %v3223
    %3556 = vmatpush1.bf16.msra.mxu0 %v3222
    %3557 = vmatprep.subr.bf16.mxu0 %v3219
    %3558 = vmatpush1.bf16.msra.mxu0 %v3218
    %3559 = vmatprep.subr.bf16.mxu0 %v3215
    %3560 = vmatpush1.bf16.msra.mxu0 %v3214
    %3561 = vmatprep.subr.bf16.mxu0 %v3211
    %3562 = vmatpush1.bf16.msra.mxu0 %v3210
    %3563 = vmatprep.subr.bf16.mxu0 %v3207
    %3564 = vmatpush1.bf16.msra.mxu0 %v3206
    %3565 = vmatprep.subr.bf16.mxu0 %v3203
    %3566 = vmatpush1.bf16.msra.mxu0 %v3202
    %3567 = vmatprep.subr.bf16.mxu0 %v3199
    %3568 = vmatpush1.bf16.msra.mxu0 %v3198
    %3569 = vmatprep.subr.bf16.mxu0 %v3195
    %3570 = vmatpush1.bf16.msra.mxu0 %v3194
    %3571 = vmatprep.subr.bf16.mxu0 %v3255
    %3572 = vmatpush2.bf16.msra.mxu0 %v3254
    %3573 = vmatprep.subr.bf16.mxu0 %v3251
    %3574 = vmatpush2.bf16.msra.mxu0 %v3250
    %3575 = vmatprep.subr.bf16.mxu0 %v3247
    %3576 = vmatpush2.bf16.msra.mxu0 %v3246
    %3577 = vmatprep.subr.bf16.mxu0 %v3243
    %3578 = vmatpush2.bf16.msra.mxu0 %v3242
    %3579 = vmatprep.subr.bf16.mxu0 %v3239
    %3580 = vmatpush2.bf16.msra.mxu0 %v3238
    %3581 = vmatprep.subr.bf16.mxu0 %v3235
    %3582 = vmatpush2.bf16.msra.mxu0 %v3234
    %3583 = vmatprep.subr.bf16.mxu0 %v3231
    %3584 = vmatpush2.bf16.msra.mxu0 %v3230
    %3585 = vmatprep.subr.bf16.mxu0 %v3227
    %3586 = vmatpush2.bf16.msra.mxu0 %v3226
    %3587 = vmatprep.mubr.bf16.mxu0 %v2337
    %3588 = vmatmul.mubr.bf16.gmra.mxu0 %v2336
    %v3589 = vpop.f32.mrf.mxu0
    %v3590 = vadd.f32 %v3549, %v3589
    %v3591 = vpop.f32.mrf.mxu0
    %v3592 = vadd.f32 %v3551, %v3591
    %v3593 = vpop.f32.mrf.mxu0
    %v3594 = vpop.f32.mrf.mxu0
    %3595 = vdwg.mxu0
    %3596 = vmatprep.subr.bf16.mxu0 %v3287
    %3597 = vmatpush1.bf16.msra.mxu0 %v3286
    %3598 = vmatprep.subr.bf16.mxu0 %v3283
    %3599 = vmatpush1.bf16.msra.mxu0 %v3282
    %3600 = vmatprep.subr.bf16.mxu0 %v3279
    %3601 = vmatpush1.bf16.msra.mxu0 %v3278
    %3602 = vmatprep.subr.bf16.mxu0 %v3275
    %3603 = vmatpush1.bf16.msra.mxu0 %v3274
    %3604 = vmatprep.subr.bf16.mxu0 %v3271
    %3605 = vmatpush1.bf16.msra.mxu0 %v3270
    %3606 = vmatprep.subr.bf16.mxu0 %v3267
    %3607 = vmatpush1.bf16.msra.mxu0 %v3266
    %3608 = vmatprep.subr.bf16.mxu0 %v3263
    %3609 = vmatpush1.bf16.msra.mxu0 %v3262
    %3610 = vmatprep.subr.bf16.mxu0 %v3259
    %3611 = vmatpush1.bf16.msra.mxu0 %v3258
    %3612 = vmatprep.subr.bf16.mxu0 %v3319
    %3613 = vmatpush2.bf16.msra.mxu0 %v3318
    %3614 = vmatprep.subr.bf16.mxu0 %v3315
    %3615 = vmatpush2.bf16.msra.mxu0 %v3314
    %3616 = vmatprep.subr.bf16.mxu0 %v3311
    %3617 = vmatpush2.bf16.msra.mxu0 %v3310
    %3618 = vmatprep.subr.bf16.mxu0 %v3307
    %3619 = vmatpush2.bf16.msra.mxu0 %v3306
    %3620 = vmatprep.subr.bf16.mxu0 %v3303
    %3621 = vmatpush2.bf16.msra.mxu0 %v3302
    %3622 = vmatprep.subr.bf16.mxu0 %v3299
    %3623 = vmatpush2.bf16.msra.mxu0 %v3298
    %3624 = vmatprep.subr.bf16.mxu0 %v3295
    %3625 = vmatpush2.bf16.msra.mxu0 %v3294
    %3626 = vmatprep.subr.bf16.mxu0 %v3291
    %3627 = vmatpush2.bf16.msra.mxu0 %v3290
    %3628 = vmatprep.mubr.bf16.mxu0 %v2339
    %3629 = vmatmul.mubr.bf16.gmra.mxu0 %v2338
    %v3630 = vpop.f32.mrf.mxu0
    %v3631 = vadd.f32 %v3590, %v3630
    %v3632 = vpop.f32.mrf.mxu0
    %v3633 = vadd.f32 %v3592, %v3632
    %v3634 = vpop.f32.mrf.mxu0
    %v3635 = vpop.f32.mrf.mxu0
    %3636 = vdwg.mxu0
    %3637 = vmatprep.subr.bf16.mxu0 %v3161
    %3638 = vmatpush1.bf16.msra.mxu0 %v3160
    %3639 = vmatprep.subr.bf16.mxu0 %v3157
    %3640 = vmatpush1.bf16.msra.mxu0 %v3156
    %3641 = vmatprep.subr.bf16.mxu0 %v3153
    %3642 = vmatpush1.bf16.msra.mxu0 %v3152
    %3643 = vmatprep.subr.bf16.mxu0 %v3149
    %3644 = vmatpush1.bf16.msra.mxu0 %v3148
    %3645 = vmatprep.subr.bf16.mxu0 %v3145
    %3646 = vmatpush1.bf16.msra.mxu0 %v3144
    %3647 = vmatprep.subr.bf16.mxu0 %v3141
    %3648 = vmatpush1.bf16.msra.mxu0 %v3140
    %3649 = vmatprep.subr.bf16.mxu0 %v3137
    %3650 = vmatpush1.bf16.msra.mxu0 %v3136
    %3651 = vmatprep.subr.bf16.mxu0 %v3133
    %3652 = vmatpush1.bf16.msra.mxu0 %v3132
    %3653 = vmatprep.subr.bf16.mxu0 %v3193
    %3654 = vmatpush2.bf16.msra.mxu0 %v3192
    %3655 = vmatprep.subr.bf16.mxu0 %v3189
    %3656 = vmatpush2.bf16.msra.mxu0 %v3188
    %3657 = vmatprep.subr.bf16.mxu0 %v3185
    %3658 = vmatpush2.bf16.msra.mxu0 %v3184
    %3659 = vmatprep.subr.bf16.mxu0 %v3181
    %3660 = vmatpush2.bf16.msra.mxu0 %v3180
    %3661 = vmatprep.subr.bf16.mxu0 %v3177
    %3662 = vmatpush2.bf16.msra.mxu0 %v3176
    %3663 = vmatprep.subr.bf16.mxu0 %v3173
    %3664 = vmatpush2.bf16.msra.mxu0 %v3172
    %3665 = vmatprep.subr.bf16.mxu0 %v3169
    %3666 = vmatpush2.bf16.msra.mxu0 %v3168
    %3667 = vmatprep.subr.bf16.mxu0 %v3165
    %3668 = vmatpush2.bf16.msra.mxu0 %v3164
    %3669 = vmatprep.mubr.bf16.mxu0 %v2335
    %3670 = vmatmul.mubr.bf16.gmra.mxu0 %v2334
    %v3671 = vpop.f32.mrf.mxu0
    %v3672 = vadd.f32 %v2545, %v3671
    %v3673 = vpop.f32.mrf.mxu0
    %v3674 = vadd.f32 %v2549, %v3673
    %v3675 = vpop.f32.mrf.mxu0
    %v3676 = vpop.f32.mrf.mxu0
    %3677 = vdwg.mxu0
    %3678 = vmatprep.subr.bf16.mxu0 %v3225
    %3679 = vmatpush1.bf16.msra.mxu0 %v3224
    %3680 = vmatprep.subr.bf16.mxu0 %v3221
    %3681 = vmatpush1.bf16.msra.mxu0 %v3220
    %3682 = vmatprep.subr.bf16.mxu0 %v3217
    %3683 = vmatpush1.bf16.msra.mxu0 %v3216
    %3684 = vmatprep.subr.bf16.mxu0 %v3213
    %3685 = vmatpush1.bf16.msra.mxu0 %v3212
    %3686 = vmatprep.subr.bf16.mxu0 %v3209
    %3687 = vmatpush1.bf16.msra.mxu0 %v3208
    %3688 = vmatprep.subr.bf16.mxu0 %v3205
    %3689 = vmatpush1.bf16.msra.mxu0 %v3204
    %3690 = vmatprep.subr.bf16.mxu0 %v3201
    %3691 = vmatpush1.bf16.msra.mxu0 %v3200
    %3692 = vmatprep.subr.bf16.mxu0 %v3197
    %3693 = vmatpush1.bf16.msra.mxu0 %v3196
    %3694 = vmatprep.subr.bf16.mxu0 %v3257
    %3695 = vmatpush2.bf16.msra.mxu0 %v3256
    %3696 = vmatprep.subr.bf16.mxu0 %v3253
    %3697 = vmatpush2.bf16.msra.mxu0 %v3252
    %3698 = vmatprep.subr.bf16.mxu0 %v3249
    %3699 = vmatpush2.bf16.msra.mxu0 %v3248
    %3700 = vmatprep.subr.bf16.mxu0 %v3245
    %3701 = vmatpush2.bf16.msra.mxu0 %v3244
    %3702 = vmatprep.subr.bf16.mxu0 %v3241
    %3703 = vmatpush2.bf16.msra.mxu0 %v3240
    %3704 = vmatprep.subr.bf16.mxu0 %v3237
    %3705 = vmatpush2.bf16.msra.mxu0 %v3236
    %3706 = vmatprep.subr.bf16.mxu0 %v3233
    %3707 = vmatpush2.bf16.msra.mxu0 %v3232
    %3708 = vmatprep.subr.bf16.mxu0 %v3229
    %3709 = vmatpush2.bf16.msra.mxu0 %v3228
    %3710 = vmatprep.mubr.bf16.mxu0 %v2337
    %3711 = vmatmul.mubr.bf16.gmra.mxu0 %v2336
    %v3712 = vpop.f32.mrf.mxu0
    %v3713 = vadd.f32 %v3672, %v3712
    %v3714 = vpop.f32.mrf.mxu0
    %v3715 = vadd.f32 %v3674, %v3714
    %v3716 = vpop.f32.mrf.mxu0
    %v3717 = vpop.f32.mrf.mxu0
    %3718 = vdwg.mxu0
    %3719 = vmatprep.subr.bf16.mxu0 %v3289
    %3720 = vmatpush1.bf16.msra.mxu0 %v3288
    %3721 = vmatprep.subr.bf16.mxu0 %v3285
    %3722 = vmatpush1.bf16.msra.mxu0 %v3284
    %3723 = vmatprep.subr.bf16.mxu0 %v3281
    %3724 = vmatpush1.bf16.msra.mxu0 %v3280
    %3725 = vmatprep.subr.bf16.mxu0 %v3277
    %3726 = vmatpush1.bf16.msra.mxu0 %v3276
    %3727 = vmatprep.subr.bf16.mxu0 %v3273
    %3728 = vmatpush1.bf16.msra.mxu0 %v3272
    %3729 = vmatprep.subr.bf16.mxu0 %v3269
    %3730 = vmatpush1.bf16.msra.mxu0 %v3268
    %3731 = vmatprep.subr.bf16.mxu0 %v3265
    %3732 = vmatpush1.bf16.msra.mxu0 %v3264
    %3733 = vmatprep.subr.bf16.mxu0 %v3261
    %3734 = vmatpush1.bf16.msra.mxu0 %v3260
    %3735 = vmatprep.subr.bf16.mxu0 %v3321
    %3736 = vmatpush2.bf16.msra.mxu0 %v3320
    %3737 = vmatprep.subr.bf16.mxu0 %v3317
    %3738 = vmatpush2.bf16.msra.mxu0 %v3316
    %3739 = vmatprep.subr.bf16.mxu0 %v3313
    %3740 = vmatpush2.bf16.msra.mxu0 %v3312
    %3741 = vmatprep.subr.bf16.mxu0 %v3309
    %3742 = vmatpush2.bf16.msra.mxu0 %v3308
    %3743 = vmatprep.subr.bf16.mxu0 %v3305
    %3744 = vmatpush2.bf16.msra.mxu0 %v3304
    %3745 = vmatprep.subr.bf16.mxu0 %v3301
    %3746 = vmatpush2.bf16.msra.mxu0 %v3300
    %3747 = vmatprep.subr.bf16.mxu0 %v3297
    %3748 = vmatpush2.bf16.msra.mxu0 %v3296
    %3749 = vmatprep.subr.bf16.mxu0 %v3293
    %3750 = vmatpush2.bf16.msra.mxu0 %v3292
    %3751 = vmatprep.mubr.bf16.mxu0 %v2339
    %3752 = vmatmul.mubr.bf16.gmra.mxu0 %v2338
    %v3753 = vpop.f32.mrf.mxu0
    %v3754 = vadd.f32 %v3713, %v3753
    %v3755 = vpop.f32.mrf.mxu0
    %v3756 = vadd.f32 %v3715, %v3755
    %v3757 = vpop.f32.mrf.mxu0
    %v3758 = vpop.f32.mrf.mxu0
    %3759 = vdwg.mxu0
    %v3760 = vmax.f32 %v3631, 0.0
    %v3761 = vmax.f32 %v3633, 0.0
    %v3762 = vmax.f32 %v3754, 0.0
    %v3763 = vmax.f32 %v3756, 0.0
    %v3764 = vpack.c.bf16 %v3760, %v3760
    %v3765 = vpack.c.bf16 %v3761, %v3761
    %v3766 = vpack.c.bf16 %v3762, %v3762
    %v3767 = vpack.c.bf16 %v3763, %v3763
    %v3768 = vld [vmem:[#allocation11] sm:$0xf]
    %v3769 = vld [vmem:[#allocation11 + $0x4] sm:$0xf]
    %v3770 = vld [vmem:[#allocation11 + $0x8] sm:$0xf]
    %v3771 = vld [vmem:[#allocation11 + $0xc] sm:$0xf]
    %v3772 = vld [vmem:[#allocation11 + $0x10] sm:$0xf]
    %v3773 = vld [vmem:[#allocation11 + $0x14] sm:$0xf]
    %v3774 = vld [vmem:[#allocation11 + $0x18] sm:$0xf]
    %v3775 = vld [vmem:[#allocation11 + $0x1c] sm:$0xf]
    %v3776 = vld [vmem:[#allocation11 + $0x20] sm:$0xf]
    %v3777 = vld [vmem:[#allocation11 + $0x24] sm:$0xf]
    %v3778 = vld [vmem:[#allocation11 + $0x28] sm:$0xf]
    %v3779 = vld [vmem:[#allocation11 + $0x2c] sm:$0xf]
    %v3780 = vld [vmem:[#allocation11 + $0x30] sm:$0xf]
    %v3781 = vld [vmem:[#allocation11 + $0x34] sm:$0xf]
    %v3782 = vld [vmem:[#allocation11 + $0x38] sm:$0xf]
    %v3783 = vld [vmem:[#allocation11 + $0x3c] sm:$0xf]
    %v3784 = vld [vmem:[#allocation11 + $0x40] sm:$0xf]
    %v3785 = vld [vmem:[#allocation11 + $0x44] sm:$0xf]
    %v3786 = vld [vmem:[#allocation11 + $0x48] sm:$0xf]
    %v3787 = vld [vmem:[#allocation11 + $0x4c] sm:$0xf]
    %v3788 = vld [vmem:[#allocation11 + $0x50] sm:$0xf]
    %v3789 = vld [vmem:[#allocation11 + $0x54] sm:$0xf]
    %v3790 = vld [vmem:[#allocation11 + $0x58] sm:$0xf]
    %v3791 = vld [vmem:[#allocation11 + $0x5c] sm:$0xf]
    %v3792 = vld [vmem:[#allocation11 + $0x60] sm:$0xf]
    %v3793 = vld [vmem:[#allocation11 + $0x64] sm:$0xf]
    %v3794 = vld [vmem:[#allocation11 + $0x68] sm:$0xf]
    %v3795 = vld [vmem:[#allocation11 + $0x6c] sm:$0xf]
    %v3796 = vld [vmem:[#allocation11 + $0x70] sm:$0xf]
    %v3797 = vld [vmem:[#allocation11 + $0x74] sm:$0xf]
    %v3798 = vld [vmem:[#allocation11 + $0x78] sm:$0xf]
    %v3799 = vld [vmem:[#allocation11 + $0x7c] sm:$0xf]
    %v3800 = vld [vmem:[#allocation11 + $0x80] sm:$0xf]
    %v3801 = vld [vmem:[#allocation11 + $0x84] sm:$0xf]
    %v3802 = vld [vmem:[#allocation11 + $0x88] sm:$0xf]
    %v3803 = vld [vmem:[#allocation11 + $0x8c] sm:$0xf]
    %v3804 = vld [vmem:[#allocation11 + $0x90] sm:$0xf]
    %v3805 = vld [vmem:[#allocation11 + $0x94] sm:$0xf]
    %v3806 = vld [vmem:[#allocation11 + $0x98] sm:$0xf]
    %v3807 = vld [vmem:[#allocation11 + $0x9c] sm:$0xf]
    %v3808 = vld [vmem:[#allocation11 + $0xa0] sm:$0xf]
    %v3809 = vld [vmem:[#allocation11 + $0xa4] sm:$0xf]
    %v3810 = vld [vmem:[#allocation11 + $0xa8] sm:$0xf]
    %v3811 = vld [vmem:[#allocation11 + $0xac] sm:$0xf]
    %v3812 = vld [vmem:[#allocation11 + $0xb0] sm:$0xf]
    %v3813 = vld [vmem:[#allocation11 + $0xb4] sm:$0xf]
    %v3814 = vld [vmem:[#allocation11 + $0xb8] sm:$0xf]
    %v3815 = vld [vmem:[#allocation11 + $0xbc] sm:$0xf]
    %v3816 = vld [vmem:[#allocation11 + $0xc0] sm:$0xf]
    %v3817 = vld [vmem:[#allocation11 + $0xc4] sm:$0xf]
    %v3818 = vld [vmem:[#allocation11 + $0xc8] sm:$0xf]
    %v3819 = vld [vmem:[#allocation11 + $0xcc] sm:$0xf]
    %v3820 = vld [vmem:[#allocation11 + $0xd0] sm:$0xf]
    %v3821 = vld [vmem:[#allocation11 + $0xd4] sm:$0xf]
    %v3822 = vld [vmem:[#allocation11 + $0xd8] sm:$0xf]
    %v3823 = vld [vmem:[#allocation11 + $0xdc] sm:$0xf]
    %v3824 = vld [vmem:[#allocation11 + $0xe0] sm:$0xf]
    %v3825 = vld [vmem:[#allocation11 + $0xe4] sm:$0xf]
    %v3826 = vld [vmem:[#allocation11 + $0xe8] sm:$0xf]
    %v3827 = vld [vmem:[#allocation11 + $0xec] sm:$0xf]
    %v3828 = vld [vmem:[#allocation11 + $0xf0] sm:$0xf]
    %v3829 = vld [vmem:[#allocation11 + $0xf4] sm:$0xf]
    %v3830 = vld [vmem:[#allocation11 + $0xf8] sm:$0xf]
    %v3831 = vld [vmem:[#allocation11 + $0xfc] sm:$0xf]
    %v3832 = vld [vmem:[#allocation13] sm:$0x1]
    %v3834 = vlaneseq
    %v3835 = vshrl.u32 %v3834, 7
    %v3836 = vsub.s32 0, %v3835
    %v3837 = vrot.slane %v3832, %v3836
    %v3903 = vunpack.c.l.b16 %v3768
    %v3904 = vunpack.c.l.b16 %v3769
    %v3905 = vunpack.c.l.b16 %v3770
    %v3906 = vunpack.c.l.b16 %v3771
    %v3907 = vunpack.c.l.b16 %v3772
    %v3908 = vunpack.c.l.b16 %v3773
    %v3909 = vunpack.c.l.b16 %v3774
    %v3910 = vunpack.c.l.b16 %v3775
    %v3911 = vunpack.c.l.b16 %v3776
    %v3912 = vunpack.c.l.b16 %v3777
    %v3913 = vunpack.c.l.b16 %v3778
    %v3914 = vunpack.c.l.b16 %v3779
    %v3915 = vunpack.c.l.b16 %v3780
    %v3916 = vunpack.c.l.b16 %v3781
    %v3917 = vunpack.c.l.b16 %v3782
    %v3918 = vunpack.c.l.b16 %v3783
    %v3919 = vunpack.c.l.b16 %v3784
    %v3920 = vunpack.c.l.b16 %v3785
    %v3921 = vunpack.c.l.b16 %v3786
    %v3922 = vunpack.c.l.b16 %v3787
    %v3923 = vunpack.c.l.b16 %v3788
    %v3924 = vunpack.c.l.b16 %v3789
    %v3925 = vunpack.c.l.b16 %v3790
    %v3926 = vunpack.c.l.b16 %v3791
    %v3927 = vunpack.c.l.b16 %v3792
    %v3928 = vunpack.c.l.b16 %v3793
    %v3929 = vunpack.c.l.b16 %v3794
    %v3930 = vunpack.c.l.b16 %v3795
    %v3931 = vunpack.c.l.b16 %v3796
    %v3932 = vunpack.c.l.b16 %v3797
    %v3933 = vunpack.c.l.b16 %v3798
    %v3934 = vunpack.c.l.b16 %v3799
    %v3935 = vunpack.c.l.b16 %v3800
    %v3936 = vunpack.c.l.b16 %v3801
    %v3937 = vunpack.c.l.b16 %v3802
    %v3938 = vunpack.c.l.b16 %v3803
    %v3939 = vunpack.c.l.b16 %v3804
    %v3940 = vunpack.c.l.b16 %v3805
    %v3941 = vunpack.c.l.b16 %v3806
    %v3942 = vunpack.c.l.b16 %v3807
    %v3943 = vunpack.c.l.b16 %v3808
    %v3944 = vunpack.c.l.b16 %v3809
    %v3945 = vunpack.c.l.b16 %v3810
    %v3946 = vunpack.c.l.b16 %v3811
    %v3947 = vunpack.c.l.b16 %v3812
    %v3948 = vunpack.c.l.b16 %v3813
    %v3949 = vunpack.c.l.b16 %v3814
    %v3950 = vunpack.c.l.b16 %v3815
    %v3951 = vunpack.c.l.b16 %v3816
    %v3952 = vunpack.c.l.b16 %v3817
    %v3953 = vunpack.c.l.b16 %v3818
    %v3954 = vunpack.c.l.b16 %v3819
    %v3955 = vunpack.c.l.b16 %v3820
    %v3956 = vunpack.c.l.b16 %v3821
    %v3957 = vunpack.c.l.b16 %v3822
    %v3958 = vunpack.c.l.b16 %v3823
    %v3959 = vunpack.c.l.b16 %v3824
    %v3960 = vunpack.c.l.b16 %v3825
    %v3961 = vunpack.c.l.b16 %v3826
    %v3962 = vunpack.c.l.b16 %v3827
    %v3963 = vunpack.c.l.b16 %v3828
    %v3964 = vunpack.c.l.b16 %v3829
    %v3965 = vunpack.c.l.b16 %v3830
    %v3966 = vunpack.c.l.b16 %v3831
    %v3967 = vpack.c.b16 %v3904, %v3903
    %v3968 = vpack.c.b16 %v3906, %v3905
    %v3969 = vpack.c.b16 %v3908, %v3907
    %v3970 = vpack.c.b16 %v3910, %v3909
    %v3971 = vpack.c.b16 %v3912, %v3911
    %v3972 = vpack.c.b16 %v3914, %v3913
    %v3973 = vpack.c.b16 %v3916, %v3915
    %v3974 = vpack.c.b16 %v3918, %v3917
    %v3975 = vpack.c.b16 %v3920, %v3919
    %v3976 = vpack.c.b16 %v3922, %v3921
    %v3977 = vpack.c.b16 %v3924, %v3923
    %v3978 = vpack.c.b16 %v3926, %v3925
    %v3979 = vpack.c.b16 %v3928, %v3927
    %v3980 = vpack.c.b16 %v3930, %v3929
    %v3981 = vpack.c.b16 %v3932, %v3931
    %v3982 = vpack.c.b16 %v3934, %v3933
    %v3983 = vpack.c.b16 %v3936, %v3935
    %v3984 = vpack.c.b16 %v3938, %v3937
    %v3985 = vpack.c.b16 %v3940, %v3939
    %v3986 = vpack.c.b16 %v3942, %v3941
    %v3987 = vpack.c.b16 %v3944, %v3943
    %v3988 = vpack.c.b16 %v3946, %v3945
    %v3989 = vpack.c.b16 %v3948, %v3947
    %v3990 = vpack.c.b16 %v3950, %v3949
    %v3991 = vpack.c.b16 %v3952, %v3951
    %v3992 = vpack.c.b16 %v3954, %v3953
    %v3993 = vpack.c.b16 %v3956, %v3955
    %v3994 = vpack.c.b16 %v3958, %v3957
    %v3995 = vpack.c.b16 %v3960, %v3959
    %v3996 = vpack.c.b16 %v3962, %v3961
    %v3997 = vpack.c.b16 %v3964, %v3963
    %v3998 = vpack.c.b16 %v3966, %v3965
    %4031 = vmatprep.subr.bf16.mxu0 0
    %4032 = vmatpush1.bf16.msra.mxu0 %v3974
    %4033 = vmatprep.subr.bf16.mxu0 0
    %4034 = vmatpush1.bf16.msra.mxu0 %v3973
    %4035 = vmatprep.subr.bf16.mxu0 0
    %4036 = vmatpush1.bf16.msra.mxu0 %v3972
    %4037 = vmatprep.subr.bf16.mxu0 0
    %4038 = vmatpush1.bf16.msra.mxu0 %v3971
    %4039 = vmatprep.subr.bf16.mxu0 0
    %4040 = vmatpush1.bf16.msra.mxu0 %v3970
    %4041 = vmatprep.subr.bf16.mxu0 0
    %4042 = vmatpush1.bf16.msra.mxu0 %v3969
    %4043 = vmatprep.subr.bf16.mxu0 0
    %4044 = vmatpush1.bf16.msra.mxu0 %v3968
    %4045 = vmatprep.subr.bf16.mxu0 0
    %4046 = vmatpush1.bf16.msra.mxu0 %v3967
    %4047 = vmatprep.subr.bf16.mxu0 0
    %4048 = vmatpush2.bf16.msra.mxu0 %v3982
    %4049 = vmatprep.subr.bf16.mxu0 0
    %4050 = vmatpush2.bf16.msra.mxu0 %v3981
    %4051 = vmatprep.subr.bf16.mxu0 0
    %4052 = vmatpush2.bf16.msra.mxu0 %v3980
    %4053 = vmatprep.subr.bf16.mxu0 0
    %4054 = vmatpush2.bf16.msra.mxu0 %v3979
    %4055 = vmatprep.subr.bf16.mxu0 0
    %4056 = vmatpush2.bf16.msra.mxu0 %v3978
    %4057 = vmatprep.subr.bf16.mxu0 0
    %4058 = vmatpush2.bf16.msra.mxu0 %v3977
    %4059 = vmatprep.subr.bf16.mxu0 0
    %4060 = vmatpush2.bf16.msra.mxu0 %v3976
    %4061 = vmatprep.subr.bf16.mxu0 0
    %4062 = vmatpush2.bf16.msra.mxu0 %v3975
    %4063 = vmatprep.mubr.bf16.mxu0 %v3765
    %4064 = vmatmul.mubr.bf16.gmra.mxu0 %v3764
    %v4065 = vpop.f32.mrf.mxu0
    %v4066 = vadd.f32 %v3837, %v4065
    %v4067 = vpop.f32.mrf.mxu0
    %v4068 = vpop.f32.mrf.mxu0
    %v4069 = vpop.f32.mrf.mxu0
    %4070 = vdwg.mxu0
    %4071 = vmatprep.subr.bf16.mxu0 0
    %4072 = vmatpush1.bf16.msra.mxu0 %v3990
    %4073 = vmatprep.subr.bf16.mxu0 0
    %4074 = vmatpush1.bf16.msra.mxu0 %v3989
    %4075 = vmatprep.subr.bf16.mxu0 0
    %4076 = vmatpush1.bf16.msra.mxu0 %v3988
    %4077 = vmatprep.subr.bf16.mxu0 0
    %4078 = vmatpush1.bf16.msra.mxu0 %v3987
    %4079 = vmatprep.subr.bf16.mxu0 0
    %4080 = vmatpush1.bf16.msra.mxu0 %v3986
    %4081 = vmatprep.subr.bf16.mxu0 0
    %4082 = vmatpush1.bf16.msra.mxu0 %v3985
    %4083 = vmatprep.subr.bf16.mxu0 0
    %4084 = vmatpush1.bf16.msra.mxu0 %v3984
    %4085 = vmatprep.subr.bf16.mxu0 0
    %4086 = vmatpush1.bf16.msra.mxu0 %v3983
    %4087 = vmatprep.subr.bf16.mxu0 0
    %4088 = vmatpush2.bf16.msra.mxu0 %v3998
    %4089 = vmatprep.subr.bf16.mxu0 0
    %4090 = vmatpush2.bf16.msra.mxu0 %v3997
    %4091 = vmatprep.subr.bf16.mxu0 0
    %4092 = vmatpush2.bf16.msra.mxu0 %v3996
    %4093 = vmatprep.subr.bf16.mxu0 0
    %4094 = vmatpush2.bf16.msra.mxu0 %v3995
    %4095 = vmatprep.subr.bf16.mxu0 0
    %4096 = vmatpush2.bf16.msra.mxu0 %v3994
    %4097 = vmatprep.subr.bf16.mxu0 0
    %4098 = vmatpush2.bf16.msra.mxu0 %v3993
    %4099 = vmatprep.subr.bf16.mxu0 0
    %4100 = vmatpush2.bf16.msra.mxu0 %v3992
    %4101 = vmatprep.subr.bf16.mxu0 0
    %4102 = vmatpush2.bf16.msra.mxu0 %v3991
    %4103 = vmatprep.mubr.bf16.mxu0 %v3767
    %4104 = vmatmul.mubr.bf16.gmra.mxu0 %v3766
    %v4105 = vpop.f32.mrf.mxu0
    %v4106 = vadd.f32 %v4066, %v4105
    %v4107 = vpop.f32.mrf.mxu0
    %v4108 = vpop.f32.mrf.mxu0
    %v4109 = vpop.f32.mrf.mxu0
    %4110 = vdwg.mxu0
    %4111 = vmax.xlane.f32.xlu0 %v4106
    %v4112 = vpop.xlane.xlu0 %4111
    %v4113 = vsub.f32 %v4106, %v4112
    %v4114 = vmul.f32 %v4113, 1.442695
    %v4115 = vpow.pop %v4114
    %4116 = vadd.xlane.f32.xlu0 %v4115
    %v4117 = vpop.xlane.xlu0 %4116
    %v4118 = vlog2.pop %v4117
    %v4119 = vmul.f32 %v4118, 0.6931472
    %v4120 = vsub.f32 %v4113, %v4119
    %4121 = vst [vmem:[#allocation14] sm:$0xff] %v4120
    // Predicated region
    $region58: #{tpu_custom_call.1} parent=1 // pred_check
      _
    $region59: #{tpu_custom_call.1} parent=1 // pred_check_branch
      %4123 = sbr.rel (0) target = $region61
    $region60: #{tpu_custom_call.1} parent=1 // pred_region
      %s4125 = ssub.s32 128, 32
      %4126 = vsyncadd [#allocation4], %s4125
      %s4127 = sshll.u32 [#allocation14], 4
      %s4128 = int_to_ptr.vmem [resolvable:$true] %s4127
      %4133 = dma.vmem_to_hbm [thread:$0]  %s4128, 32, %s7, [#allocation4], 32, 32, 2
    $region61: #{tpu_custom_call.1} parent=1 // pred_fallthru
      _
    // Predicated region
    $region62: #{tpu_custom_call.1} parent=1 // pred_check
      _
    $region63: #{tpu_custom_call.1} parent=1 // pred_check_branch
      %4135 = sbr.rel (0) target = $region65
    $region64: #{tpu_custom_call.1} parent=1 // pred_region
      %4136 = dma.done [#allocation4], 128
    $region65: #{tpu_custom_call.1} parent=1 // pred_fallthru
      _
    %4137 = vsyncpa [#allocation3], 1
    %4138 = vsyncpa [#allocation6], 1
    %4139 = vsyncpa [#allocation9], 1
    %4140 = vsyncpa [#allocation12], 1
    %4141 = vsyncpa [#allocation4], 1

</llo_original>
